<compile_context>
chip_gen: v6e
topology: v6e:2x2x1
jax: 0.10.0
libtpu: 0.0.40
codegen_flags: <defaults>
</compile_context>

<pallas_src>
import jax
import jax.numpy as jnp
from jax import lax
from jax.experimental import pallas as pl
from jax.experimental.pallas import tpu as pltpu


def _make_fused_kernel(KH1, KW1, KH2, KW2):
    """Build the fused (conv+ReLU) x2 kernel for static kernel sizes."""

    def _conv_relu(x, w_flat, b, KH, KW, Ho, Wo):
        # im2col: one (Ho, Wo, KH*KW*C) slab, one MXU contraction.
        patches = jnp.concatenate(
            [x[kh:kh + Ho, kw:kw + Wo, :]
             for kh in range(KH) for kw in range(KW)],
            axis=-1)
        acc = lax.dot_general(
            patches, w_flat,
            dimension_numbers=(((2,), (0,)), ((), ())),
            preferred_element_type=jnp.float32)
        return jnp.maximum(acc + b[None, None, :], 0.0)

    def kernel(x_ref, w1_ref, b1_ref, w2_ref, b2_ref, o_ref):
        # x_ref : (B, H,  W,  Cin )   VMEM
        # w1_ref: (KH1*KW1*Cin , Cmid)   w2_ref: (KH2*KW2*Cmid, Cout)
        # b1_ref: (1, Cmid)              b2_ref: (1, Cout)
        # o_ref : (B, Ho2, Wo2, Cout)
        B, Ho2, Wo2, _ = o_ref.shape
        _, H, W, _ = x_ref.shape
        Ho1, Wo1 = H - KH1 + 1, W - KW1 + 1

        w1 = w1_ref[...]
        w2 = w2_ref[...]
        b1 = b1_ref[0]
        b2 = b2_ref[0]

        for bi in range(B):  # B is a small static per-step batch block
            h = _conv_relu(x_ref[bi], w1, b1, KH1, KW1, Ho1, Wo1)
            y = _conv_relu(h, w2, b2, KH2, KW2, Ho2, Wo2)
            o_ref[bi] = y.astype(o_ref.dtype)

    return kernel


def fused_double_conv_relu_nhwc(x_nhwc, w1, b1, w2, b2, *, batch_block=1):
    """ReLU(conv2(ReLU(conv1(x)))) for NHWC input, both convs VALID padding.

    w1: (KH1, KW1, Cin,  Cmid)   b1: (Cmid,)
    w2: (KH2, KW2, Cmid, Cout)   b2: (Cout,)
    batch_block: images per grid step. 1 -> v7x's two TCs each take an image;
                 N -> single grid step for single-TC v5e/v6e.
    """
    N, H, W, Cin = x_nhwc.shape
    KH1, KW1, Cin_w, Cmid = w1.shape
    KH2, KW2, Cmid_w, Cout = w2.shape
    assert Cin_w == Cin and Cmid_w == Cmid
    Ho1, Wo1 = H - KH1 + 1, W - KW1 + 1
    Ho2, Wo2 = Ho1 - KH2 + 1, Wo1 - KW2 + 1
    assert Ho2 > 0 and Wo2 > 0
    assert N % batch_block == 0

    # Pre-flatten weights to (KH*KW*Cin, Cout); row order (kh, kw, ci) matches
    # the concatenation order inside the kernel.
    w1f = w1.reshape(KH1 * KW1 * Cin, Cmid)
    w2f = w2.reshape(KH2 * KW2 * Cmid, Cout)
    b1r = b1.reshape(1, Cmid)
    b2r = b2.reshape(1, Cout)

    kernel = _make_fused_kernel(KH1, KW1, KH2, KW2)

    return pl.pallas_call(
        kernel,
        out_shape=jax.ShapeDtypeStruct((N, Ho2, Wo2, Cout), x_nhwc.dtype),
        grid=(N // batch_block,),
        in_specs=[
            pl.BlockSpec((batch_block, H, W, Cin), lambda n: (n, 0, 0, 0)),
            # Constant-index blocks: stay resident in VMEM across grid steps.
            pl.BlockSpec((KH1 * KW1 * Cin, Cmid), lambda n: (0, 0)),
            pl.BlockSpec((1, Cmid), lambda n: (0, 0)),
            pl.BlockSpec((KH2 * KW2 * Cmid, Cout), lambda n: (0, 0)),
            pl.BlockSpec((1, Cout), lambda n: (0, 0)),
        ],
        out_specs=pl.BlockSpec((batch_block, Ho2, Wo2, Cout),
                               lambda n: (n, 0, 0, 0)),
        compiler_params=pltpu.CompilerParams(
            dimension_semantics=("parallel",)),
    )(x_nhwc, w1f, b1r, w2f, b2r)


@jax.jit
def _final_convolve_forward(x_nchw, w1, b1, w2, b2):
    # One transpose in / out at the module boundary only (PyTorch is NCHW);
    # everything in between is a single fused NHWC Pallas kernel.
    x = jnp.transpose(x_nchw, (0, 2, 3, 1))
    y = fused_double_conv_relu_nhwc(x, w1, b1, w2, b2)
    out = jnp.transpose(y, (0, 3, 1, 2))
    # TODO(synk): getFrequencyOfDeadNeurons is not defined in the provided
    # source; implemented as the fraction of ReLU-dead conv2 activations
    # (pre-ReLU <= 0  <=>  post-ReLU == 0), which needs no extra kernel output.
    freq = jnp.mean((y == 0.0).astype(jnp.float32))
    return out, freq


class FinalConvolvePallas:
    """JAX/Pallas port of the PyTorch `FinalConvolve` module (NCHW I/O)."""

    def __init__(self, in_channels, out_channels, kernel_size, string="final",
                 show=False, key=jax.random.PRNGKey(0)):
        self.string = string
        self.show = show
        self.freq_of_dead_neurons = None
        k1, k2, k3, k4 = jax.random.split(key, 4)

        # PyTorch Conv2d default init: U(-1/sqrt(fan_in), +1/sqrt(fan_in)).
        def init_conv(kw_key, kb_key, cin, cout, ks):
            fan_in = cin * ks * ks
            bound = 1.0 / (fan_in ** 0.5)
            w = jax.random.uniform(kw_key, (ks, ks, cin, cout),
                                   jnp.float32, -bound, bound)   # HWIO
            b = jax.random.uniform(kb_key, (cout,), jnp.float32, -bound, bound)
            return w, b

        self.w1, self.b1 = init_conv(k1, k2, in_channels, out_channels,
                                     kernel_size)
        self.w2, self.b2 = init_conv(k3, k4, out_channels, out_channels,
                                     kernel_size)

    def __call__(self, x_nchw):
        out, freq = _final_convolve_forward(x_nchw, self.w1, self.b1,
                                            self.w2, self.b2)
        self.freq_of_dead_neurons = freq
        return out


def _reference(x_nchw, w1, b1, w2, b2):
    """Pure-JAX reference (lax.conv) for correctness checking."""
    def conv(x, w, bb):
        y = lax.conv_general_dilated(
            x, w, window_strides=(1, 1), padding="VALID",
            dimension_numbers=("NCHW", "HWIO", "NCHW"))
        return jnp.maximum(y + bb[None, :, None, None], 0.0)
    return conv(conv(x_nchw, w1, b1), w2, b2)


if __name__ == "__main__":
    key = jax.random.PRNGKey(0)
    kx, kp = jax.random.split(key)

    # Small shapes consistent with the module: batch=2, Cin=4, Cout=8, 16x16, k=3.
    N, Cin, H, W = 2, 4, 16, 16
    Cout, K = 8, 3

    x = jax.random.normal(kx, (N, Cin, H, W), jnp.float32)

    mod = FinalConvolvePallas(Cin, Cout, K, string="final", key=kp)
    out = jax.block_until_ready(mod(x))

    # Each valid conv shrinks spatial by (K-1).
    assert out.shape == (N, Cout, H - 2 * (K - 1), W - 2 * (K - 1)), out.shape

    ref = _reference(x, mod.w1, mod.b1, mod.w2, mod.b2)
    assert jnp.allclose(out, ref, atol=1e-4, rtol=1e-4), \
        float(jnp.max(jnp.abs(out - ref)))

    freq = float(mod.freq_of_dead_neurons)
    assert 0.0 <= freq <= 1.0, freq

    print("KERNEL_OK")
</pallas_src>

<mosaic_0001>
module attributes {stable_mosaic.version = 11 : i64} {
  func.func @kernel(%arg0: i32, %arg1: memref<1x16x16x4xf32, #tpu.memory_space<vmem>>, %arg2: memref<36x8xf32, #tpu.memory_space<vmem>>, %arg3: memref<1x8xf32, #tpu.memory_space<vmem>>, %arg4: memref<72x8xf32, #tpu.memory_space<vmem>>, %arg5: memref<1x8xf32, #tpu.memory_space<vmem>>, %arg6: memref<1x12x12x8xf32, #tpu.memory_space<vmem>>) attributes {dimension_semantics = [#tpu.dimension_semantics<parallel>], iteration_bounds = array<i64: 2>, scalar_prefetch = 0 : i64, scratch_operands = 0 : i64, tpu.core_type = #tpu.core_type<tc>, window_params = [{transform_indices = @transform_0, window_bounds = array<i64: 1, 16, 16, 4>}, {pipeline_mode = #tpu.pipeline_mode<synchronous>, transform_indices = @transform_1, window_bounds = array<i64: 36, 8>}, {pipeline_mode = #tpu.pipeline_mode<synchronous>, transform_indices = @transform_2, window_bounds = array<i64: 1, 8>}, {pipeline_mode = #tpu.pipeline_mode<synchronous>, transform_indices = @transform_3, window_bounds = array<i64: 72, 8>}, {pipeline_mode = #tpu.pipeline_mode<synchronous>, transform_indices = @transform_4, window_bounds = array<i64: 1, 8>}, {transform_indices = @transform_5, window_bounds = array<i64: 1, 12, 12, 8>}]} {
    %c0 = arith.constant 0 : index
    %c0_0 = arith.constant 0 : index
    %0 = vector.load %arg2[%c0, %c0_0] : memref<36x8xf32, #tpu.memory_space<vmem>>, vector<36x8xf32>
    %c0_1 = arith.constant 0 : index
    %c0_2 = arith.constant 0 : index
    %1 = vector.load %arg4[%c0_1, %c0_2] : memref<72x8xf32, #tpu.memory_space<vmem>>, vector<72x8xf32>
    %c0_3 = arith.constant 0 : index
    %c0_4 = arith.constant 0 : index
    %2 = vector.load %arg3[%c0_3, %c0_4] : memref<1x8xf32, #tpu.memory_space<vmem>>, vector<1x8xf32>
    %3 = vector.shape_cast %2 : vector<1x8xf32> to vector<8xf32>
    %c0_5 = arith.constant 0 : index
    %c0_6 = arith.constant 0 : index
    %4 = vector.load %arg5[%c0_5, %c0_6] : memref<1x8xf32, #tpu.memory_space<vmem>>, vector<1x8xf32>
    %5 = vector.shape_cast %4 : vector<1x8xf32> to vector<8xf32>
    %c0_7 = arith.constant 0 : index
    %c0_8 = arith.constant 0 : index
    %c0_9 = arith.constant 0 : index
    %c0_10 = arith.constant 0 : index
    %6 = vector.load %arg1[%c0_7, %c0_8, %c0_9, %c0_10] : memref<1x16x16x4xf32, #tpu.memory_space<vmem>>, vector<1x16x16x4xf32>
    %7 = vector.shape_cast %6 : vector<1x16x16x4xf32> to vector<16x16x4xf32>
    %8 = vector.extract_strided_slice %7 {offsets = [0, 0, 0], sizes = [14, 14, 4], strides = [1, 1, 1]} : vector<16x16x4xf32> to vector<14x14x4xf32>
    %9 = vector.extract_strided_slice %7 {offsets = [0, 1, 0], sizes = [14, 14, 4], strides = [1, 1, 1]} : vector<16x16x4xf32> to vector<14x14x4xf32>
    %10 = vector.extract_strided_slice %7 {offsets = [0, 2, 0], sizes = [14, 14, 4], strides = [1, 1, 1]} : vector<16x16x4xf32> to vector<14x14x4xf32>
    %11 = vector.extract_strided_slice %7 {offsets = [1, 0, 0], sizes = [14, 14, 4], strides = [1, 1, 1]} : vector<16x16x4xf32> to vector<14x14x4xf32>
    %12 = vector.extract_strided_slice %7 {offsets = [1, 1, 0], sizes = [14, 14, 4], strides = [1, 1, 1]} : vector<16x16x4xf32> to vector<14x14x4xf32>
    %13 = vector.extract_strided_slice %7 {offsets = [1, 2, 0], sizes = [14, 14, 4], strides = [1, 1, 1]} : vector<16x16x4xf32> to vector<14x14x4xf32>
    %14 = vector.extract_strided_slice %7 {offsets = [2, 0, 0], sizes = [14, 14, 4], strides = [1, 1, 1]} : vector<16x16x4xf32> to vector<14x14x4xf32>
    %15 = vector.extract_strided_slice %7 {offsets = [2, 1, 0], sizes = [14, 14, 4], strides = [1, 1, 1]} : vector<16x16x4xf32> to vector<14x14x4xf32>
    %16 = vector.extract_strided_slice %7 {offsets = [2, 2, 0], sizes = [14, 14, 4], strides = [1, 1, 1]} : vector<16x16x4xf32> to vector<14x14x4xf32>
    %17 = tpu.concatenate %8, %9, %10, %11, %12, %13, %14, %15, %16 in 2 : vector<14x14x4xf32>, vector<14x14x4xf32>, vector<14x14x4xf32>, vector<14x14x4xf32>, vector<14x14x4xf32>, vector<14x14x4xf32>, vector<14x14x4xf32>, vector<14x14x4xf32>, vector<14x14x4xf32> -> vector<14x14x36xf32>
    %cst = arith.constant dense<0.000000e+00> : vector<14x14x8xf32>
    %18 = tpu.matmul %17, %0, %cst {dimension_numbers = #tpu.dot_dimension_numbers<[2], [0], [0, 1], [1], [0, 0, 0, 1, 1, 1], [], []>} : vector<14x14x36xf32>, vector<36x8xf32>, vector<14x14x8xf32> -> vector<14x14x8xf32>
    %19 = vector.shape_cast %3 : vector<8xf32> to vector<1x1x8xf32>
    %20 = vector.broadcast %19 : vector<1x1x8xf32> to vector<14x14x8xf32>
    %21 = arith.addf %18, %20 : vector<14x14x8xf32>
    %cst_11 = arith.constant 0.000000e+00 : f32
    %22 = vector.broadcast %cst_11 : f32 to vector<14x14x8xf32>
    %23 = arith.maximumf %21, %22 : vector<14x14x8xf32>
    %24 = vector.extract_strided_slice %23 {offsets = [0, 0, 0], sizes = [12, 12, 8], strides = [1, 1, 1]} : vector<14x14x8xf32> to vector<12x12x8xf32>
    %25 = vector.extract_strided_slice %23 {offsets = [0, 1, 0], sizes = [12, 12, 8], strides = [1, 1, 1]} : vector<14x14x8xf32> to vector<12x12x8xf32>
    %26 = vector.extract_strided_slice %23 {offsets = [0, 2, 0], sizes = [12, 12, 8], strides = [1, 1, 1]} : vector<14x14x8xf32> to vector<12x12x8xf32>
    %27 = vector.extract_strided_slice %23 {offsets = [1, 0, 0], sizes = [12, 12, 8], strides = [1, 1, 1]} : vector<14x14x8xf32> to vector<12x12x8xf32>
    %28 = vector.extract_strided_slice %23 {offsets = [1, 1, 0], sizes = [12, 12, 8], strides = [1, 1, 1]} : vector<14x14x8xf32> to vector<12x12x8xf32>
    %29 = vector.extract_strided_slice %23 {offsets = [1, 2, 0], sizes = [12, 12, 8], strides = [1, 1, 1]} : vector<14x14x8xf32> to vector<12x12x8xf32>
    %30 = vector.extract_strided_slice %23 {offsets = [2, 0, 0], sizes = [12, 12, 8], strides = [1, 1, 1]} : vector<14x14x8xf32> to vector<12x12x8xf32>
    %31 = vector.extract_strided_slice %23 {offsets = [2, 1, 0], sizes = [12, 12, 8], strides = [1, 1, 1]} : vector<14x14x8xf32> to vector<12x12x8xf32>
    %32 = vector.extract_strided_slice %23 {offsets = [2, 2, 0], sizes = [12, 12, 8], strides = [1, 1, 1]} : vector<14x14x8xf32> to vector<12x12x8xf32>
    %33 = tpu.concatenate %24, %25, %26, %27, %28, %29, %30, %31, %32 in 2 : vector<12x12x8xf32>, vector<12x12x8xf32>, vector<12x12x8xf32>, vector<12x12x8xf32>, vector<12x12x8xf32>, vector<12x12x8xf32>, vector<12x12x8xf32>, vector<12x12x8xf32>, vector<12x12x8xf32> -> vector<12x12x72xf32>
    %cst_12 = arith.constant dense<0.000000e+00> : vector<12x12x8xf32>
    %34 = tpu.matmul %33, %1, %cst_12 {dimension_numbers = #tpu.dot_dimension_numbers<[2], [0], [0, 1], [1], [0, 0, 0, 1, 1, 1], [], []>} : vector<12x12x72xf32>, vector<72x8xf32>, vector<12x12x8xf32> -> vector<12x12x8xf32>
    %35 = vector.shape_cast %5 : vector<8xf32> to vector<1x1x8xf32>
    %36 = vector.broadcast %35 : vector<1x1x8xf32> to vector<12x12x8xf32>
    %37 = arith.addf %34, %36 : vector<12x12x8xf32>
    %cst_13 = arith.constant 0.000000e+00 : f32
    %38 = vector.broadcast %cst_13 : f32 to vector<12x12x8xf32>
    %39 = arith.maximumf %37, %38 : vector<12x12x8xf32>
    %c0_14 = arith.constant 0 : index
    %c0_15 = arith.constant 0 : index
    %c0_16 = arith.constant 0 : index
    %c0_17 = arith.constant 0 : index
    %40 = vector.load %arg6[%c0_14, %c0_15, %c0_16, %c0_17] : memref<1x12x12x8xf32, #tpu.memory_space<vmem>>, vector<1x12x12x8xf32>
    %41 = vector.shape_cast %40 : vector<1x12x12x8xf32> to vector<12x12x8xf32>
    %42 = vector.shape_cast %39 : vector<12x12x8xf32> to vector<1x12x12x8xf32>
    tpu.vector_store %arg6[%c0_14, %c0_15, %c0_16, %c0_17], %42 {strides = array<i32>} : memref<1x12x12x8xf32, #tpu.memory_space<vmem>>, vector<1x12x12x8xf32>,
    return
  }
  func.func @transform_0(%arg0: i32) -> (i32, i32, i32, i32) {
    %c0_i32 = arith.constant 0 : i32
    %c0_i32_0 = arith.constant 0 : i32
    %c0_i32_1 = arith.constant 0 : i32
    %c0_i32_2 = arith.constant 0 : i32
    return %arg0, %c0_i32, %c0_i32_0, %c0_i32_1 : i32, i32, i32, i32
  }
  func.func @transform_1(%arg0: i32) -> (i32, i32) {
    %c0_i32 = arith.constant 0 : i32
    %c0_i32_0 = arith.constant 0 : i32
    %c0_i32_1 = arith.constant 0 : i32
    return %c0_i32, %c0_i32_0 : i32, i32
  }
  func.func @transform_2(%arg0: i32) -> (i32, i32) {
    %c0_i32 = arith.constant 0 : i32
    %c0_i32_0 = arith.constant 0 : i32
    %c0_i32_1 = arith.constant 0 : i32
    return %c0_i32, %c0_i32_0 : i32, i32
  }
  func.func @transform_3(%arg0: i32) -> (i32, i32) {
    %c0_i32 = arith.constant 0 : i32
    %c0_i32_0 = arith.constant 0 : i32
    %c0_i32_1 = arith.constant 0 : i32
    return %c0_i32, %c0_i32_0 : i32, i32
  }
  func.func @transform_4(%arg0: i32) -> (i32, i32) {
    %c0_i32 = arith.constant 0 : i32
    %c0_i32_0 = arith.constant 0 : i32
    %c0_i32_1 = arith.constant 0 : i32
    return %c0_i32, %c0_i32_0 : i32, i32
  }
  func.func @transform_5(%arg0: i32) -> (i32, i32, i32, i32) {
    %c0_i32 = arith.constant 0 : i32
    %c0_i32_0 = arith.constant 0 : i32
    %c0_i32_1 = arith.constant 0 : i32
    %c0_i32_2 = arith.constant 0 : i32
    return %arg0, %c0_i32, %c0_i32_0, %c0_i32_1 : i32, i32, i32, i32
  }
}

</mosaic_0001>

<llo_original>
// kernel: _final_convolve_forward.1
$region0: #{_final_convolve_forward.1}
  #allocation0 [shape = 'u32[]', space=smem, size = 0x4, offset = 0x4, fixed_abs, tag = 'smem constant byte address 0x4 - core index']
  #allocation1 [shape = 'u32[144,128]{1,0:T(1,128)}', space=vmem, size = 0x12000, scoped, tag = 'internal scratch']
  %s0 = inlined_call_operand.vmem [shape: f32[2,16,16,4], index: 0, kind: input, shape index: {}]
  %s1 = inlined_call_operand.vmem [shape: f32[36,8], index: 1, kind: input, shape index: {}]
  %s2 = inlined_call_operand.vmem [shape: f32[1,8], index: 2, kind: input, shape index: {}]
  %s3 = inlined_call_operand.vmem [shape: f32[72,8], index: 3, kind: input, shape index: {}]
  %s4 = inlined_call_operand.vmem [shape: f32[1,8], index: 4, kind: input, shape index: {}]
  %s5 = inlined_call_operand.vmem [shape: f32[2,12,12,8], index: 5, kind: output, shape index: {}]
  %s6 = sld [smem:[#allocation0]]
  $region53: #{_final_convolve_forward.1} parent=0
    _
  %s8 = ssub.s32 1, %s6
  %s9 = scalar_select 0, %s8, %s6
  loop: start=0, step=1, limit=4
  $region2: #{_final_convolve_forward.1} parent=0 // loop_pre_header
    _
  $region3: #{_final_convolve_forward.1} parent=0 // loop_header
    %s11 = sphi 0, %s15
    %p12 = scmp.ge.s32.totalorder %s11, 4
    %s21 = sphi 0, %s23
    %s24 = sphi 0, %s21
    %s25 = sphi 0, %s24
    %s41 = sphi 0, %s25
    %s45 = sphi 0, %s45
    %s47 = sphi 0, %s45
    %s48 = sphi 0, %s47
    %s62 = sphi 0, %s48
    %s66 = sphi 0, %s66
    %s68 = sphi 0, %s66
    %s69 = sphi 0, %s68
    %s83 = sphi 0, %s69
    %s87 = sphi 0, %s87
    %s89 = sphi 0, %s87
    %s90 = sphi 0, %s89
    %s104 = sphi 0, %s90
    %s108 = sphi 0, %s108
    %s110 = sphi 0, %s108
    %s111 = sphi 0, %s110
    %s125 = sphi 0, %s111
    %s131 = sphi 0, %s133
    %s134 = sphi 0, %s131
    %s135 = sphi 0, %s134
    %s151 = sphi 0, %s135
  $region4: #{_final_convolve_forward.1} parent=0 // loop_header_branch
    %14 = sbr.rel (%p12) target = $region8
  $region5: #{_final_convolve_forward.1} parent=0 // loop_body
    %s16 = ssub.s32 %s11, 1
    %s17 = ssub.s32 %s11, 2
    %s18 = sadd.s32 %s11, 1
    %s19 = ssub.s32 %s11, %s18
    %p20 = scmp.eq.s32.totalorder %s19, 0
    %s22 = sadd.s32 %s21, 1
    %s23 = scalar_select %p20, %s21, %s22
    %p26 = pneg %p20
    %p27 = scmp.eq.s32.totalorder %s11, 1
    %p28 = por %p26, %p27
    %p29 = scmp.ne.s32.totalorder %s21, %s24
    %p30 = scmp.eq.s32.totalorder %s11, 0
    %p31 = por %p29, %p30
    %p32 = scmp.ne.s32.totalorder %s21, %s24
    %p33 = scmp.eq.s32.totalorder %s16, 1
    %p34 = por %p32, %p33
    %p35 = scmp.ne.s32.totalorder %s24, %s25
    %p36 = scmp.eq.s32.totalorder %s16, 0
    %p37 = por %p35, %p36
    %p38 = scmp.ne.s32.totalorder %s24, %s25
    %p39 = scmp.eq.s32.totalorder %s17, 1
    %p40 = por %p38, %p39
    %p42 = scmp.ne.s32.totalorder %s25, %s41
    %p43 = scmp.eq.s32.totalorder %s17, 0
    %p44 = por %p42, %p43
    %s46 = sadd.s32 %s45, 1
    %p49 = scmp.eq.s32.totalorder %s11, 1
    %p50 = scmp.ne.s32.totalorder %s45, %s47
    %p51 = scmp.eq.s32.totalorder %s11, 0
    %p52 = por %p50, %p51
    %p53 = scmp.ne.s32.totalorder %s45, %s47
    %p54 = scmp.eq.s32.totalorder %s16, 1
    %p55 = por %p53, %p54
    %p56 = scmp.ne.s32.totalorder %s47, %s48
    %p57 = scmp.eq.s32.totalorder %s16, 0
    %p58 = por %p56, %p57
    %p59 = scmp.ne.s32.totalorder %s47, %s48
    %p60 = scmp.eq.s32.totalorder %s17, 1
    %p61 = por %p59, %p60
    %p63 = scmp.ne.s32.totalorder %s48, %s62
    %p64 = scmp.eq.s32.totalorder %s17, 0
    %p65 = por %p63, %p64
    %s67 = sadd.s32 %s66, 1
    %p70 = scmp.eq.s32.totalorder %s11, 1
    %p71 = scmp.ne.s32.totalorder %s66, %s68
    %p72 = scmp.eq.s32.totalorder %s11, 0
    %p73 = por %p71, %p72
    %p74 = scmp.ne.s32.totalorder %s66, %s68
    %p75 = scmp.eq.s32.totalorder %s16, 1
    %p76 = por %p74, %p75
    %p77 = scmp.ne.s32.totalorder %s68, %s69
    %p78 = scmp.eq.s32.totalorder %s16, 0
    %p79 = por %p77, %p78
    %p80 = scmp.ne.s32.totalorder %s68, %s69
    %p81 = scmp.eq.s32.totalorder %s17, 1
    %p82 = por %p80, %p81
    %p84 = scmp.ne.s32.totalorder %s69, %s83
    %p85 = scmp.eq.s32.totalorder %s17, 0
    %p86 = por %p84, %p85
    %s88 = sadd.s32 %s87, 1
    %p91 = scmp.eq.s32.totalorder %s11, 1
    %p92 = scmp.ne.s32.totalorder %s87, %s89
    %p93 = scmp.eq.s32.totalorder %s11, 0
    %p94 = por %p92, %p93
    %p95 = scmp.ne.s32.totalorder %s87, %s89
    %p96 = scmp.eq.s32.totalorder %s16, 1
    %p97 = por %p95, %p96
    %p98 = scmp.ne.s32.totalorder %s89, %s90
    %p99 = scmp.eq.s32.totalorder %s16, 0
    %p100 = por %p98, %p99
    %p101 = scmp.ne.s32.totalorder %s89, %s90
    %p102 = scmp.eq.s32.totalorder %s17, 1
    %p103 = por %p101, %p102
    %p105 = scmp.ne.s32.totalorder %s90, %s104
    %p106 = scmp.eq.s32.totalorder %s17, 0
    %p107 = por %p105, %p106
    %s109 = sadd.s32 %s108, 1
    %p112 = scmp.eq.s32.totalorder %s11, 1
    %p113 = scmp.ne.s32.totalorder %s108, %s110
    %p114 = scmp.eq.s32.totalorder %s11, 0
    %p115 = por %p113, %p114
    %p116 = scmp.ne.s32.totalorder %s108, %s110
    %p117 = scmp.eq.s32.totalorder %s16, 1
    %p118 = por %p116, %p117
    %p119 = scmp.ne.s32.totalorder %s110, %s111
    %p120 = scmp.eq.s32.totalorder %s16, 0
    %p121 = por %p119, %p120
    %p122 = scmp.ne.s32.totalorder %s110, %s111
    %p123 = scmp.eq.s32.totalorder %s17, 1
    %p124 = por %p122, %p123
    %p126 = scmp.ne.s32.totalorder %s111, %s125
    %p127 = scmp.eq.s32.totalorder %s17, 0
    %p128 = por %p126, %p127
    %s129 = ssub.s32 %s11, %s18
    %p130 = scmp.eq.s32.totalorder %s129, 0
    %s132 = sadd.s32 %s131, 1
    %s133 = scalar_select %p130, %s131, %s132
    %p136 = pneg %p130
    %p137 = scmp.eq.s32.totalorder %s11, 1
    %p138 = por %p136, %p137
    %p139 = scmp.ne.s32.totalorder %s131, %s134
    %p140 = scmp.eq.s32.totalorder %s11, 0
    %p141 = por %p139, %p140
    %p142 = scmp.ne.s32.totalorder %s131, %s134
    %p143 = scmp.eq.s32.totalorder %s16, 1
    %p144 = por %p142, %p143
    %p145 = scmp.ne.s32.totalorder %s134, %s135
    %p146 = scmp.eq.s32.totalorder %s16, 0
    %p147 = por %p145, %p146
    %p148 = scmp.ne.s32.totalorder %s134, %s135
    %p149 = scmp.eq.s32.totalorder %s17, 1
    %p150 = por %p148, %p149
    %p152 = scmp.ne.s32.totalorder %s135, %s151
    %p153 = scmp.eq.s32.totalorder %s17, 0
    %p154 = por %p152, %p153
    %p155 = scmp.le.s32.totalorder 1, %s11
    %p156 = scmp.lt.s32.totalorder %s11, 3
    %p157 = pnand %p155, %p156
    %p158 = pneg %p157
    // Predicated region
    $region9: #{_final_convolve_forward.1} parent=5 // pred_check
      _
    $region10: #{_final_convolve_forward.1} parent=5 // pred_check_branch
      %160 = sbr.rel (%p157) target = $region12
    $region11: #{_final_convolve_forward.1} parent=5 // pred_region
      %s161 = ssub.s32 %s11, 1
      // Predicated region
      $region13: #{_final_convolve_forward.1} parent=11 // pred_check
        %p162 = pneg %p58
      $region14: #{_final_convolve_forward.1} parent=11 // pred_check_branch
        %164 = sbr.rel (%p162) target = $region16
      $region15: #{_final_convolve_forward.1} parent=11 // pred_region
        _
      $region16: #{_final_convolve_forward.1} parent=11 // pred_fallthru
        _
      // Predicated region
      $region17: #{_final_convolve_forward.1} parent=11 // pred_check
        %p165 = pneg %p79
      $region18: #{_final_convolve_forward.1} parent=11 // pred_check_branch
        %167 = sbr.rel (%p165) target = $region20
      $region19: #{_final_convolve_forward.1} parent=11 // pred_region
        _
      $region20: #{_final_convolve_forward.1} parent=11 // pred_fallthru
        _
      // Predicated region
      $region21: #{_final_convolve_forward.1} parent=11 // pred_check
        %p168 = pneg %p100
      $region22: #{_final_convolve_forward.1} parent=11 // pred_check_branch
        %170 = sbr.rel (%p168) target = $region24
      $region23: #{_final_convolve_forward.1} parent=11 // pred_region
        _
      $region24: #{_final_convolve_forward.1} parent=11 // pred_fallthru
        _
      // Predicated region
      $region25: #{_final_convolve_forward.1} parent=11 // pred_check
        %p171 = pneg %p121
      $region26: #{_final_convolve_forward.1} parent=11 // pred_check_branch
        %173 = sbr.rel (%p171) target = $region28
      $region27: #{_final_convolve_forward.1} parent=11 // pred_region
        _
      $region28: #{_final_convolve_forward.1} parent=11 // pred_fallthru
        _
    $region12: #{_final_convolve_forward.1} parent=5 // pred_fallthru
      _
    %p174 = scmp.lt.s32.totalorder %s11, 2
    // Predicated region
    $region29: #{_final_convolve_forward.1} parent=5 // pred_check
      %p175 = pneg %p174
    $region30: #{_final_convolve_forward.1} parent=5 // pred_check_branch
      %177 = sbr.rel (%p175) target = $region32
    $region31: #{_final_convolve_forward.1} parent=5 // pred_region
      // Predicated region
      $region33: #{_final_convolve_forward.1} parent=31 // pred_check
        %p178 = pneg %p31
      $region34: #{_final_convolve_forward.1} parent=31 // pred_check_branch
        %180 = sbr.rel (%p178) target = $region36
      $region35: #{_final_convolve_forward.1} parent=31 // pred_region
        %p181 = scmp.lt.s32.totalorder %s11, 1
        %s182 = scalar_select %p181, %s11, 1
        %s183 = smul.addr %s182, 32
        %s184 = smul.addr %s183, 8
        %s185 = scalar_lea.vmem %s0, %s184
      $region36: #{_final_convolve_forward.1} parent=31 // pred_fallthru
        _
    $region32: #{_final_convolve_forward.1} parent=5 // pred_fallthru
      _
    %p186 = scmp.le.s32.totalorder 1, %s11
    %p187 = scmp.lt.s32.totalorder %s11, 3
    %p188 = pnand %p186, %p187
    %p189 = pneg %p188
    // Predicated region
    $region37: #{_final_convolve_forward.1} parent=5 // pred_check
      _
    $region38: #{_final_convolve_forward.1} parent=5 // pred_check_branch
      %191 = sbr.rel (%p188) target = $region40
    $region39: #{_final_convolve_forward.1} parent=5 // pred_region
      %s192 = ssub.s32 %s11, 1
      %p193 = scmp.lt.s32.totalorder %s16, 1
      %s194 = scalar_select %p193, %s16, 1
      %s195 = smul.addr %s194, 32
      %s196 = smul.addr %s195, 8
      %s197 = scalar_lea.vmem %s0, %s196
      %p198 = pneg %p37
      %p199 = pneg %p34
      %p200 = pneg %p58
      %p201 = pneg %p55
      %p202 = pneg %p79
      %p203 = pneg %p76
      %p204 = pneg %p100
      %p205 = pneg %p97
      %p206 = pneg %p121
      %p207 = pneg %p118
      %p208 = pneg %p147
      %p209 = pneg %p144
      %p210 = scmp.lt.s32.totalorder %s16, 1
      %s211 = scalar_select %p210, %s16, 1
      %s212 = smul.addr %s211, 24
      %s213 = smul.addr %s212, 8
      %s214 = scalar_lea.vmem %s5, %s213
      %p215 = scmp.lt.s32.totalorder %s16, 1
      %s216 = scalar_select %p215, %s16, 1
      %s217 = smul.addr %s216, 32
      %s218 = smul.addr %s217, 8
      %s219 = scalar_lea.vmem %s0, %s218
      %p220 = scmp.lt.s32.totalorder %s16, 1
      %s221 = scalar_select %p220, %s16, 1
      %s222 = smul.addr %s221, 24
      %s223 = smul.addr %s222, 8
      %s224 = scalar_lea.vmem %s5, %s223
      %v225 = vld [vmem:[%s1] sm:$0xff]
      %v226 = vld [vmem:[%s1 + $0x8] sm:$0xff]
      %v227 = vld [vmem:[%s1 + $0x10] sm:$0xff]
      %v228 = vld [vmem:[%s1 + $0x18] sm:$0xff]
      %v229 = vld [vmem:[%s1 + $0x20] sm:$0xf]
      %v230 = vld [vmem:[%s3] sm:$0xff]
      %v231 = vld [vmem:[%s3 + $0x8] sm:$0xff]
      %v232 = vld [vmem:[%s3 + $0x10] sm:$0xff]
      %v233 = vld [vmem:[%s3 + $0x18] sm:$0xff]
      %v234 = vld [vmem:[%s3 + $0x20] sm:$0xff]
      %v235 = vld [vmem:[%s3 + $0x28] sm:$0xff]
      %v236 = vld [vmem:[%s3 + $0x30] sm:$0xff]
      %v237 = vld [vmem:[%s3 + $0x38] sm:$0xff]
      %v238 = vld [vmem:[%s3 + $0x40] sm:$0xff]
      %v239 = vld [vmem:[%s2] sm:$0x1]
      %v240 = vld [vmem:[%s4] sm:$0x1]
      %v241 = vld [vmem:[%s219] sm:$0xff]
      %v242 = vld [vmem:[%s219 + $0x8] sm:$0xff]
      %v243 = vld [vmem:[%s219 + $0x10] sm:$0xff]
      %v244 = vld [vmem:[%s219 + $0x18] sm:$0xff]
      %v245 = vld [vmem:[%s219 + $0x20] sm:$0xff]
      %v246 = vld [vmem:[%s219 + $0x28] sm:$0xff]
      %v247 = vld [vmem:[%s219 + $0x30] sm:$0xff]
      %v248 = vld [vmem:[%s219 + $0x38] sm:$0xff]
      %v249 = vld [vmem:[%s219 + $0x40] sm:$0xff]
      %v250 = vld [vmem:[%s219 + $0x48] sm:$0xff]
      %v251 = vld [vmem:[%s219 + $0x50] sm:$0xff]
      %v252 = vld [vmem:[%s219 + $0x58] sm:$0xff]
      %v253 = vld [vmem:[%s219 + $0x60] sm:$0xff]
      %v254 = vld [vmem:[%s219 + $0x68] sm:$0xff]
      %v255 = vld [vmem:[%s219 + $0x70] sm:$0xff]
      %v256 = vld [vmem:[%s219 + $0x78] sm:$0xff]
      %v257 = vld [vmem:[%s219 + $0x80] sm:$0xff]
      %v258 = vld [vmem:[%s219 + $0x88] sm:$0xff]
      %v259 = vld [vmem:[%s219 + $0x90] sm:$0xff]
      %v260 = vld [vmem:[%s219 + $0x98] sm:$0xff]
      %v261 = vld [vmem:[%s219 + $0xa0] sm:$0xff]
      %v262 = vld [vmem:[%s219 + $0xa8] sm:$0xff]
      %v263 = vld [vmem:[%s219 + $0xb0] sm:$0xff]
      %v264 = vld [vmem:[%s219 + $0xb8] sm:$0xff]
      %v265 = vld [vmem:[%s219 + $0xc0] sm:$0xff]
      %v266 = vld [vmem:[%s219 + $0xc8] sm:$0xff]
      %v267 = vld [vmem:[%s219 + $0xd0] sm:$0xff]
      %v268 = vld [vmem:[%s219 + $0xd8] sm:$0xff]
      %v269 = vld [vmem:[%s219 + $0xe0] sm:$0xff]
      %v270 = vld [vmem:[%s219 + $0xe8] sm:$0xff]
      %v271 = vld [vmem:[%s219 + $0xf0] sm:$0xff]
      %v272 = vld [vmem:[%s219 + $0xf8] sm:$0xff]
      %vm301 = vcmask 1046528
      %v302 = vrot.slane %v241, 1
      %v303 = vrot.slane %v242, 1
      %v304 = vsel %vm301, %v302, %v303
      %v305 = vrot.slane %v243, 1
      %v306 = vrot.slane %v244, 1
      %v307 = vsel %vm301, %v305, %v306
      %v308 = vrot.slane %v245, 1
      %v309 = vrot.slane %v246, 1
      %v310 = vsel %vm301, %v308, %v309
      %v311 = vrot.slane %v247, 1
      %v312 = vrot.slane %v248, 1
      %v313 = vsel %vm301, %v311, %v312
      %v314 = vrot.slane %v249, 1
      %v315 = vrot.slane %v250, 1
      %v316 = vsel %vm301, %v314, %v315
      %v317 = vrot.slane %v251, 1
      %v318 = vrot.slane %v252, 1
      %v319 = vsel %vm301, %v317, %v318
      %v320 = vrot.slane %v253, 1
      %v321 = vrot.slane %v254, 1
      %v322 = vsel %vm301, %v320, %v321
      %v323 = vrot.slane %v255, 1
      %v324 = vrot.slane %v256, 1
      %v325 = vsel %vm301, %v323, %v324
      %v326 = vrot.slane %v257, 1
      %v327 = vrot.slane %v258, 1
      %v328 = vsel %vm301, %v326, %v327
      %v329 = vrot.slane %v259, 1
      %v330 = vrot.slane %v260, 1
      %v331 = vsel %vm301, %v329, %v330
      %v332 = vrot.slane %v261, 1
      %v333 = vrot.slane %v262, 1
      %v334 = vsel %vm301, %v332, %v333
      %v335 = vrot.slane %v263, 1
      %v336 = vrot.slane %v264, 1
      %v337 = vsel %vm301, %v335, %v336
      %v338 = vrot.slane %v265, 1
      %v339 = vrot.slane %v266, 1
      %v340 = vsel %vm301, %v338, %v339
      %v341 = vrot.slane %v267, 1
      %v342 = vrot.slane %v268, 1
      %v343 = vsel %vm301, %v341, %v342
      %344 = vrot.lane.b32.xlu0 %v304, 4
      %v345 = vpop.permute.xlu0 %344
      %346 = vrot.lane.b32.xlu0 %v303, 4
      %v347 = vpop.permute.xlu0 %346
      %348 = vrot.lane.b32.xlu0 %v307, 4
      %v349 = vpop.permute.xlu0 %348
      %350 = vrot.lane.b32.xlu0 %v306, 4
      %v351 = vpop.permute.xlu0 %350
      %352 = vrot.lane.b32.xlu0 %v310, 4
      %v353 = vpop.permute.xlu0 %352
      %354 = vrot.lane.b32.xlu0 %v309, 4
      %v355 = vpop.permute.xlu0 %354
      %356 = vrot.lane.b32.xlu0 %v313, 4
      %v357 = vpop.permute.xlu0 %356
      %358 = vrot.lane.b32.xlu0 %v312, 4
      %v359 = vpop.permute.xlu0 %358
      %360 = vrot.lane.b32.xlu0 %v316, 4
      %v361 = vpop.permute.xlu0 %360
      %362 = vrot.lane.b32.xlu0 %v315, 4
      %v363 = vpop.permute.xlu0 %362
      %364 = vrot.lane.b32.xlu0 %v319, 4
      %v365 = vpop.permute.xlu0 %364
      %366 = vrot.lane.b32.xlu0 %v318, 4
      %v367 = vpop.permute.xlu0 %366
      %368 = vrot.lane.b32.xlu0 %v322, 4
      %v369 = vpop.permute.xlu0 %368
      %370 = vrot.lane.b32.xlu0 %v321, 4
      %v371 = vpop.permute.xlu0 %370
      %372 = vrot.lane.b32.xlu0 %v325, 4
      %v373 = vpop.permute.xlu0 %372
      %374 = vrot.lane.b32.xlu0 %v324, 4
      %v375 = vpop.permute.xlu0 %374
      %376 = vrot.lane.b32.xlu0 %v328, 4
      %v377 = vpop.permute.xlu0 %376
      %378 = vrot.lane.b32.xlu0 %v327, 4
      %v379 = vpop.permute.xlu0 %378
      %380 = vrot.lane.b32.xlu0 %v331, 4
      %v381 = vpop.permute.xlu0 %380
      %382 = vrot.lane.b32.xlu0 %v330, 4
      %v383 = vpop.permute.xlu0 %382
      %384 = vrot.lane.b32.xlu0 %v334, 4
      %v385 = vpop.permute.xlu0 %384
      %386 = vrot.lane.b32.xlu0 %v333, 4
      %v387 = vpop.permute.xlu0 %386
      %388 = vrot.lane.b32.xlu0 %v337, 4
      %v389 = vpop.permute.xlu0 %388
      %390 = vrot.lane.b32.xlu0 %v336, 4
      %v391 = vpop.permute.xlu0 %390
      %392 = vrot.lane.b32.xlu0 %v340, 4
      %v393 = vpop.permute.xlu0 %392
      %394 = vrot.lane.b32.xlu0 %v339, 4
      %v395 = vpop.permute.xlu0 %394
      %396 = vrot.lane.b32.xlu0 %v343, 4
      %v397 = vpop.permute.xlu0 %396
      %398 = vrot.lane.b32.xlu0 %v342, 4
      %v399 = vpop.permute.xlu0 %398
      %vm428 = vcmask 1045504
      %v429 = vrot.slane %v241, 2
      %v430 = vrot.slane %v242, 2
      %v431 = vsel %vm428, %v429, %v430
      %v432 = vrot.slane %v243, 2
      %v433 = vrot.slane %v244, 2
      %v434 = vsel %vm428, %v432, %v433
      %v435 = vrot.slane %v245, 2
      %v436 = vrot.slane %v246, 2
      %v437 = vsel %vm428, %v435, %v436
      %v438 = vrot.slane %v247, 2
      %v439 = vrot.slane %v248, 2
      %v440 = vsel %vm428, %v438, %v439
      %v441 = vrot.slane %v249, 2
      %v442 = vrot.slane %v250, 2
      %v443 = vsel %vm428, %v441, %v442
      %v444 = vrot.slane %v251, 2
      %v445 = vrot.slane %v252, 2
      %v446 = vsel %vm428, %v444, %v445
      %v447 = vrot.slane %v253, 2
      %v448 = vrot.slane %v254, 2
      %v449 = vsel %vm428, %v447, %v448
      %v450 = vrot.slane %v255, 2
      %v451 = vrot.slane %v256, 2
      %v452 = vsel %vm428, %v450, %v451
      %v453 = vrot.slane %v257, 2
      %v454 = vrot.slane %v258, 2
      %v455 = vsel %vm428, %v453, %v454
      %v456 = vrot.slane %v259, 2
      %v457 = vrot.slane %v260, 2
      %v458 = vsel %vm428, %v456, %v457
      %v459 = vrot.slane %v261, 2
      %v460 = vrot.slane %v262, 2
      %v461 = vsel %vm428, %v459, %v460
      %v462 = vrot.slane %v263, 2
      %v463 = vrot.slane %v264, 2
      %v464 = vsel %vm428, %v462, %v463
      %v465 = vrot.slane %v265, 2
      %v466 = vrot.slane %v266, 2
      %v467 = vsel %vm428, %v465, %v466
      %v468 = vrot.slane %v267, 2
      %v469 = vrot.slane %v268, 2
      %v470 = vsel %vm428, %v468, %v469
      %471 = vrot.lane.b32.xlu0 %v431, 8
      %v472 = vpop.permute.xlu0 %471
      %473 = vrot.lane.b32.xlu0 %v430, 8
      %v474 = vpop.permute.xlu0 %473
      %475 = vrot.lane.b32.xlu0 %v434, 8
      %v476 = vpop.permute.xlu0 %475
      %477 = vrot.lane.b32.xlu0 %v433, 8
      %v478 = vpop.permute.xlu0 %477
      %479 = vrot.lane.b32.xlu0 %v437, 8
      %v480 = vpop.permute.xlu0 %479
      %481 = vrot.lane.b32.xlu0 %v436, 8
      %v482 = vpop.permute.xlu0 %481
      %483 = vrot.lane.b32.xlu0 %v440, 8
      %v484 = vpop.permute.xlu0 %483
      %485 = vrot.lane.b32.xlu0 %v439, 8
      %v486 = vpop.permute.xlu0 %485
      %487 = vrot.lane.b32.xlu0 %v443, 8
      %v488 = vpop.permute.xlu0 %487
      %489 = vrot.lane.b32.xlu0 %v442, 8
      %v490 = vpop.permute.xlu0 %489
      %491 = vrot.lane.b32.xlu0 %v446, 8
      %v492 = vpop.permute.xlu0 %491
      %493 = vrot.lane.b32.xlu0 %v445, 8
      %v494 = vpop.permute.xlu0 %493
      %495 = vrot.lane.b32.xlu0 %v449, 8
      %v496 = vpop.permute.xlu0 %495
      %497 = vrot.lane.b32.xlu0 %v448, 8
      %v498 = vpop.permute.xlu0 %497
      %499 = vrot.lane.b32.xlu0 %v452, 8
      %v500 = vpop.permute.xlu0 %499
      %501 = vrot.lane.b32.xlu0 %v451, 8
      %v502 = vpop.permute.xlu0 %501
      %503 = vrot.lane.b32.xlu0 %v455, 8
      %v504 = vpop.permute.xlu0 %503
      %505 = vrot.lane.b32.xlu0 %v454, 8
      %v506 = vpop.permute.xlu0 %505
      %507 = vrot.lane.b32.xlu0 %v458, 8
      %v508 = vpop.permute.xlu0 %507
      %509 = vrot.lane.b32.xlu0 %v457, 8
      %v510 = vpop.permute.xlu0 %509
      %511 = vrot.lane.b32.xlu0 %v461, 8
      %v512 = vpop.permute.xlu0 %511
      %513 = vrot.lane.b32.xlu0 %v460, 8
      %v514 = vpop.permute.xlu0 %513
      %515 = vrot.lane.b32.xlu0 %v464, 8
      %v516 = vpop.permute.xlu0 %515
      %517 = vrot.lane.b32.xlu0 %v463, 8
      %v518 = vpop.permute.xlu0 %517
      %519 = vrot.lane.b32.xlu0 %v467, 8
      %v520 = vpop.permute.xlu0 %519
      %521 = vrot.lane.b32.xlu0 %v466, 8
      %v522 = vpop.permute.xlu0 %521
      %523 = vrot.lane.b32.xlu0 %v470, 8
      %v524 = vpop.permute.xlu0 %523
      %525 = vrot.lane.b32.xlu0 %v469, 8
      %v526 = vpop.permute.xlu0 %525
      %557 = vrot.lane.b32.xlu0 %v243, 12
      %v558 = vpop.permute.xlu0 %557
      %559 = vrot.lane.b32.xlu0 %v244, 12
      %v560 = vpop.permute.xlu0 %559
      %561 = vrot.lane.b32.xlu0 %v245, 12
      %v562 = vpop.permute.xlu0 %561
      %563 = vrot.lane.b32.xlu0 %v246, 12
      %v564 = vpop.permute.xlu0 %563
      %565 = vrot.lane.b32.xlu0 %v247, 12
      %v566 = vpop.permute.xlu0 %565
      %567 = vrot.lane.b32.xlu0 %v248, 12
      %v568 = vpop.permute.xlu0 %567
      %569 = vrot.lane.b32.xlu0 %v249, 12
      %v570 = vpop.permute.xlu0 %569
      %571 = vrot.lane.b32.xlu0 %v250, 12
      %v572 = vpop.permute.xlu0 %571
      %573 = vrot.lane.b32.xlu0 %v251, 12
      %v574 = vpop.permute.xlu0 %573
      %575 = vrot.lane.b32.xlu0 %v252, 12
      %v576 = vpop.permute.xlu0 %575
      %577 = vrot.lane.b32.xlu0 %v253, 12
      %v578 = vpop.permute.xlu0 %577
      %579 = vrot.lane.b32.xlu0 %v254, 12
      %v580 = vpop.permute.xlu0 %579
      %581 = vrot.lane.b32.xlu0 %v255, 12
      %v582 = vpop.permute.xlu0 %581
      %583 = vrot.lane.b32.xlu0 %v256, 12
      %v584 = vpop.permute.xlu0 %583
      %585 = vrot.lane.b32.xlu0 %v257, 12
      %v586 = vpop.permute.xlu0 %585
      %587 = vrot.lane.b32.xlu0 %v258, 12
      %v588 = vpop.permute.xlu0 %587
      %589 = vrot.lane.b32.xlu0 %v259, 12
      %v590 = vpop.permute.xlu0 %589
      %591 = vrot.lane.b32.xlu0 %v260, 12
      %v592 = vpop.permute.xlu0 %591
      %593 = vrot.lane.b32.xlu0 %v261, 12
      %v594 = vpop.permute.xlu0 %593
      %595 = vrot.lane.b32.xlu0 %v262, 12
      %v596 = vpop.permute.xlu0 %595
      %597 = vrot.lane.b32.xlu0 %v263, 12
      %v598 = vpop.permute.xlu0 %597
      %599 = vrot.lane.b32.xlu0 %v264, 12
      %v600 = vpop.permute.xlu0 %599
      %601 = vrot.lane.b32.xlu0 %v265, 12
      %v602 = vpop.permute.xlu0 %601
      %603 = vrot.lane.b32.xlu0 %v266, 12
      %v604 = vpop.permute.xlu0 %603
      %605 = vrot.lane.b32.xlu0 %v267, 12
      %v606 = vpop.permute.xlu0 %605
      %607 = vrot.lane.b32.xlu0 %v268, 12
      %v608 = vpop.permute.xlu0 %607
      %609 = vrot.lane.b32.xlu0 %v269, 12
      %v610 = vpop.permute.xlu0 %609
      %611 = vrot.lane.b32.xlu0 %v270, 12
      %v612 = vpop.permute.xlu0 %611
      %v641 = vrot.slane %v269, 1
      %v642 = vrot.slane %v270, 1
      %v643 = vsel %vm301, %v641, %v642
      %644 = vrot.lane.b32.xlu0 %v307, 16
      %v645 = vpop.permute.xlu0 %644
      %646 = vrot.lane.b32.xlu0 %v306, 16
      %v647 = vpop.permute.xlu0 %646
      %648 = vrot.lane.b32.xlu0 %v310, 16
      %v649 = vpop.permute.xlu0 %648
      %650 = vrot.lane.b32.xlu0 %v309, 16
      %v651 = vpop.permute.xlu0 %650
      %652 = vrot.lane.b32.xlu0 %v313, 16
      %v653 = vpop.permute.xlu0 %652
      %654 = vrot.lane.b32.xlu0 %v312, 16
      %v655 = vpop.permute.xlu0 %654
      %656 = vrot.lane.b32.xlu0 %v316, 16
      %v657 = vpop.permute.xlu0 %656
      %658 = vrot.lane.b32.xlu0 %v315, 16
      %v659 = vpop.permute.xlu0 %658
      %660 = vrot.lane.b32.xlu0 %v319, 16
      %v661 = vpop.permute.xlu0 %660
      %662 = vrot.lane.b32.xlu0 %v318, 16
      %v663 = vpop.permute.xlu0 %662
      %664 = vrot.lane.b32.xlu0 %v322, 16
      %v665 = vpop.permute.xlu0 %664
      %666 = vrot.lane.b32.xlu0 %v321, 16
      %v667 = vpop.permute.xlu0 %666
      %668 = vrot.lane.b32.xlu0 %v325, 16
      %v669 = vpop.permute.xlu0 %668
      %670 = vrot.lane.b32.xlu0 %v324, 16
      %v671 = vpop.permute.xlu0 %670
      %672 = vrot.lane.b32.xlu0 %v328, 16
      %v673 = vpop.permute.xlu0 %672
      %674 = vrot.lane.b32.xlu0 %v327, 16
      %v675 = vpop.permute.xlu0 %674
      %676 = vrot.lane.b32.xlu0 %v331, 16
      %v677 = vpop.permute.xlu0 %676
      %678 = vrot.lane.b32.xlu0 %v330, 16
      %v679 = vpop.permute.xlu0 %678
      %680 = vrot.lane.b32.xlu0 %v334, 16
      %v681 = vpop.permute.xlu0 %680
      %682 = vrot.lane.b32.xlu0 %v333, 16
      %v683 = vpop.permute.xlu0 %682
      %684 = vrot.lane.b32.xlu0 %v337, 16
      %v685 = vpop.permute.xlu0 %684
      %686 = vrot.lane.b32.xlu0 %v336, 16
      %v687 = vpop.permute.xlu0 %686
      %688 = vrot.lane.b32.xlu0 %v340, 16
      %v689 = vpop.permute.xlu0 %688
      %690 = vrot.lane.b32.xlu0 %v339, 16
      %v691 = vpop.permute.xlu0 %690
      %692 = vrot.lane.b32.xlu0 %v343, 16
      %v693 = vpop.permute.xlu0 %692
      %694 = vrot.lane.b32.xlu0 %v342, 16
      %v695 = vpop.permute.xlu0 %694
      %696 = vrot.lane.b32.xlu0 %v643, 16
      %v697 = vpop.permute.xlu0 %696
      %698 = vrot.lane.b32.xlu0 %v642, 16
      %v699 = vpop.permute.xlu0 %698
      %v728 = vrot.slane %v269, 2
      %v729 = vrot.slane %v270, 2
      %v730 = vsel %vm428, %v728, %v729
      %731 = vrot.lane.b32.xlu0 %v434, 20
      %v732 = vpop.permute.xlu0 %731
      %733 = vrot.lane.b32.xlu0 %v433, 20
      %v734 = vpop.permute.xlu0 %733
      %735 = vrot.lane.b32.xlu0 %v437, 20
      %v736 = vpop.permute.xlu0 %735
      %737 = vrot.lane.b32.xlu0 %v436, 20
      %v738 = vpop.permute.xlu0 %737
      %739 = vrot.lane.b32.xlu0 %v440, 20
      %v740 = vpop.permute.xlu0 %739
      %741 = vrot.lane.b32.xlu0 %v439, 20
      %v742 = vpop.permute.xlu0 %741
      %743 = vrot.lane.b32.xlu0 %v443, 20
      %v744 = vpop.permute.xlu0 %743
      %745 = vrot.lane.b32.xlu0 %v442, 20
      %v746 = vpop.permute.xlu0 %745
      %747 = vrot.lane.b32.xlu0 %v446, 20
      %v748 = vpop.permute.xlu0 %747
      %749 = vrot.lane.b32.xlu0 %v445, 20
      %v750 = vpop.permute.xlu0 %749
      %751 = vrot.lane.b32.xlu0 %v449, 20
      %v752 = vpop.permute.xlu0 %751
      %753 = vrot.lane.b32.xlu0 %v448, 20
      %v754 = vpop.permute.xlu0 %753
      %755 = vrot.lane.b32.xlu0 %v452, 20
      %v756 = vpop.permute.xlu0 %755
      %757 = vrot.lane.b32.xlu0 %v451, 20
      %v758 = vpop.permute.xlu0 %757
      %759 = vrot.lane.b32.xlu0 %v455, 20
      %v760 = vpop.permute.xlu0 %759
      %761 = vrot.lane.b32.xlu0 %v454, 20
      %v762 = vpop.permute.xlu0 %761
      %763 = vrot.lane.b32.xlu0 %v458, 20
      %v764 = vpop.permute.xlu0 %763
      %765 = vrot.lane.b32.xlu0 %v457, 20
      %v766 = vpop.permute.xlu0 %765
      %767 = vrot.lane.b32.xlu0 %v461, 20
      %v768 = vpop.permute.xlu0 %767
      %769 = vrot.lane.b32.xlu0 %v460, 20
      %v770 = vpop.permute.xlu0 %769
      %771 = vrot.lane.b32.xlu0 %v464, 20
      %v772 = vpop.permute.xlu0 %771
      %773 = vrot.lane.b32.xlu0 %v463, 20
      %v774 = vpop.permute.xlu0 %773
      %775 = vrot.lane.b32.xlu0 %v467, 20
      %v776 = vpop.permute.xlu0 %775
      %777 = vrot.lane.b32.xlu0 %v466, 20
      %v778 = vpop.permute.xlu0 %777
      %779 = vrot.lane.b32.xlu0 %v470, 20
      %v780 = vpop.permute.xlu0 %779
      %781 = vrot.lane.b32.xlu0 %v469, 20
      %v782 = vpop.permute.xlu0 %781
      %783 = vrot.lane.b32.xlu0 %v730, 20
      %v784 = vpop.permute.xlu0 %783
      %785 = vrot.lane.b32.xlu0 %v729, 20
      %v786 = vpop.permute.xlu0 %785
      %817 = vrot.lane.b32.xlu0 %v245, 24
      %v818 = vpop.permute.xlu0 %817
      %819 = vrot.lane.b32.xlu0 %v246, 24
      %v820 = vpop.permute.xlu0 %819
      %821 = vrot.lane.b32.xlu0 %v247, 24
      %v822 = vpop.permute.xlu0 %821
      %823 = vrot.lane.b32.xlu0 %v248, 24
      %v824 = vpop.permute.xlu0 %823
      %825 = vrot.lane.b32.xlu0 %v249, 24
      %v826 = vpop.permute.xlu0 %825
      %827 = vrot.lane.b32.xlu0 %v250, 24
      %v828 = vpop.permute.xlu0 %827
      %829 = vrot.lane.b32.xlu0 %v251, 24
      %v830 = vpop.permute.xlu0 %829
      %831 = vrot.lane.b32.xlu0 %v252, 24
      %v832 = vpop.permute.xlu0 %831
      %833 = vrot.lane.b32.xlu0 %v253, 24
      %v834 = vpop.permute.xlu0 %833
      %835 = vrot.lane.b32.xlu0 %v254, 24
      %v836 = vpop.permute.xlu0 %835
      %837 = vrot.lane.b32.xlu0 %v255, 24
      %v838 = vpop.permute.xlu0 %837
      %839 = vrot.lane.b32.xlu0 %v256, 24
      %v840 = vpop.permute.xlu0 %839
      %841 = vrot.lane.b32.xlu0 %v257, 24
      %v842 = vpop.permute.xlu0 %841
      %843 = vrot.lane.b32.xlu0 %v258, 24
      %v844 = vpop.permute.xlu0 %843
      %845 = vrot.lane.b32.xlu0 %v259, 24
      %v846 = vpop.permute.xlu0 %845
      %847 = vrot.lane.b32.xlu0 %v260, 24
      %v848 = vpop.permute.xlu0 %847
      %849 = vrot.lane.b32.xlu0 %v261, 24
      %v850 = vpop.permute.xlu0 %849
      %851 = vrot.lane.b32.xlu0 %v262, 24
      %v852 = vpop.permute.xlu0 %851
      %853 = vrot.lane.b32.xlu0 %v263, 24
      %v854 = vpop.permute.xlu0 %853
      %855 = vrot.lane.b32.xlu0 %v264, 24
      %v856 = vpop.permute.xlu0 %855
      %857 = vrot.lane.b32.xlu0 %v265, 24
      %v858 = vpop.permute.xlu0 %857
      %859 = vrot.lane.b32.xlu0 %v266, 24
      %v860 = vpop.permute.xlu0 %859
      %861 = vrot.lane.b32.xlu0 %v267, 24
      %v862 = vpop.permute.xlu0 %861
      %863 = vrot.lane.b32.xlu0 %v268, 24
      %v864 = vpop.permute.xlu0 %863
      %865 = vrot.lane.b32.xlu0 %v269, 24
      %v866 = vpop.permute.xlu0 %865
      %867 = vrot.lane.b32.xlu0 %v270, 24
      %v868 = vpop.permute.xlu0 %867
      %869 = vrot.lane.b32.xlu0 %v271, 24
      %v870 = vpop.permute.xlu0 %869
      %871 = vrot.lane.b32.xlu0 %v272, 24
      %v872 = vpop.permute.xlu0 %871
      %v901 = vrot.slane %v271, 1
      %v902 = vrot.slane %v272, 1
      %v903 = vsel %vm301, %v901, %v902
      %904 = vrot.lane.b32.xlu0 %v310, 28
      %v905 = vpop.permute.xlu0 %904
      %906 = vrot.lane.b32.xlu0 %v309, 28
      %v907 = vpop.permute.xlu0 %906
      %908 = vrot.lane.b32.xlu0 %v313, 28
      %v909 = vpop.permute.xlu0 %908
      %910 = vrot.lane.b32.xlu0 %v312, 28
      %v911 = vpop.permute.xlu0 %910
      %912 = vrot.lane.b32.xlu0 %v316, 28
      %v913 = vpop.permute.xlu0 %912
      %914 = vrot.lane.b32.xlu0 %v315, 28
      %v915 = vpop.permute.xlu0 %914
      %916 = vrot.lane.b32.xlu0 %v319, 28
      %v917 = vpop.permute.xlu0 %916
      %918 = vrot.lane.b32.xlu0 %v318, 28
      %v919 = vpop.permute.xlu0 %918
      %920 = vrot.lane.b32.xlu0 %v322, 28
      %v921 = vpop.permute.xlu0 %920
      %922 = vrot.lane.b32.xlu0 %v321, 28
      %v923 = vpop.permute.xlu0 %922
      %924 = vrot.lane.b32.xlu0 %v325, 28
      %v925 = vpop.permute.xlu0 %924
      %926 = vrot.lane.b32.xlu0 %v324, 28
      %v927 = vpop.permute.xlu0 %926
      %928 = vrot.lane.b32.xlu0 %v328, 28
      %v929 = vpop.permute.xlu0 %928
      %930 = vrot.lane.b32.xlu0 %v327, 28
      %v931 = vpop.permute.xlu0 %930
      %932 = vrot.lane.b32.xlu0 %v331, 28
      %v933 = vpop.permute.xlu0 %932
      %934 = vrot.lane.b32.xlu0 %v330, 28
      %v935 = vpop.permute.xlu0 %934
      %936 = vrot.lane.b32.xlu0 %v334, 28
      %v937 = vpop.permute.xlu0 %936
      %938 = vrot.lane.b32.xlu0 %v333, 28
      %v939 = vpop.permute.xlu0 %938
      %940 = vrot.lane.b32.xlu0 %v337, 28
      %v941 = vpop.permute.xlu0 %940
      %942 = vrot.lane.b32.xlu0 %v336, 28
      %v943 = vpop.permute.xlu0 %942
      %944 = vrot.lane.b32.xlu0 %v340, 28
      %v945 = vpop.permute.xlu0 %944
      %946 = vrot.lane.b32.xlu0 %v339, 28
      %v947 = vpop.permute.xlu0 %946
      %948 = vrot.lane.b32.xlu0 %v343, 28
      %v949 = vpop.permute.xlu0 %948
      %950 = vrot.lane.b32.xlu0 %v342, 28
      %v951 = vpop.permute.xlu0 %950
      %952 = vrot.lane.b32.xlu0 %v643, 28
      %v953 = vpop.permute.xlu0 %952
      %954 = vrot.lane.b32.xlu0 %v642, 28
      %v955 = vpop.permute.xlu0 %954
      %956 = vrot.lane.b32.xlu0 %v903, 28
      %v957 = vpop.permute.xlu0 %956
      %958 = vrot.lane.b32.xlu0 %v902, 28
      %v959 = vpop.permute.xlu0 %958
      %v988 = vrot.slane %v271, 2
      %v989 = vrot.slane %v272, 2
      %v990 = vsel %vm428, %v988, %v989
      %991 = vrot.lane.b32.xlu0 %v437, 32
      %v992 = vpop.permute.xlu0 %991
      %993 = vrot.lane.b32.xlu0 %v436, 32
      %v994 = vpop.permute.xlu0 %993
      %995 = vrot.lane.b32.xlu0 %v440, 32
      %v996 = vpop.permute.xlu0 %995
      %997 = vrot.lane.b32.xlu0 %v439, 32
      %v998 = vpop.permute.xlu0 %997
      %999 = vrot.lane.b32.xlu0 %v443, 32
      %v1000 = vpop.permute.xlu0 %999
      %1001 = vrot.lane.b32.xlu0 %v442, 32
      %v1002 = vpop.permute.xlu0 %1001
      %1003 = vrot.lane.b32.xlu0 %v446, 32
      %v1004 = vpop.permute.xlu0 %1003
      %1005 = vrot.lane.b32.xlu0 %v445, 32
      %v1006 = vpop.permute.xlu0 %1005
      %1007 = vrot.lane.b32.xlu0 %v449, 32
      %v1008 = vpop.permute.xlu0 %1007
      %1009 = vrot.lane.b32.xlu0 %v448, 32
      %v1010 = vpop.permute.xlu0 %1009
      %1011 = vrot.lane.b32.xlu0 %v452, 32
      %v1012 = vpop.permute.xlu0 %1011
      %1013 = vrot.lane.b32.xlu0 %v451, 32
      %v1014 = vpop.permute.xlu0 %1013
      %1015 = vrot.lane.b32.xlu0 %v455, 32
      %v1016 = vpop.permute.xlu0 %1015
      %1017 = vrot.lane.b32.xlu0 %v454, 32
      %v1018 = vpop.permute.xlu0 %1017
      %1019 = vrot.lane.b32.xlu0 %v458, 32
      %v1020 = vpop.permute.xlu0 %1019
      %1021 = vrot.lane.b32.xlu0 %v457, 32
      %v1022 = vpop.permute.xlu0 %1021
      %1023 = vrot.lane.b32.xlu0 %v461, 32
      %v1024 = vpop.permute.xlu0 %1023
      %1025 = vrot.lane.b32.xlu0 %v460, 32
      %v1026 = vpop.permute.xlu0 %1025
      %1027 = vrot.lane.b32.xlu0 %v464, 32
      %v1028 = vpop.permute.xlu0 %1027
      %1029 = vrot.lane.b32.xlu0 %v463, 32
      %v1030 = vpop.permute.xlu0 %1029
      %1031 = vrot.lane.b32.xlu0 %v467, 32
      %v1032 = vpop.permute.xlu0 %1031
      %1033 = vrot.lane.b32.xlu0 %v466, 32
      %v1034 = vpop.permute.xlu0 %1033
      %1035 = vrot.lane.b32.xlu0 %v470, 32
      %v1036 = vpop.permute.xlu0 %1035
      %1037 = vrot.lane.b32.xlu0 %v469, 32
      %v1038 = vpop.permute.xlu0 %1037
      %1039 = vrot.lane.b32.xlu0 %v730, 32
      %v1040 = vpop.permute.xlu0 %1039
      %1041 = vrot.lane.b32.xlu0 %v729, 32
      %v1042 = vpop.permute.xlu0 %1041
      %1043 = vrot.lane.b32.xlu0 %v990, 32
      %v1044 = vpop.permute.xlu0 %1043
      %1045 = vrot.lane.b32.xlu0 %v989, 32
      %v1046 = vpop.permute.xlu0 %1045
      %vm1075 = vcmask 31744
      %v1076 = vsel %vm1075, %v241, %v345
      %v1077 = vsel %vm1075, %v242, %v347
      %v1078 = vsel %vm1075, %v243, %v349
      %v1079 = vsel %vm1075, %v244, %v351
      %v1080 = vsel %vm1075, %v245, %v353
      %v1081 = vsel %vm1075, %v246, %v355
      %v1082 = vsel %vm1075, %v247, %v357
      %v1083 = vsel %vm1075, %v248, %v359
      %v1084 = vsel %vm1075, %v249, %v361
      %v1085 = vsel %vm1075, %v250, %v363
      %v1086 = vsel %vm1075, %v251, %v365
      %v1087 = vsel %vm1075, %v252, %v367
      %v1088 = vsel %vm1075, %v253, %v369
      %v1089 = vsel %vm1075, %v254, %v371
      %v1090 = vsel %vm1075, %v255, %v373
      %v1091 = vsel %vm1075, %v256, %v375
      %v1092 = vsel %vm1075, %v257, %v377
      %v1093 = vsel %vm1075, %v258, %v379
      %v1094 = vsel %vm1075, %v259, %v381
      %v1095 = vsel %vm1075, %v260, %v383
      %v1096 = vsel %vm1075, %v261, %v385
      %v1097 = vsel %vm1075, %v262, %v387
      %v1098 = vsel %vm1075, %v263, %v389
      %v1099 = vsel %vm1075, %v264, %v391
      %v1100 = vsel %vm1075, %v265, %v393
      %v1101 = vsel %vm1075, %v266, %v395
      %v1102 = vsel %vm1075, %v267, %v397
      %v1103 = vsel %vm1075, %v268, %v399
      %vm1104 = vcmask 64512
      %v1105 = vsel %vm1104, %v1076, %v472
      %v1106 = vsel %vm1104, %v1077, %v474
      %v1107 = vsel %vm1104, %v1078, %v476
      %v1108 = vsel %vm1104, %v1079, %v478
      %v1109 = vsel %vm1104, %v1080, %v480
      %v1110 = vsel %vm1104, %v1081, %v482
      %v1111 = vsel %vm1104, %v1082, %v484
      %v1112 = vsel %vm1104, %v1083, %v486
      %v1113 = vsel %vm1104, %v1084, %v488
      %v1114 = vsel %vm1104, %v1085, %v490
      %v1115 = vsel %vm1104, %v1086, %v492
      %v1116 = vsel %vm1104, %v1087, %v494
      %v1117 = vsel %vm1104, %v1088, %v496
      %v1118 = vsel %vm1104, %v1089, %v498
      %v1119 = vsel %vm1104, %v1090, %v500
      %v1120 = vsel %vm1104, %v1091, %v502
      %v1121 = vsel %vm1104, %v1092, %v504
      %v1122 = vsel %vm1104, %v1093, %v506
      %v1123 = vsel %vm1104, %v1094, %v508
      %v1124 = vsel %vm1104, %v1095, %v510
      %v1125 = vsel %vm1104, %v1096, %v512
      %v1126 = vsel %vm1104, %v1097, %v514
      %v1127 = vsel %vm1104, %v1098, %v516
      %v1128 = vsel %vm1104, %v1099, %v518
      %v1129 = vsel %vm1104, %v1100, %v520
      %v1130 = vsel %vm1104, %v1101, %v522
      %v1131 = vsel %vm1104, %v1102, %v524
      %v1132 = vsel %vm1104, %v1103, %v526
      %vm1133 = vcmask 97280
      %v1134 = vsel %vm1133, %v1105, %v558
      %v1135 = vsel %vm1133, %v1106, %v560
      %v1136 = vsel %vm1133, %v1107, %v562
      %v1137 = vsel %vm1133, %v1108, %v564
      %v1138 = vsel %vm1133, %v1109, %v566
      %v1139 = vsel %vm1133, %v1110, %v568
      %v1140 = vsel %vm1133, %v1111, %v570
      %v1141 = vsel %vm1133, %v1112, %v572
      %v1142 = vsel %vm1133, %v1113, %v574
      %v1143 = vsel %vm1133, %v1114, %v576
      %v1144 = vsel %vm1133, %v1115, %v578
      %v1145 = vsel %vm1133, %v1116, %v580
      %v1146 = vsel %vm1133, %v1117, %v582
      %v1147 = vsel %vm1133, %v1118, %v584
      %v1148 = vsel %vm1133, %v1119, %v586
      %v1149 = vsel %vm1133, %v1120, %v588
      %v1150 = vsel %vm1133, %v1121, %v590
      %v1151 = vsel %vm1133, %v1122, %v592
      %v1152 = vsel %vm1133, %v1123, %v594
      %v1153 = vsel %vm1133, %v1124, %v596
      %v1154 = vsel %vm1133, %v1125, %v598
      %v1155 = vsel %vm1133, %v1126, %v600
      %v1156 = vsel %vm1133, %v1127, %v602
      %v1157 = vsel %vm1133, %v1128, %v604
      %v1158 = vsel %vm1133, %v1129, %v606
      %v1159 = vsel %vm1133, %v1130, %v608
      %v1160 = vsel %vm1133, %v1131, %v610
      %v1161 = vsel %vm1133, %v1132, %v612
      %vm1162 = vcmask 130048
      %v1163 = vsel %vm1162, %v1134, %v645
      %v1164 = vsel %vm1162, %v1135, %v647
      %v1165 = vsel %vm1162, %v1136, %v649
      %v1166 = vsel %vm1162, %v1137, %v651
      %v1167 = vsel %vm1162, %v1138, %v653
      %v1168 = vsel %vm1162, %v1139, %v655
      %v1169 = vsel %vm1162, %v1140, %v657
      %v1170 = vsel %vm1162, %v1141, %v659
      %v1171 = vsel %vm1162, %v1142, %v661
      %v1172 = vsel %vm1162, %v1143, %v663
      %v1173 = vsel %vm1162, %v1144, %v665
      %v1174 = vsel %vm1162, %v1145, %v667
      %v1175 = vsel %vm1162, %v1146, %v669
      %v1176 = vsel %vm1162, %v1147, %v671
      %v1177 = vsel %vm1162, %v1148, %v673
      %v1178 = vsel %vm1162, %v1149, %v675
      %v1179 = vsel %vm1162, %v1150, %v677
      %v1180 = vsel %vm1162, %v1151, %v679
      %v1181 = vsel %vm1162, %v1152, %v681
      %v1182 = vsel %vm1162, %v1153, %v683
      %v1183 = vsel %vm1162, %v1154, %v685
      %v1184 = vsel %vm1162, %v1155, %v687
      %v1185 = vsel %vm1162, %v1156, %v689
      %v1186 = vsel %vm1162, %v1157, %v691
      %v1187 = vsel %vm1162, %v1158, %v693
      %v1188 = vsel %vm1162, %v1159, %v695
      %v1189 = vsel %vm1162, %v1160, %v697
      %v1190 = vsel %vm1162, %v1161, %v699
      %vm1191 = vcmask 162816
      %v1192 = vsel %vm1191, %v1163, %v732
      %v1193 = vsel %vm1191, %v1164, %v734
      %v1194 = vsel %vm1191, %v1165, %v736
      %v1195 = vsel %vm1191, %v1166, %v738
      %v1196 = vsel %vm1191, %v1167, %v740
      %v1197 = vsel %vm1191, %v1168, %v742
      %v1198 = vsel %vm1191, %v1169, %v744
      %v1199 = vsel %vm1191, %v1170, %v746
      %v1200 = vsel %vm1191, %v1171, %v748
      %v1201 = vsel %vm1191, %v1172, %v750
      %v1202 = vsel %vm1191, %v1173, %v752
      %v1203 = vsel %vm1191, %v1174, %v754
      %v1204 = vsel %vm1191, %v1175, %v756
      %v1205 = vsel %vm1191, %v1176, %v758
      %v1206 = vsel %vm1191, %v1177, %v760
      %v1207 = vsel %vm1191, %v1178, %v762
      %v1208 = vsel %vm1191, %v1179, %v764
      %v1209 = vsel %vm1191, %v1180, %v766
      %v1210 = vsel %vm1191, %v1181, %v768
      %v1211 = vsel %vm1191, %v1182, %v770
      %v1212 = vsel %vm1191, %v1183, %v772
      %v1213 = vsel %vm1191, %v1184, %v774
      %v1214 = vsel %vm1191, %v1185, %v776
      %v1215 = vsel %vm1191, %v1186, %v778
      %v1216 = vsel %vm1191, %v1187, %v780
      %v1217 = vsel %vm1191, %v1188, %v782
      %v1218 = vsel %vm1191, %v1189, %v784
      %v1219 = vsel %vm1191, %v1190, %v786
      %vm1220 = vcmask 195584
      %v1221 = vsel %vm1220, %v1192, %v818
      %v1222 = vsel %vm1220, %v1193, %v820
      %v1223 = vsel %vm1220, %v1194, %v822
      %v1224 = vsel %vm1220, %v1195, %v824
      %v1225 = vsel %vm1220, %v1196, %v826
      %v1226 = vsel %vm1220, %v1197, %v828
      %v1227 = vsel %vm1220, %v1198, %v830
      %v1228 = vsel %vm1220, %v1199, %v832
      %v1229 = vsel %vm1220, %v1200, %v834
      %v1230 = vsel %vm1220, %v1201, %v836
      %v1231 = vsel %vm1220, %v1202, %v838
      %v1232 = vsel %vm1220, %v1203, %v840
      %v1233 = vsel %vm1220, %v1204, %v842
      %v1234 = vsel %vm1220, %v1205, %v844
      %v1235 = vsel %vm1220, %v1206, %v846
      %v1236 = vsel %vm1220, %v1207, %v848
      %v1237 = vsel %vm1220, %v1208, %v850
      %v1238 = vsel %vm1220, %v1209, %v852
      %v1239 = vsel %vm1220, %v1210, %v854
      %v1240 = vsel %vm1220, %v1211, %v856
      %v1241 = vsel %vm1220, %v1212, %v858
      %v1242 = vsel %vm1220, %v1213, %v860
      %v1243 = vsel %vm1220, %v1214, %v862
      %v1244 = vsel %vm1220, %v1215, %v864
      %v1245 = vsel %vm1220, %v1216, %v866
      %v1246 = vsel %vm1220, %v1217, %v868
      %v1247 = vsel %vm1220, %v1218, %v870
      %v1248 = vsel %vm1220, %v1219, %v872
      %vm1249 = vcmask 228352
      %v1250 = vsel %vm1249, %v1221, %v905
      %v1251 = vsel %vm1249, %v1222, %v907
      %v1252 = vsel %vm1249, %v1223, %v909
      %v1253 = vsel %vm1249, %v1224, %v911
      %v1254 = vsel %vm1249, %v1225, %v913
      %v1255 = vsel %vm1249, %v1226, %v915
      %v1256 = vsel %vm1249, %v1227, %v917
      %v1257 = vsel %vm1249, %v1228, %v919
      %v1258 = vsel %vm1249, %v1229, %v921
      %v1259 = vsel %vm1249, %v1230, %v923
      %v1260 = vsel %vm1249, %v1231, %v925
      %v1261 = vsel %vm1249, %v1232, %v927
      %v1262 = vsel %vm1249, %v1233, %v929
      %v1263 = vsel %vm1249, %v1234, %v931
      %v1264 = vsel %vm1249, %v1235, %v933
      %v1265 = vsel %vm1249, %v1236, %v935
      %v1266 = vsel %vm1249, %v1237, %v937
      %v1267 = vsel %vm1249, %v1238, %v939
      %v1268 = vsel %vm1249, %v1239, %v941
      %v1269 = vsel %vm1249, %v1240, %v943
      %v1270 = vsel %vm1249, %v1241, %v945
      %v1271 = vsel %vm1249, %v1242, %v947
      %v1272 = vsel %vm1249, %v1243, %v949
      %v1273 = vsel %vm1249, %v1244, %v951
      %v1274 = vsel %vm1249, %v1245, %v953
      %v1275 = vsel %vm1249, %v1246, %v955
      %v1276 = vsel %vm1249, %v1247, %v957
      %v1277 = vsel %vm1249, %v1248, %v959
      %vm1278 = vcmask 261120
      %v1279 = vsel %vm1278, %v1250, %v992
      %v1280 = vsel %vm1278, %v1251, %v994
      %v1281 = vsel %vm1278, %v1252, %v996
      %v1282 = vsel %vm1278, %v1253, %v998
      %v1283 = vsel %vm1278, %v1254, %v1000
      %v1284 = vsel %vm1278, %v1255, %v1002
      %v1285 = vsel %vm1278, %v1256, %v1004
      %v1286 = vsel %vm1278, %v1257, %v1006
      %v1287 = vsel %vm1278, %v1258, %v1008
      %v1288 = vsel %vm1278, %v1259, %v1010
      %v1289 = vsel %vm1278, %v1260, %v1012
      %v1290 = vsel %vm1278, %v1261, %v1014
      %v1291 = vsel %vm1278, %v1262, %v1016
      %v1292 = vsel %vm1278, %v1263, %v1018
      %v1293 = vsel %vm1278, %v1264, %v1020
      %v1294 = vsel %vm1278, %v1265, %v1022
      %v1295 = vsel %vm1278, %v1266, %v1024
      %v1296 = vsel %vm1278, %v1267, %v1026
      %v1297 = vsel %vm1278, %v1268, %v1028
      %v1298 = vsel %vm1278, %v1269, %v1030
      %v1299 = vsel %vm1278, %v1270, %v1032
      %v1300 = vsel %vm1278, %v1271, %v1034
      %v1301 = vsel %vm1278, %v1272, %v1036
      %v1302 = vsel %vm1278, %v1273, %v1038
      %v1303 = vsel %vm1278, %v1274, %v1040
      %v1304 = vsel %vm1278, %v1275, %v1042
      %v1305 = vsel %vm1278, %v1276, %v1044
      %v1306 = vsel %vm1278, %v1277, %v1046
      %v1308 = vlaneseq
      %v1309 = vshrl.u32 %v1308, 7
      %v1310 = vsub.s32 0, %v1309
      %v1311 = vrot.slane %v239, %v1310
      %v1340 = vcombine.high %v1279, %v1279
      %v1342 = vunpack.c.l.s4 1983009808
      %v1343 = vunpack.c.0.s8 %v1342
      %v1344 = vlaneseq
      %v1345 = vshrl.u32 %v1344, 7
      %v1346 = vsub.s32 %v1343, %v1345
      %v1347 = vrot.slane %v1279, %v1346
      %v1349 = vunpack.c.l.s4 1983009808
      %v1350 = vunpack.c.0.s8 %v1349
      %v1351 = vlaneseq
      %v1352 = vshrl.u32 %v1351, 7
      %v1353 = vsub.s32 %v1350, %v1352
      %v1354 = vrot.slane %v1340, %v1353
      %v1355 = vcombine.high %v1347, %v1347
      %v1356 = vcombine.high %v1354, %v1354
      %v1357 = vcombine.high %v1280, %v1280
      %v1359 = vunpack.c.l.s4 1983009808
      %v1360 = vunpack.c.0.s8 %v1359
      %v1361 = vlaneseq
      %v1362 = vshrl.u32 %v1361, 7
      %v1363 = vsub.s32 %v1360, %v1362
      %v1364 = vrot.slane %v1280, %v1363
      %v1366 = vunpack.c.l.s4 1983009808
      %v1367 = vunpack.c.0.s8 %v1366
      %v1368 = vlaneseq
      %v1369 = vshrl.u32 %v1368, 7
      %v1370 = vsub.s32 %v1367, %v1369
      %v1371 = vrot.slane %v1357, %v1370
      %v1372 = vcombine.high %v1364, %v1364
      %v1373 = vcombine.high %v1281, %v1281
      %v1375 = vunpack.c.l.s4 1983009808
      %v1376 = vunpack.c.0.s8 %v1375
      %v1377 = vlaneseq
      %v1378 = vshrl.u32 %v1377, 7
      %v1379 = vsub.s32 %v1376, %v1378
      %v1380 = vrot.slane %v1281, %v1379
      %v1382 = vunpack.c.l.s4 1983009808
      %v1383 = vunpack.c.0.s8 %v1382
      %v1384 = vlaneseq
      %v1385 = vshrl.u32 %v1384, 7
      %v1386 = vsub.s32 %v1383, %v1385
      %v1387 = vrot.slane %v1373, %v1386
      %v1388 = vcombine.high %v1380, %v1380
      %v1389 = vcombine.high %v1387, %v1387
      %v1390 = vcombine.high %v1282, %v1282
      %v1392 = vunpack.c.l.s4 1983009808
      %v1393 = vunpack.c.0.s8 %v1392
      %v1394 = vlaneseq
      %v1395 = vshrl.u32 %v1394, 7
      %v1396 = vsub.s32 %v1393, %v1395
      %v1397 = vrot.slane %v1282, %v1396
      %v1399 = vunpack.c.l.s4 1983009808
      %v1400 = vunpack.c.0.s8 %v1399
      %v1401 = vlaneseq
      %v1402 = vshrl.u32 %v1401, 7
      %v1403 = vsub.s32 %v1400, %v1402
      %v1404 = vrot.slane %v1390, %v1403
      %v1405 = vcombine.high %v1397, %v1397
      %v1406 = vcombine.high %v1283, %v1283
      %v1408 = vunpack.c.l.s4 1983009808
      %v1409 = vunpack.c.0.s8 %v1408
      %v1410 = vlaneseq
      %v1411 = vshrl.u32 %v1410, 7
      %v1412 = vsub.s32 %v1409, %v1411
      %v1413 = vrot.slane %v1283, %v1412
      %v1415 = vunpack.c.l.s4 1983009808
      %v1416 = vunpack.c.0.s8 %v1415
      %v1417 = vlaneseq
      %v1418 = vshrl.u32 %v1417, 7
      %v1419 = vsub.s32 %v1416, %v1418
      %v1420 = vrot.slane %v1406, %v1419
      %v1421 = vcombine.high %v1413, %v1413
      %v1422 = vcombine.high %v1420, %v1420
      %v1423 = vcombine.high %v1284, %v1284
      %v1425 = vunpack.c.l.s4 1983009808
      %v1426 = vunpack.c.0.s8 %v1425
      %v1427 = vlaneseq
      %v1428 = vshrl.u32 %v1427, 7
      %v1429 = vsub.s32 %v1426, %v1428
      %v1430 = vrot.slane %v1284, %v1429
      %v1432 = vunpack.c.l.s4 1983009808
      %v1433 = vunpack.c.0.s8 %v1432
      %v1434 = vlaneseq
      %v1435 = vshrl.u32 %v1434, 7
      %v1436 = vsub.s32 %v1433, %v1435
      %v1437 = vrot.slane %v1423, %v1436
      %v1438 = vcombine.high %v1430, %v1430
      %v1439 = vcombine.high %v1285, %v1285
      %v1441 = vunpack.c.l.s4 1983009808
      %v1442 = vunpack.c.0.s8 %v1441
      %v1443 = vlaneseq
      %v1444 = vshrl.u32 %v1443, 7
      %v1445 = vsub.s32 %v1442, %v1444
      %v1446 = vrot.slane %v1285, %v1445
      %v1448 = vunpack.c.l.s4 1983009808
      %v1449 = vunpack.c.0.s8 %v1448
      %v1450 = vlaneseq
      %v1451 = vshrl.u32 %v1450, 7
      %v1452 = vsub.s32 %v1449, %v1451
      %v1453 = vrot.slane %v1439, %v1452
      %v1454 = vcombine.high %v1446, %v1446
      %v1455 = vcombine.high %v1453, %v1453
      %v1456 = vcombine.high %v1286, %v1286
      %v1458 = vunpack.c.l.s4 1983009808
      %v1459 = vunpack.c.0.s8 %v1458
      %v1460 = vlaneseq
      %v1461 = vshrl.u32 %v1460, 7
      %v1462 = vsub.s32 %v1459, %v1461
      %v1463 = vrot.slane %v1286, %v1462
      %v1465 = vunpack.c.l.s4 1983009808
      %v1466 = vunpack.c.0.s8 %v1465
      %v1467 = vlaneseq
      %v1468 = vshrl.u32 %v1467, 7
      %v1469 = vsub.s32 %v1466, %v1468
      %v1470 = vrot.slane %v1456, %v1469
      %v1471 = vcombine.high %v1463, %v1463
      %v1472 = vcombine.high %v1287, %v1287
      %v1474 = vunpack.c.l.s4 1983009808
      %v1475 = vunpack.c.0.s8 %v1474
      %v1476 = vlaneseq
      %v1477 = vshrl.u32 %v1476, 7
      %v1478 = vsub.s32 %v1475, %v1477
      %v1479 = vrot.slane %v1287, %v1478
      %v1481 = vunpack.c.l.s4 1983009808
      %v1482 = vunpack.c.0.s8 %v1481
      %v1483 = vlaneseq
      %v1484 = vshrl.u32 %v1483, 7
      %v1485 = vsub.s32 %v1482, %v1484
      %v1486 = vrot.slane %v1472, %v1485
      %v1487 = vcombine.high %v1479, %v1479
      %v1488 = vcombine.high %v1486, %v1486
      %v1489 = vcombine.high %v1288, %v1288
      %v1491 = vunpack.c.l.s4 1983009808
      %v1492 = vunpack.c.0.s8 %v1491
      %v1493 = vlaneseq
      %v1494 = vshrl.u32 %v1493, 7
      %v1495 = vsub.s32 %v1492, %v1494
      %v1496 = vrot.slane %v1288, %v1495
      %v1498 = vunpack.c.l.s4 1983009808
      %v1499 = vunpack.c.0.s8 %v1498
      %v1500 = vlaneseq
      %v1501 = vshrl.u32 %v1500, 7
      %v1502 = vsub.s32 %v1499, %v1501
      %v1503 = vrot.slane %v1489, %v1502
      %v1504 = vcombine.high %v1496, %v1496
      %v1505 = vcombine.high %v1289, %v1289
      %v1507 = vunpack.c.l.s4 1983009808
      %v1508 = vunpack.c.0.s8 %v1507
      %v1509 = vlaneseq
      %v1510 = vshrl.u32 %v1509, 7
      %v1511 = vsub.s32 %v1508, %v1510
      %v1512 = vrot.slane %v1289, %v1511
      %v1514 = vunpack.c.l.s4 1983009808
      %v1515 = vunpack.c.0.s8 %v1514
      %v1516 = vlaneseq
      %v1517 = vshrl.u32 %v1516, 7
      %v1518 = vsub.s32 %v1515, %v1517
      %v1519 = vrot.slane %v1505, %v1518
      %v1520 = vcombine.high %v1512, %v1512
      %v1521 = vcombine.high %v1519, %v1519
      %v1522 = vcombine.high %v1290, %v1290
      %v1524 = vunpack.c.l.s4 1983009808
      %v1525 = vunpack.c.0.s8 %v1524
      %v1526 = vlaneseq
      %v1527 = vshrl.u32 %v1526, 7
      %v1528 = vsub.s32 %v1525, %v1527
      %v1529 = vrot.slane %v1290, %v1528
      %v1531 = vunpack.c.l.s4 1983009808
      %v1532 = vunpack.c.0.s8 %v1531
      %v1533 = vlaneseq
      %v1534 = vshrl.u32 %v1533, 7
      %v1535 = vsub.s32 %v1532, %v1534
      %v1536 = vrot.slane %v1522, %v1535
      %v1537 = vcombine.high %v1529, %v1529
      %v1538 = vcombine.high %v1291, %v1291
      %v1540 = vunpack.c.l.s4 1983009808
      %v1541 = vunpack.c.0.s8 %v1540
      %v1542 = vlaneseq
      %v1543 = vshrl.u32 %v1542, 7
      %v1544 = vsub.s32 %v1541, %v1543
      %v1545 = vrot.slane %v1291, %v1544
      %v1547 = vunpack.c.l.s4 1983009808
      %v1548 = vunpack.c.0.s8 %v1547
      %v1549 = vlaneseq
      %v1550 = vshrl.u32 %v1549, 7
      %v1551 = vsub.s32 %v1548, %v1550
      %v1552 = vrot.slane %v1538, %v1551
      %v1553 = vcombine.high %v1545, %v1545
      %v1554 = vcombine.high %v1552, %v1552
      %v1555 = vcombine.high %v1292, %v1292
      %v1557 = vunpack.c.l.s4 1983009808
      %v1558 = vunpack.c.0.s8 %v1557
      %v1559 = vlaneseq
      %v1560 = vshrl.u32 %v1559, 7
      %v1561 = vsub.s32 %v1558, %v1560
      %v1562 = vrot.slane %v1292, %v1561
      %v1564 = vunpack.c.l.s4 1983009808
      %v1565 = vunpack.c.0.s8 %v1564
      %v1566 = vlaneseq
      %v1567 = vshrl.u32 %v1566, 7
      %v1568 = vsub.s32 %v1565, %v1567
      %v1569 = vrot.slane %v1555, %v1568
      %v1570 = vcombine.high %v1562, %v1562
      %v1571 = vcombine.high %v1293, %v1293
      %v1573 = vunpack.c.l.s4 1983009808
      %v1574 = vunpack.c.0.s8 %v1573
      %v1575 = vlaneseq
      %v1576 = vshrl.u32 %v1575, 7
      %v1577 = vsub.s32 %v1574, %v1576
      %v1578 = vrot.slane %v1293, %v1577
      %v1580 = vunpack.c.l.s4 1983009808
      %v1581 = vunpack.c.0.s8 %v1580
      %v1582 = vlaneseq
      %v1583 = vshrl.u32 %v1582, 7
      %v1584 = vsub.s32 %v1581, %v1583
      %v1585 = vrot.slane %v1571, %v1584
      %v1586 = vcombine.high %v1578, %v1578
      %v1587 = vcombine.high %v1585, %v1585
      %v1588 = vcombine.high %v1294, %v1294
      %v1590 = vunpack.c.l.s4 1983009808
      %v1591 = vunpack.c.0.s8 %v1590
      %v1592 = vlaneseq
      %v1593 = vshrl.u32 %v1592, 7
      %v1594 = vsub.s32 %v1591, %v1593
      %v1595 = vrot.slane %v1294, %v1594
      %v1597 = vunpack.c.l.s4 1983009808
      %v1598 = vunpack.c.0.s8 %v1597
      %v1599 = vlaneseq
      %v1600 = vshrl.u32 %v1599, 7
      %v1601 = vsub.s32 %v1598, %v1600
      %v1602 = vrot.slane %v1588, %v1601
      %v1603 = vcombine.high %v1595, %v1595
      %v1604 = vcombine.high %v1295, %v1295
      %v1606 = vunpack.c.l.s4 1983009808
      %v1607 = vunpack.c.0.s8 %v1606
      %v1608 = vlaneseq
      %v1609 = vshrl.u32 %v1608, 7
      %v1610 = vsub.s32 %v1607, %v1609
      %v1611 = vrot.slane %v1295, %v1610
      %v1613 = vunpack.c.l.s4 1983009808
      %v1614 = vunpack.c.0.s8 %v1613
      %v1615 = vlaneseq
      %v1616 = vshrl.u32 %v1615, 7
      %v1617 = vsub.s32 %v1614, %v1616
      %v1618 = vrot.slane %v1604, %v1617
      %v1619 = vcombine.high %v1611, %v1611
      %v1620 = vcombine.high %v1618, %v1618
      %v1621 = vcombine.high %v1296, %v1296
      %v1623 = vunpack.c.l.s4 1983009808
      %v1624 = vunpack.c.0.s8 %v1623
      %v1625 = vlaneseq
      %v1626 = vshrl.u32 %v1625, 7
      %v1627 = vsub.s32 %v1624, %v1626
      %v1628 = vrot.slane %v1296, %v1627
      %v1630 = vunpack.c.l.s4 1983009808
      %v1631 = vunpack.c.0.s8 %v1630
      %v1632 = vlaneseq
      %v1633 = vshrl.u32 %v1632, 7
      %v1634 = vsub.s32 %v1631, %v1633
      %v1635 = vrot.slane %v1621, %v1634
      %v1636 = vcombine.high %v1628, %v1628
      %v1637 = vcombine.high %v1297, %v1297
      %v1639 = vunpack.c.l.s4 1983009808
      %v1640 = vunpack.c.0.s8 %v1639
      %v1641 = vlaneseq
      %v1642 = vshrl.u32 %v1641, 7
      %v1643 = vsub.s32 %v1640, %v1642
      %v1644 = vrot.slane %v1297, %v1643
      %v1646 = vunpack.c.l.s4 1983009808
      %v1647 = vunpack.c.0.s8 %v1646
      %v1648 = vlaneseq
      %v1649 = vshrl.u32 %v1648, 7
      %v1650 = vsub.s32 %v1647, %v1649
      %v1651 = vrot.slane %v1637, %v1650
      %v1652 = vcombine.high %v1644, %v1644
      %v1653 = vcombine.high %v1651, %v1651
      %v1654 = vcombine.high %v1298, %v1298
      %v1656 = vunpack.c.l.s4 1983009808
      %v1657 = vunpack.c.0.s8 %v1656
      %v1658 = vlaneseq
      %v1659 = vshrl.u32 %v1658, 7
      %v1660 = vsub.s32 %v1657, %v1659
      %v1661 = vrot.slane %v1298, %v1660
      %v1663 = vunpack.c.l.s4 1983009808
      %v1664 = vunpack.c.0.s8 %v1663
      %v1665 = vlaneseq
      %v1666 = vshrl.u32 %v1665, 7
      %v1667 = vsub.s32 %v1664, %v1666
      %v1668 = vrot.slane %v1654, %v1667
      %v1669 = vcombine.high %v1661, %v1661
      %v1670 = vcombine.high %v1299, %v1299
      %v1672 = vunpack.c.l.s4 1983009808
      %v1673 = vunpack.c.0.s8 %v1672
      %v1674 = vlaneseq
      %v1675 = vshrl.u32 %v1674, 7
      %v1676 = vsub.s32 %v1673, %v1675
      %v1677 = vrot.slane %v1299, %v1676
      %v1679 = vunpack.c.l.s4 1983009808
      %v1680 = vunpack.c.0.s8 %v1679
      %v1681 = vlaneseq
      %v1682 = vshrl.u32 %v1681, 7
      %v1683 = vsub.s32 %v1680, %v1682
      %v1684 = vrot.slane %v1670, %v1683
      %v1685 = vcombine.high %v1677, %v1677
      %v1686 = vcombine.high %v1684, %v1684
      %v1687 = vcombine.high %v1300, %v1300
      %v1689 = vunpack.c.l.s4 1983009808
      %v1690 = vunpack.c.0.s8 %v1689
      %v1691 = vlaneseq
      %v1692 = vshrl.u32 %v1691, 7
      %v1693 = vsub.s32 %v1690, %v1692
      %v1694 = vrot.slane %v1300, %v1693
      %v1696 = vunpack.c.l.s4 1983009808
      %v1697 = vunpack.c.0.s8 %v1696
      %v1698 = vlaneseq
      %v1699 = vshrl.u32 %v1698, 7
      %v1700 = vsub.s32 %v1697, %v1699
      %v1701 = vrot.slane %v1687, %v1700
      %v1702 = vcombine.high %v1694, %v1694
      %v1703 = vcombine.high %v1301, %v1301
      %v1705 = vunpack.c.l.s4 1983009808
      %v1706 = vunpack.c.0.s8 %v1705
      %v1707 = vlaneseq
      %v1708 = vshrl.u32 %v1707, 7
      %v1709 = vsub.s32 %v1706, %v1708
      %v1710 = vrot.slane %v1301, %v1709
      %v1712 = vunpack.c.l.s4 1983009808
      %v1713 = vunpack.c.0.s8 %v1712
      %v1714 = vlaneseq
      %v1715 = vshrl.u32 %v1714, 7
      %v1716 = vsub.s32 %v1713, %v1715
      %v1717 = vrot.slane %v1703, %v1716
      %v1718 = vcombine.high %v1710, %v1710
      %v1719 = vcombine.high %v1717, %v1717
      %v1720 = vcombine.high %v1302, %v1302
      %v1722 = vunpack.c.l.s4 1983009808
      %v1723 = vunpack.c.0.s8 %v1722
      %v1724 = vlaneseq
      %v1725 = vshrl.u32 %v1724, 7
      %v1726 = vsub.s32 %v1723, %v1725
      %v1727 = vrot.slane %v1302, %v1726
      %v1729 = vunpack.c.l.s4 1983009808
      %v1730 = vunpack.c.0.s8 %v1729
      %v1731 = vlaneseq
      %v1732 = vshrl.u32 %v1731, 7
      %v1733 = vsub.s32 %v1730, %v1732
      %v1734 = vrot.slane %v1720, %v1733
      %v1735 = vcombine.high %v1727, %v1727
      %v1736 = vcombine.high %v1303, %v1303
      %v1738 = vunpack.c.l.s4 1983009808
      %v1739 = vunpack.c.0.s8 %v1738
      %v1740 = vlaneseq
      %v1741 = vshrl.u32 %v1740, 7
      %v1742 = vsub.s32 %v1739, %v1741
      %v1743 = vrot.slane %v1303, %v1742
      %v1745 = vunpack.c.l.s4 1983009808
      %v1746 = vunpack.c.0.s8 %v1745
      %v1747 = vlaneseq
      %v1748 = vshrl.u32 %v1747, 7
      %v1749 = vsub.s32 %v1746, %v1748
      %v1750 = vrot.slane %v1736, %v1749
      %v1751 = vcombine.high %v1743, %v1743
      %v1752 = vcombine.high %v1750, %v1750
      %v1753 = vcombine.high %v1304, %v1304
      %v1755 = vunpack.c.l.s4 1983009808
      %v1756 = vunpack.c.0.s8 %v1755
      %v1757 = vlaneseq
      %v1758 = vshrl.u32 %v1757, 7
      %v1759 = vsub.s32 %v1756, %v1758
      %v1760 = vrot.slane %v1304, %v1759
      %v1762 = vunpack.c.l.s4 1983009808
      %v1763 = vunpack.c.0.s8 %v1762
      %v1764 = vlaneseq
      %v1765 = vshrl.u32 %v1764, 7
      %v1766 = vsub.s32 %v1763, %v1765
      %v1767 = vrot.slane %v1753, %v1766
      %v1768 = vcombine.high %v1760, %v1760
      %v1769 = vcombine.high %v1305, %v1305
      %v1771 = vunpack.c.l.s4 1983009808
      %v1772 = vunpack.c.0.s8 %v1771
      %v1773 = vlaneseq
      %v1774 = vshrl.u32 %v1773, 7
      %v1775 = vsub.s32 %v1772, %v1774
      %v1776 = vrot.slane %v1305, %v1775
      %v1778 = vunpack.c.l.s4 1983009808
      %v1779 = vunpack.c.0.s8 %v1778
      %v1780 = vlaneseq
      %v1781 = vshrl.u32 %v1780, 7
      %v1782 = vsub.s32 %v1779, %v1781
      %v1783 = vrot.slane %v1769, %v1782
      %v1784 = vcombine.high %v1776, %v1776
      %v1785 = vcombine.high %v1783, %v1783
      %v1786 = vcombine.high %v1306, %v1306
      %v1788 = vunpack.c.l.s4 1983009808
      %v1789 = vunpack.c.0.s8 %v1788
      %v1790 = vlaneseq
      %v1791 = vshrl.u32 %v1790, 7
      %v1792 = vsub.s32 %v1789, %v1791
      %v1793 = vrot.slane %v1306, %v1792
      %v1795 = vunpack.c.l.s4 1983009808
      %v1796 = vunpack.c.0.s8 %v1795
      %v1797 = vlaneseq
      %v1798 = vshrl.u32 %v1797, 7
      %v1799 = vsub.s32 %v1796, %v1798
      %v1800 = vrot.slane %v1786, %v1799
      %v1801 = vcombine.high %v1793, %v1793
      %v1802 = vcombine.high %v1311, %v1311
      %v1804 = vunpack.c.l.s4 1983009808
      %v1805 = vunpack.c.0.s8 %v1804
      %v1806 = vlaneseq
      %v1807 = vshrl.u32 %v1806, 7
      %v1808 = vsub.s32 %v1805, %v1807
      %v1809 = vrot.slane %v1311, %v1808
      %v1811 = vunpack.c.l.s4 1983009808
      %v1812 = vunpack.c.0.s8 %v1811
      %v1813 = vlaneseq
      %v1814 = vshrl.u32 %v1813, 7
      %v1815 = vsub.s32 %v1812, %v1814
      %v1816 = vrot.slane %v1802, %v1815
      %v1817 = vcombine.high %v1809, %v1809
      %v1818 = vcombine.high %v1816, %v1816
      %v1819 = vcombine.low %v1347, %v1355
      %v1820 = vcombine.low %v1354, %v1356
      %v1822 = vunpack.c.l.s4 1983009808
      %v1823 = vunpack.c.0.s8 %v1822
      %v1824 = vlaneseq
      %v1825 = vshrl.u32 %v1824, 7
      %v1826 = vsub.s32 %v1823, %v1825
      %v1827 = vrot.slane %v1819, %v1826
      %v1829 = vunpack.c.l.s4 1983009808
      %v1830 = vunpack.c.0.s8 %v1829
      %v1831 = vlaneseq
      %v1832 = vshrl.u32 %v1831, 7
      %v1833 = vsub.s32 %v1830, %v1832
      %v1834 = vrot.slane %v1820, %v1833
      %v1835 = vcombine.low %v1827, %v1834
      %v1836 = vcombine.low %v1364, %v1372
      %v1837 = vcombine.low %v1371, %v1380
      %v1839 = vunpack.c.l.s4 1983009808
      %v1840 = vunpack.c.0.s8 %v1839
      %v1841 = vlaneseq
      %v1842 = vshrl.u32 %v1841, 7
      %v1843 = vsub.s32 %v1840, %v1842
      %v1844 = vrot.slane %v1836, %v1843
      %v1846 = vunpack.c.l.s4 1983009808
      %v1847 = vunpack.c.0.s8 %v1846
      %v1848 = vlaneseq
      %v1849 = vshrl.u32 %v1848, 7
      %v1850 = vsub.s32 %v1847, %v1849
      %v1851 = vrot.slane %v1837, %v1850
      %v1852 = vcombine.low %v1844, %v1851
      %v1853 = vcombine.low %v1388, %v1387
      %v1854 = vcombine.low %v1389, %v1397
      %v1856 = vunpack.c.l.s4 1983009808
      %v1857 = vunpack.c.0.s8 %v1856
      %v1858 = vlaneseq
      %v1859 = vshrl.u32 %v1858, 7
      %v1860 = vsub.s32 %v1857, %v1859
      %v1861 = vrot.slane %v1853, %v1860
      %v1863 = vunpack.c.l.s4 1983009808
      %v1864 = vunpack.c.0.s8 %v1863
      %v1865 = vlaneseq
      %v1866 = vshrl.u32 %v1865, 7
      %v1867 = vsub.s32 %v1864, %v1866
      %v1868 = vrot.slane %v1854, %v1867
      %v1869 = vcombine.low %v1861, %v1868
      %v1870 = vcombine.low %v1405, %v1404
      %v1871 = vcombine.low %v1413, %v1421
      %v1873 = vunpack.c.l.s4 1983009808
      %v1874 = vunpack.c.0.s8 %v1873
      %v1875 = vlaneseq
      %v1876 = vshrl.u32 %v1875, 7
      %v1877 = vsub.s32 %v1874, %v1876
      %v1878 = vrot.slane %v1870, %v1877
      %v1880 = vunpack.c.l.s4 1983009808
      %v1881 = vunpack.c.0.s8 %v1880
      %v1882 = vlaneseq
      %v1883 = vshrl.u32 %v1882, 7
      %v1884 = vsub.s32 %v1881, %v1883
      %v1885 = vrot.slane %v1871, %v1884
      %v1886 = vcombine.low %v1878, %v1885
      %v1887 = vcombine.low %v1420, %v1422
      %v1888 = vcombine.low %v1430, %v1438
      %v1890 = vunpack.c.l.s4 1983009808
      %v1891 = vunpack.c.0.s8 %v1890
      %v1892 = vlaneseq
      %v1893 = vshrl.u32 %v1892, 7
      %v1894 = vsub.s32 %v1891, %v1893
      %v1895 = vrot.slane %v1887, %v1894
      %v1897 = vunpack.c.l.s4 1983009808
      %v1898 = vunpack.c.0.s8 %v1897
      %v1899 = vlaneseq
      %v1900 = vshrl.u32 %v1899, 7
      %v1901 = vsub.s32 %v1898, %v1900
      %v1902 = vrot.slane %v1888, %v1901
      %v1903 = vcombine.low %v1895, %v1902
      %v1904 = vcombine.low %v1437, %v1446
      %v1905 = vcombine.low %v1454, %v1453
      %v1907 = vunpack.c.l.s4 1983009808
      %v1908 = vunpack.c.0.s8 %v1907
      %v1909 = vlaneseq
      %v1910 = vshrl.u32 %v1909, 7
      %v1911 = vsub.s32 %v1908, %v1910
      %v1912 = vrot.slane %v1904, %v1911
      %v1914 = vunpack.c.l.s4 1983009808
      %v1915 = vunpack.c.0.s8 %v1914
      %v1916 = vlaneseq
      %v1917 = vshrl.u32 %v1916, 7
      %v1918 = vsub.s32 %v1915, %v1917
      %v1919 = vrot.slane %v1905, %v1918
      %v1920 = vcombine.low %v1912, %v1919
      %v1921 = vcombine.low %v1455, %v1463
      %v1922 = vcombine.low %v1471, %v1470
      %v1924 = vunpack.c.l.s4 1983009808
      %v1925 = vunpack.c.0.s8 %v1924
      %v1926 = vlaneseq
      %v1927 = vshrl.u32 %v1926, 7
      %v1928 = vsub.s32 %v1925, %v1927
      %v1929 = vrot.slane %v1921, %v1928
      %v1931 = vunpack.c.l.s4 1983009808
      %v1932 = vunpack.c.0.s8 %v1931
      %v1933 = vlaneseq
      %v1934 = vshrl.u32 %v1933, 7
      %v1935 = vsub.s32 %v1932, %v1934
      %v1936 = vrot.slane %v1922, %v1935
      %v1937 = vcombine.low %v1929, %v1936
      %v1938 = vcombine.low %v1479, %v1487
      %v1939 = vcombine.low %v1486, %v1488
      %v1941 = vunpack.c.l.s4 1983009808
      %v1942 = vunpack.c.0.s8 %v1941
      %v1943 = vlaneseq
      %v1944 = vshrl.u32 %v1943, 7
      %v1945 = vsub.s32 %v1942, %v1944
      %v1946 = vrot.slane %v1938, %v1945
      %v1948 = vunpack.c.l.s4 1983009808
      %v1949 = vunpack.c.0.s8 %v1948
      %v1950 = vlaneseq
      %v1951 = vshrl.u32 %v1950, 7
      %v1952 = vsub.s32 %v1949, %v1951
      %v1953 = vrot.slane %v1939, %v1952
      %v1954 = vcombine.low %v1946, %v1953
      %v1955 = vcombine.low %v1496, %v1504
      %v1956 = vcombine.low %v1503, %v1512
      %v1958 = vunpack.c.l.s4 1983009808
      %v1959 = vunpack.c.0.s8 %v1958
      %v1960 = vlaneseq
      %v1961 = vshrl.u32 %v1960, 7
      %v1962 = vsub.s32 %v1959, %v1961
      %v1963 = vrot.slane %v1955, %v1962
      %v1965 = vunpack.c.l.s4 1983009808
      %v1966 = vunpack.c.0.s8 %v1965
      %v1967 = vlaneseq
      %v1968 = vshrl.u32 %v1967, 7
      %v1969 = vsub.s32 %v1966, %v1968
      %v1970 = vrot.slane %v1956, %v1969
      %v1971 = vcombine.low %v1963, %v1970
      %v1972 = vcombine.low %v1520, %v1519
      %v1973 = vcombine.low %v1521, %v1529
      %v1975 = vunpack.c.l.s4 1983009808
      %v1976 = vunpack.c.0.s8 %v1975
      %v1977 = vlaneseq
      %v1978 = vshrl.u32 %v1977, 7
      %v1979 = vsub.s32 %v1976, %v1978
      %v1980 = vrot.slane %v1972, %v1979
      %v1982 = vunpack.c.l.s4 1983009808
      %v1983 = vunpack.c.0.s8 %v1982
      %v1984 = vlaneseq
      %v1985 = vshrl.u32 %v1984, 7
      %v1986 = vsub.s32 %v1983, %v1985
      %v1987 = vrot.slane %v1973, %v1986
      %v1988 = vcombine.low %v1980, %v1987
      %v1989 = vcombine.low %v1537, %v1536
      %v1990 = vcombine.low %v1545, %v1553
      %v1992 = vunpack.c.l.s4 1983009808
      %v1993 = vunpack.c.0.s8 %v1992
      %v1994 = vlaneseq
      %v1995 = vshrl.u32 %v1994, 7
      %v1996 = vsub.s32 %v1993, %v1995
      %v1997 = vrot.slane %v1989, %v1996
      %v1999 = vunpack.c.l.s4 1983009808
      %v2000 = vunpack.c.0.s8 %v1999
      %v2001 = vlaneseq
      %v2002 = vshrl.u32 %v2001, 7
      %v2003 = vsub.s32 %v2000, %v2002
      %v2004 = vrot.slane %v1990, %v2003
      %v2005 = vcombine.low %v1997, %v2004
      %v2006 = vcombine.low %v1552, %v1554
      %v2007 = vcombine.low %v1562, %v1570
      %v2009 = vunpack.c.l.s4 1983009808
      %v2010 = vunpack.c.0.s8 %v2009
      %v2011 = vlaneseq
      %v2012 = vshrl.u32 %v2011, 7
      %v2013 = vsub.s32 %v2010, %v2012
      %v2014 = vrot.slane %v2006, %v2013
      %v2016 = vunpack.c.l.s4 1983009808
      %v2017 = vunpack.c.0.s8 %v2016
      %v2018 = vlaneseq
      %v2019 = vshrl.u32 %v2018, 7
      %v2020 = vsub.s32 %v2017, %v2019
      %v2021 = vrot.slane %v2007, %v2020
      %v2022 = vcombine.low %v2014, %v2021
      %v2023 = vcombine.low %v1569, %v1578
      %v2024 = vcombine.low %v1586, %v1585
      %v2026 = vunpack.c.l.s4 1983009808
      %v2027 = vunpack.c.0.s8 %v2026
      %v2028 = vlaneseq
      %v2029 = vshrl.u32 %v2028, 7
      %v2030 = vsub.s32 %v2027, %v2029
      %v2031 = vrot.slane %v2023, %v2030
      %v2033 = vunpack.c.l.s4 1983009808
      %v2034 = vunpack.c.0.s8 %v2033
      %v2035 = vlaneseq
      %v2036 = vshrl.u32 %v2035, 7
      %v2037 = vsub.s32 %v2034, %v2036
      %v2038 = vrot.slane %v2024, %v2037
      %v2039 = vcombine.low %v2031, %v2038
      %v2040 = vcombine.low %v1587, %v1595
      %v2041 = vcombine.low %v1603, %v1602
      %v2043 = vunpack.c.l.s4 1983009808
      %v2044 = vunpack.c.0.s8 %v2043
      %v2045 = vlaneseq
      %v2046 = vshrl.u32 %v2045, 7
      %v2047 = vsub.s32 %v2044, %v2046
      %v2048 = vrot.slane %v2040, %v2047
      %v2050 = vunpack.c.l.s4 1983009808
      %v2051 = vunpack.c.0.s8 %v2050
      %v2052 = vlaneseq
      %v2053 = vshrl.u32 %v2052, 7
      %v2054 = vsub.s32 %v2051, %v2053
      %v2055 = vrot.slane %v2041, %v2054
      %v2056 = vcombine.low %v2048, %v2055
      %v2057 = vcombine.low %v1611, %v1619
      %v2058 = vcombine.low %v1618, %v1620
      %v2060 = vunpack.c.l.s4 1983009808
      %v2061 = vunpack.c.0.s8 %v2060
      %v2062 = vlaneseq
      %v2063 = vshrl.u32 %v2062, 7
      %v2064 = vsub.s32 %v2061, %v2063
      %v2065 = vrot.slane %v2057, %v2064
      %v2067 = vunpack.c.l.s4 1983009808
      %v2068 = vunpack.c.0.s8 %v2067
      %v2069 = vlaneseq
      %v2070 = vshrl.u32 %v2069, 7
      %v2071 = vsub.s32 %v2068, %v2070
      %v2072 = vrot.slane %v2058, %v2071
      %v2073 = vcombine.low %v2065, %v2072
      %v2074 = vcombine.low %v1628, %v1636
      %v2075 = vcombine.low %v1635, %v1644
      %v2077 = vunpack.c.l.s4 1983009808
      %v2078 = vunpack.c.0.s8 %v2077
      %v2079 = vlaneseq
      %v2080 = vshrl.u32 %v2079, 7
      %v2081 = vsub.s32 %v2078, %v2080
      %v2082 = vrot.slane %v2074, %v2081
      %v2084 = vunpack.c.l.s4 1983009808
      %v2085 = vunpack.c.0.s8 %v2084
      %v2086 = vlaneseq
      %v2087 = vshrl.u32 %v2086, 7
      %v2088 = vsub.s32 %v2085, %v2087
      %v2089 = vrot.slane %v2075, %v2088
      %v2090 = vcombine.low %v2082, %v2089
      %v2091 = vcombine.low %v1652, %v1651
      %v2092 = vcombine.low %v1653, %v1661
      %v2094 = vunpack.c.l.s4 1983009808
      %v2095 = vunpack.c.0.s8 %v2094
      %v2096 = vlaneseq
      %v2097 = vshrl.u32 %v2096, 7
      %v2098 = vsub.s32 %v2095, %v2097
      %v2099 = vrot.slane %v2091, %v2098
      %v2101 = vunpack.c.l.s4 1983009808
      %v2102 = vunpack.c.0.s8 %v2101
      %v2103 = vlaneseq
      %v2104 = vshrl.u32 %v2103, 7
      %v2105 = vsub.s32 %v2102, %v2104
      %v2106 = vrot.slane %v2092, %v2105
      %v2107 = vcombine.low %v2099, %v2106
      %v2108 = vcombine.low %v1669, %v1668
      %v2109 = vcombine.low %v1677, %v1685
      %v2111 = vunpack.c.l.s4 1983009808
      %v2112 = vunpack.c.0.s8 %v2111
      %v2113 = vlaneseq
      %v2114 = vshrl.u32 %v2113, 7
      %v2115 = vsub.s32 %v2112, %v2114
      %v2116 = vrot.slane %v2108, %v2115
      %v2118 = vunpack.c.l.s4 1983009808
      %v2119 = vunpack.c.0.s8 %v2118
      %v2120 = vlaneseq
      %v2121 = vshrl.u32 %v2120, 7
      %v2122 = vsub.s32 %v2119, %v2121
      %v2123 = vrot.slane %v2109, %v2122
      %v2124 = vcombine.low %v2116, %v2123
      %v2125 = vcombine.low %v1684, %v1686
      %v2126 = vcombine.low %v1694, %v1702
      %v2128 = vunpack.c.l.s4 1983009808
      %v2129 = vunpack.c.0.s8 %v2128
      %v2130 = vlaneseq
      %v2131 = vshrl.u32 %v2130, 7
      %v2132 = vsub.s32 %v2129, %v2131
      %v2133 = vrot.slane %v2125, %v2132
      %v2135 = vunpack.c.l.s4 1983009808
      %v2136 = vunpack.c.0.s8 %v2135
      %v2137 = vlaneseq
      %v2138 = vshrl.u32 %v2137, 7
      %v2139 = vsub.s32 %v2136, %v2138
      %v2140 = vrot.slane %v2126, %v2139
      %v2141 = vcombine.low %v2133, %v2140
      %v2142 = vcombine.low %v1701, %v1710
      %v2143 = vcombine.low %v1718, %v1717
      %v2145 = vunpack.c.l.s4 1983009808
      %v2146 = vunpack.c.0.s8 %v2145
      %v2147 = vlaneseq
      %v2148 = vshrl.u32 %v2147, 7
      %v2149 = vsub.s32 %v2146, %v2148
      %v2150 = vrot.slane %v2142, %v2149
      %v2152 = vunpack.c.l.s4 1983009808
      %v2153 = vunpack.c.0.s8 %v2152
      %v2154 = vlaneseq
      %v2155 = vshrl.u32 %v2154, 7
      %v2156 = vsub.s32 %v2153, %v2155
      %v2157 = vrot.slane %v2143, %v2156
      %v2158 = vcombine.low %v2150, %v2157
      %v2159 = vcombine.low %v1719, %v1727
      %v2160 = vcombine.low %v1735, %v1734
      %v2162 = vunpack.c.l.s4 1983009808
      %v2163 = vunpack.c.0.s8 %v2162
      %v2164 = vlaneseq
      %v2165 = vshrl.u32 %v2164, 7
      %v2166 = vsub.s32 %v2163, %v2165
      %v2167 = vrot.slane %v2159, %v2166
      %v2169 = vunpack.c.l.s4 1983009808
      %v2170 = vunpack.c.0.s8 %v2169
      %v2171 = vlaneseq
      %v2172 = vshrl.u32 %v2171, 7
      %v2173 = vsub.s32 %v2170, %v2172
      %v2174 = vrot.slane %v2160, %v2173
      %v2175 = vcombine.low %v2167, %v2174
      %v2176 = vcombine.low %v1743, %v1751
      %v2177 = vcombine.low %v1750, %v1752
      %v2179 = vunpack.c.l.s4 1983009808
      %v2180 = vunpack.c.0.s8 %v2179
      %v2181 = vlaneseq
      %v2182 = vshrl.u32 %v2181, 7
      %v2183 = vsub.s32 %v2180, %v2182
      %v2184 = vrot.slane %v2176, %v2183
      %v2186 = vunpack.c.l.s4 1983009808
      %v2187 = vunpack.c.0.s8 %v2186
      %v2188 = vlaneseq
      %v2189 = vshrl.u32 %v2188, 7
      %v2190 = vsub.s32 %v2187, %v2189
      %v2191 = vrot.slane %v2177, %v2190
      %v2192 = vcombine.low %v2184, %v2191
      %v2193 = vcombine.low %v1760, %v1768
      %v2194 = vcombine.low %v1767, %v1776
      %v2196 = vunpack.c.l.s4 1983009808
      %v2197 = vunpack.c.0.s8 %v2196
      %v2198 = vlaneseq
      %v2199 = vshrl.u32 %v2198, 7
      %v2200 = vsub.s32 %v2197, %v2199
      %v2201 = vrot.slane %v2193, %v2200
      %v2203 = vunpack.c.l.s4 1983009808
      %v2204 = vunpack.c.0.s8 %v2203
      %v2205 = vlaneseq
      %v2206 = vshrl.u32 %v2205, 7
      %v2207 = vsub.s32 %v2204, %v2206
      %v2208 = vrot.slane %v2194, %v2207
      %v2209 = vcombine.low %v2201, %v2208
      %v2210 = vcombine.low %v1784, %v1783
      %v2211 = vcombine.low %v1785, %v1793
      %v2213 = vunpack.c.l.s4 1983009808
      %v2214 = vunpack.c.0.s8 %v2213
      %v2215 = vlaneseq
      %v2216 = vshrl.u32 %v2215, 7
      %v2217 = vsub.s32 %v2214, %v2216
      %v2218 = vrot.slane %v2210, %v2217
      %v2220 = vunpack.c.l.s4 1983009808
      %v2221 = vunpack.c.0.s8 %v2220
      %v2222 = vlaneseq
      %v2223 = vshrl.u32 %v2222, 7
      %v2224 = vsub.s32 %v2221, %v2223
      %v2225 = vrot.slane %v2211, %v2224
      %v2226 = vcombine.low %v2218, %v2225
      %v2227 = vcombine.low %v1801, %v1800
      %v2229 = vunpack.c.l.s4 1983009808
      %v2230 = vunpack.c.0.s8 %v2229
      %v2231 = vlaneseq
      %v2232 = vshrl.u32 %v2231, 7
      %v2233 = vsub.s32 %v2230, %v2232
      %v2234 = vrot.slane %v2227, %v2233
      %v2235 = vcombine.low %v1809, %v1817
      %v2236 = vcombine.low %v1816, %v1818
      %v2238 = vunpack.c.l.s4 1983009808
      %v2239 = vunpack.c.0.s8 %v2238
      %v2240 = vlaneseq
      %v2241 = vshrl.u32 %v2240, 7
      %v2242 = vsub.s32 %v2239, %v2241
      %v2243 = vrot.slane %v2235, %v2242
      %v2245 = vunpack.c.l.s4 1983009808
      %v2246 = vunpack.c.0.s8 %v2245
      %v2247 = vlaneseq
      %v2248 = vshrl.u32 %v2247, 7
      %v2249 = vsub.s32 %v2246, %v2248
      %v2250 = vrot.slane %v2236, %v2249
      %v2251 = vcombine.low %v2243, %v2250
      %v2252 = vcombine.low %v1816, %v1809
      %v2254 = vunpack.c.l.s4 1983009808
      %v2255 = vunpack.c.0.s8 %v2254
      %v2256 = vlaneseq
      %v2257 = vshrl.u32 %v2256, 7
      %v2258 = vsub.s32 %v2255, %v2257
      %v2259 = vrot.slane %v2252, %v2258
      %v2260 = vcombine.low %v2243, %v2259
      %v2261 = vcombine.low %v1817, %v1816
      %v2262 = vcombine.low %v1818, %v1809
      %v2264 = vunpack.c.l.s4 1983009808
      %v2265 = vunpack.c.0.s8 %v2264
      %v2266 = vlaneseq
      %v2267 = vshrl.u32 %v2266, 7
      %v2268 = vsub.s32 %v2265, %v2267
      %v2269 = vrot.slane %v2261, %v2268
      %v2271 = vunpack.c.l.s4 1983009808
      %v2272 = vunpack.c.0.s8 %v2271
      %v2273 = vlaneseq
      %v2274 = vshrl.u32 %v2273, 7
      %v2275 = vsub.s32 %v2272, %v2274
      %v2276 = vrot.slane %v2262, %v2275
      %v2277 = vcombine.low %v2269, %v2276
      %v2278 = vcombine.low %v2269, %v2243
      %v2279 = vcombine.low %v2250, %v2243
      %v2280 = vcombine.low %v2259, %v2269
      %v2281 = vcombine.low %v2276, %v2269
      %vm2290 = vcmask 293888
      %v2291 = vsel %vm2290, %v1835, 0
      %v2293 = vsel %vm2290, %v1852, 0
      %v2295 = vsel %vm2290, %v1869, 0
      %v2297 = vsel %vm2290, %v1886, 0
      %v2299 = vsel %vm2290, %v1903, 0
      %v2301 = vsel %vm2290, %v1920, 0
      %v2303 = vsel %vm2290, %v1937, 0
      %v2305 = vsel %vm2290, %v1954, 0
      %v2307 = vsel %vm2290, %v1971, 0
      %v2309 = vsel %vm2290, %v1988, 0
      %v2311 = vsel %vm2290, %v2005, 0
      %v2313 = vsel %vm2290, %v2022, 0
      %v2315 = vsel %vm2290, %v2039, 0
      %v2317 = vsel %vm2290, %v2056, 0
      %v2319 = vsel %vm2290, %v2073, 0
      %v2321 = vsel %vm2290, %v2090, 0
      %v2323 = vsel %vm2290, %v2107, 0
      %v2325 = vsel %vm2290, %v2124, 0
      %v2327 = vsel %vm2290, %v2141, 0
      %v2329 = vsel %vm2290, %v2158, 0
      %v2331 = vsel %vm2290, %v2175, 0
      %v2333 = vsel %vm2290, %v2192, 0
      %v2335 = vsel %vm2290, %v2209, 0
      %v2337 = vsel %vm2290, %v2226, 0
      %v2339 = vsel %vm2290, %v2234, 0
      %vm2341 = vcmask 1043456
      %v2343 = vsel %vm2341, %v229, 0
      %2345 = vmatprep.subr.mxu0 0.0
      %2346 = vmatpush1.msra.mxu0 0.0
      %2347 = vmatprep.subr.mxu0 0.0
      %2348 = vmatpush1.msra.mxu0 0.0
      %2349 = vmatprep.subr.mxu0 0.0
      %2350 = vmatpush1.msra.mxu0 0.0
      %2351 = vmatprep.subr.mxu0 0.0
      %2352 = vmatpush1.msra.mxu0 0.0
      %2353 = vmatprep.subr.mxu0 0.0
      %2354 = vmatpush1.msra.mxu0 0.0
      %2355 = vmatprep.subr.mxu0 0.0
      %2356 = vmatpush1.msra.mxu0 0.0
      %2357 = vmatprep.subr.mxu0 0.0
      %2358 = vmatpush1.msra.mxu0 0.0
      %2359 = vmatprep.subr.mxu0 0.0
      %2360 = vmatpush1.msra.mxu0 0.0
      %2361 = vmatprep.subr.mxu0 0.0
      %2362 = vmatpush1.msra.mxu0 0.0
      %2363 = vmatprep.subr.mxu0 0.0
      %2364 = vmatpush1.msra.mxu0 0.0
      %2365 = vmatprep.subr.mxu0 0.0
      %2366 = vmatpush1.msra.mxu0 0.0
      %2367 = vmatprep.subr.mxu0 0.0
      %2368 = vmatpush1.msra.mxu0 %v2343
      %2369 = vmatprep.subr.mxu0 0.0
      %2370 = vmatpush1.msra.mxu0 %v228
      %2371 = vmatprep.subr.mxu0 0.0
      %2372 = vmatpush1.msra.mxu0 %v227
      %2373 = vmatprep.subr.mxu0 0.0
      %2374 = vmatpush1.msra.mxu0 %v226
      %2375 = vmatprep.subr.mxu0 0.0
      %2376 = vmatpush1.msra.mxu0 %v225
      %2377 = vmatprep.subr.mxu0 0.0
      %2378 = vmatpush2.msra.mxu0 0.0
      %2379 = vmatprep.subr.mxu0 0.0
      %2380 = vmatpush2.msra.mxu0 0.0
      %2381 = vmatprep.subr.mxu0 0.0
      %2382 = vmatpush2.msra.mxu0 0.0
      %2383 = vmatprep.subr.mxu0 0.0
      %2384 = vmatpush2.msra.mxu0 0.0
      %2385 = vmatprep.subr.mxu0 0.0
      %2386 = vmatpush2.msra.mxu0 0.0
      %2387 = vmatprep.subr.mxu0 0.0
      %2388 = vmatpush2.msra.mxu0 0.0
      %2389 = vmatprep.subr.mxu0 0.0
      %2390 = vmatpush2.msra.mxu0 0.0
      %2391 = vmatprep.subr.mxu0 0.0
      %2392 = vmatpush2.msra.mxu0 0.0
      %2393 = vmatprep.subr.mxu0 0.0
      %2394 = vmatpush2.msra.mxu0 0.0
      %2395 = vmatprep.subr.mxu0 0.0
      %2396 = vmatpush2.msra.mxu0 0.0
      %2397 = vmatprep.subr.mxu0 0.0
      %2398 = vmatpush2.msra.mxu0 0.0
      %2399 = vmatprep.subr.mxu0 0.0
      %2400 = vmatpush2.msra.mxu0 0.0
      %2401 = vmatprep.subr.mxu0 0.0
      %2402 = vmatpush2.msra.mxu0 0.0
      %2403 = vmatprep.subr.mxu0 0.0
      %2404 = vmatpush2.msra.mxu0 0.0
      %2405 = vmatprep.subr.mxu0 0.0
      %2406 = vmatpush2.msra.mxu0 0.0
      %2407 = vmatprep.subr.mxu0 0.0
      %2408 = vmatpush2.msra.mxu0 0.0
      %2409 = vmatprep.mubr.f32.mxu0 0.0
      %2410 = vmatmul.mubr.f32.gmra.mxu0 %v2291
      %v2411 = vpop.f32.mrf.mxu0
      %v2412 = vadd.f32 %v2251, %v2411
      %v2413 = vpop.f32.mrf.mxu0
      %2414 = vmatprep.mubr.f32.mxu0 0.0
      %2415 = vmatmul.mubr.f32.gmra.mxu0 %v2293
      %v2416 = vpop.f32.mrf.mxu0
      %v2417 = vadd.f32 %v2260, %v2416
      %v2418 = vpop.f32.mrf.mxu0
      %2419 = vmatprep.mubr.f32.mxu0 0.0
      %2420 = vmatmul.mubr.f32.gmra.mxu0 %v2295
      %v2421 = vpop.f32.mrf.mxu0
      %v2422 = vadd.f32 %v2277, %v2421
      %v2423 = vpop.f32.mrf.mxu0
      %2424 = vmatprep.mubr.f32.mxu0 0.0
      %2425 = vmatmul.mubr.f32.gmra.mxu0 %v2297
      %v2426 = vpop.f32.mrf.mxu0
      %v2427 = vadd.f32 %v2278, %v2426
      %v2428 = vpop.f32.mrf.mxu0
      %2429 = vmatprep.mubr.f32.mxu0 0.0
      %2430 = vmatmul.mubr.f32.gmra.mxu0 %v2299
      %v2431 = vpop.f32.mrf.mxu0
      %v2432 = vadd.f32 %v2279, %v2431
      %v2433 = vpop.f32.mrf.mxu0
      %2434 = vmatprep.mubr.f32.mxu0 0.0
      %2435 = vmatmul.mubr.f32.gmra.mxu0 %v2301
      %v2436 = vpop.f32.mrf.mxu0
      %v2437 = vadd.f32 %v2280, %v2436
      %v2438 = vpop.f32.mrf.mxu0
      %2439 = vmatprep.mubr.f32.mxu0 0.0
      %2440 = vmatmul.mubr.f32.gmra.mxu0 %v2303
      %v2441 = vpop.f32.mrf.mxu0
      %v2442 = vadd.f32 %v2281, %v2441
      %v2443 = vpop.f32.mrf.mxu0
      %2444 = vmatprep.mubr.f32.mxu0 0.0
      %2445 = vmatmul.mubr.f32.gmra.mxu0 %v2305
      %v2446 = vpop.f32.mrf.mxu0
      %v2447 = vadd.f32 %v2251, %v2446
      %v2448 = vpop.f32.mrf.mxu0
      %2449 = vmatprep.mubr.f32.mxu0 0.0
      %2450 = vmatmul.mubr.f32.gmra.mxu0 %v2307
      %v2451 = vpop.f32.mrf.mxu0
      %v2452 = vadd.f32 %v2260, %v2451
      %v2453 = vpop.f32.mrf.mxu0
      %2454 = vmatprep.mubr.f32.mxu0 0.0
      %2455 = vmatmul.mubr.f32.gmra.mxu0 %v2309
      %v2456 = vpop.f32.mrf.mxu0
      %v2457 = vadd.f32 %v2277, %v2456
      %v2458 = vpop.f32.mrf.mxu0
      %2459 = vmatprep.mubr.f32.mxu0 0.0
      %2460 = vmatmul.mubr.f32.gmra.mxu0 %v2311
      %v2461 = vpop.f32.mrf.mxu0
      %v2462 = vadd.f32 %v2278, %v2461
      %v2463 = vpop.f32.mrf.mxu0
      %2464 = vmatprep.mubr.f32.mxu0 0.0
      %2465 = vmatmul.mubr.f32.gmra.mxu0 %v2313
      %v2466 = vpop.f32.mrf.mxu0
      %v2467 = vadd.f32 %v2279, %v2466
      %v2468 = vpop.f32.mrf.mxu0
      %2469 = vmatprep.mubr.f32.mxu0 0.0
      %2470 = vmatmul.mubr.f32.gmra.mxu0 %v2315
      %v2471 = vpop.f32.mrf.mxu0
      %v2472 = vadd.f32 %v2280, %v2471
      %v2473 = vpop.f32.mrf.mxu0
      %2474 = vmatprep.mubr.f32.mxu0 0.0
      %2475 = vmatmul.mubr.f32.gmra.mxu0 %v2317
      %v2476 = vpop.f32.mrf.mxu0
      %v2477 = vadd.f32 %v2281, %v2476
      %v2478 = vpop.f32.mrf.mxu0
      %2479 = vmatprep.mubr.f32.mxu0 0.0
      %2480 = vmatmul.mubr.f32.gmra.mxu0 %v2319
      %v2481 = vpop.f32.mrf.mxu0
      %v2482 = vadd.f32 %v2251, %v2481
      %v2483 = vpop.f32.mrf.mxu0
      %2484 = vmatprep.mubr.f32.mxu0 0.0
      %2485 = vmatmul.mubr.f32.gmra.mxu0 %v2321
      %v2486 = vpop.f32.mrf.mxu0
      %v2487 = vadd.f32 %v2260, %v2486
      %v2488 = vpop.f32.mrf.mxu0
      %2489 = vmatprep.mubr.f32.mxu0 0.0
      %2490 = vmatmul.mubr.f32.gmra.mxu0 %v2323
      %v2491 = vpop.f32.mrf.mxu0
      %v2492 = vadd.f32 %v2277, %v2491
      %v2493 = vpop.f32.mrf.mxu0
      %2494 = vmatprep.mubr.f32.mxu0 0.0
      %2495 = vmatmul.mubr.f32.gmra.mxu0 %v2325
      %v2496 = vpop.f32.mrf.mxu0
      %v2497 = vadd.f32 %v2278, %v2496
      %v2498 = vpop.f32.mrf.mxu0
      %2499 = vmatprep.mubr.f32.mxu0 0.0
      %2500 = vmatmul.mubr.f32.gmra.mxu0 %v2327
      %v2501 = vpop.f32.mrf.mxu0
      %v2502 = vadd.f32 %v2279, %v2501
      %v2503 = vpop.f32.mrf.mxu0
      %2504 = vmatprep.mubr.f32.mxu0 0.0
      %2505 = vmatmul.mubr.f32.gmra.mxu0 %v2329
      %v2506 = vpop.f32.mrf.mxu0
      %v2507 = vadd.f32 %v2280, %v2506
      %v2508 = vpop.f32.mrf.mxu0
      %2509 = vmatprep.mubr.f32.mxu0 0.0
      %2510 = vmatmul.mubr.f32.gmra.mxu0 %v2331
      %v2511 = vpop.f32.mrf.mxu0
      %v2512 = vadd.f32 %v2281, %v2511
      %v2513 = vpop.f32.mrf.mxu0
      %2514 = vmatprep.mubr.f32.mxu0 0.0
      %2515 = vmatmul.mubr.f32.gmra.mxu0 %v2333
      %v2516 = vpop.f32.mrf.mxu0
      %v2517 = vadd.f32 %v2251, %v2516
      %v2518 = vpop.f32.mrf.mxu0
      %2519 = vmatprep.mubr.f32.mxu0 0.0
      %2520 = vmatmul.mubr.f32.gmra.mxu0 %v2335
      %v2521 = vpop.f32.mrf.mxu0
      %v2522 = vadd.f32 %v2260, %v2521
      %v2523 = vpop.f32.mrf.mxu0
      %2524 = vmatprep.mubr.f32.mxu0 0.0
      %2525 = vmatmul.mubr.f32.gmra.mxu0 %v2337
      %v2526 = vpop.f32.mrf.mxu0
      %v2527 = vadd.f32 %v2277, %v2526
      %v2528 = vpop.f32.mrf.mxu0
      %2529 = vmatprep.mubr.f32.mxu0 0.0
      %2530 = vmatmul.mubr.f32.gmra.mxu0 %v2339
      %v2531 = vpop.f32.mrf.mxu0
      %v2532 = vadd.f32 %v2269, %v2531
      %v2533 = vpop.f32.mrf.mxu0
      %2534 = vdwg.mxu0
      %v2560 = vcombine.high %v2412, %v2412
      %v2562 = vunpack.c.l.s4 1983009808
      %v2563 = vunpack.c.0.s8 %v2562
      %v2564 = vlaneseq
      %v2565 = vshrl.u32 %v2564, 7
      %v2566 = vsub.s32 %v2563, %v2565
      %v2567 = vrot.slane %v2412, %v2566
      %v2569 = vunpack.c.l.s4 1983009808
      %v2570 = vunpack.c.0.s8 %v2569
      %v2571 = vlaneseq
      %v2572 = vshrl.u32 %v2571, 7
      %v2573 = vsub.s32 %v2570, %v2572
      %v2574 = vrot.slane %v2560, %v2573
      %v2575 = vcombine.high %v2567, %v2567
      %v2576 = vcombine.high %v2574, %v2574
      %v2577 = vcombine.high %v2417, %v2417
      %v2579 = vunpack.c.l.s4 1983009808
      %v2580 = vunpack.c.0.s8 %v2579
      %v2581 = vlaneseq
      %v2582 = vshrl.u32 %v2581, 7
      %v2583 = vsub.s32 %v2580, %v2582
      %v2584 = vrot.slane %v2417, %v2583
      %v2586 = vunpack.c.l.s4 1983009808
      %v2587 = vunpack.c.0.s8 %v2586
      %v2588 = vlaneseq
      %v2589 = vshrl.u32 %v2588, 7
      %v2590 = vsub.s32 %v2587, %v2589
      %v2591 = vrot.slane %v2577, %v2590
      %v2592 = vcombine.high %v2584, %v2584
      %v2593 = vcombine.high %v2591, %v2591
      %v2594 = vcombine.high %v2422, %v2422
      %v2596 = vunpack.c.l.s4 1983009808
      %v2597 = vunpack.c.0.s8 %v2596
      %v2598 = vlaneseq
      %v2599 = vshrl.u32 %v2598, 7
      %v2600 = vsub.s32 %v2597, %v2599
      %v2601 = vrot.slane %v2422, %v2600
      %v2603 = vunpack.c.l.s4 1983009808
      %v2604 = vunpack.c.0.s8 %v2603
      %v2605 = vlaneseq
      %v2606 = vshrl.u32 %v2605, 7
      %v2607 = vsub.s32 %v2604, %v2606
      %v2608 = vrot.slane %v2594, %v2607
      %v2609 = vcombine.high %v2601, %v2601
      %v2610 = vcombine.high %v2608, %v2608
      %v2611 = vcombine.high %v2427, %v2427
      %v2613 = vunpack.c.l.s4 1983009808
      %v2614 = vunpack.c.0.s8 %v2613
      %v2615 = vlaneseq
      %v2616 = vshrl.u32 %v2615, 7
      %v2617 = vsub.s32 %v2614, %v2616
      %v2618 = vrot.slane %v2427, %v2617
      %v2620 = vunpack.c.l.s4 1983009808
      %v2621 = vunpack.c.0.s8 %v2620
      %v2622 = vlaneseq
      %v2623 = vshrl.u32 %v2622, 7
      %v2624 = vsub.s32 %v2621, %v2623
      %v2625 = vrot.slane %v2611, %v2624
      %v2626 = vcombine.high %v2618, %v2618
      %v2627 = vcombine.high %v2625, %v2625
      %v2628 = vcombine.high %v2432, %v2432
      %v2630 = vunpack.c.l.s4 1983009808
      %v2631 = vunpack.c.0.s8 %v2630
      %v2632 = vlaneseq
      %v2633 = vshrl.u32 %v2632, 7
      %v2634 = vsub.s32 %v2631, %v2633
      %v2635 = vrot.slane %v2432, %v2634
      %v2637 = vunpack.c.l.s4 1983009808
      %v2638 = vunpack.c.0.s8 %v2637
      %v2639 = vlaneseq
      %v2640 = vshrl.u32 %v2639, 7
      %v2641 = vsub.s32 %v2638, %v2640
      %v2642 = vrot.slane %v2628, %v2641
      %v2643 = vcombine.high %v2635, %v2635
      %v2644 = vcombine.high %v2642, %v2642
      %v2645 = vcombine.high %v2437, %v2437
      %v2647 = vunpack.c.l.s4 1983009808
      %v2648 = vunpack.c.0.s8 %v2647
      %v2649 = vlaneseq
      %v2650 = vshrl.u32 %v2649, 7
      %v2651 = vsub.s32 %v2648, %v2650
      %v2652 = vrot.slane %v2437, %v2651
      %v2654 = vunpack.c.l.s4 1983009808
      %v2655 = vunpack.c.0.s8 %v2654
      %v2656 = vlaneseq
      %v2657 = vshrl.u32 %v2656, 7
      %v2658 = vsub.s32 %v2655, %v2657
      %v2659 = vrot.slane %v2645, %v2658
      %v2660 = vcombine.high %v2652, %v2652
      %v2661 = vcombine.high %v2659, %v2659
      %v2662 = vcombine.high %v2442, %v2442
      %v2664 = vunpack.c.l.s4 1983009808
      %v2665 = vunpack.c.0.s8 %v2664
      %v2666 = vlaneseq
      %v2667 = vshrl.u32 %v2666, 7
      %v2668 = vsub.s32 %v2665, %v2667
      %v2669 = vrot.slane %v2442, %v2668
      %v2671 = vunpack.c.l.s4 1983009808
      %v2672 = vunpack.c.0.s8 %v2671
      %v2673 = vlaneseq
      %v2674 = vshrl.u32 %v2673, 7
      %v2675 = vsub.s32 %v2672, %v2674
      %v2676 = vrot.slane %v2662, %v2675
      %v2677 = vcombine.high %v2669, %v2669
      %v2678 = vcombine.high %v2676, %v2676
      %v2679 = vcombine.high %v2447, %v2447
      %v2681 = vunpack.c.l.s4 1983009808
      %v2682 = vunpack.c.0.s8 %v2681
      %v2683 = vlaneseq
      %v2684 = vshrl.u32 %v2683, 7
      %v2685 = vsub.s32 %v2682, %v2684
      %v2686 = vrot.slane %v2447, %v2685
      %v2688 = vunpack.c.l.s4 1983009808
      %v2689 = vunpack.c.0.s8 %v2688
      %v2690 = vlaneseq
      %v2691 = vshrl.u32 %v2690, 7
      %v2692 = vsub.s32 %v2689, %v2691
      %v2693 = vrot.slane %v2679, %v2692
      %v2694 = vcombine.high %v2686, %v2686
      %v2695 = vcombine.high %v2693, %v2693
      %v2696 = vcombine.high %v2452, %v2452
      %v2698 = vunpack.c.l.s4 1983009808
      %v2699 = vunpack.c.0.s8 %v2698
      %v2700 = vlaneseq
      %v2701 = vshrl.u32 %v2700, 7
      %v2702 = vsub.s32 %v2699, %v2701
      %v2703 = vrot.slane %v2452, %v2702
      %v2705 = vunpack.c.l.s4 1983009808
      %v2706 = vunpack.c.0.s8 %v2705
      %v2707 = vlaneseq
      %v2708 = vshrl.u32 %v2707, 7
      %v2709 = vsub.s32 %v2706, %v2708
      %v2710 = vrot.slane %v2696, %v2709
      %v2711 = vcombine.high %v2703, %v2703
      %v2712 = vcombine.high %v2710, %v2710
      %v2713 = vcombine.high %v2457, %v2457
      %v2715 = vunpack.c.l.s4 1983009808
      %v2716 = vunpack.c.0.s8 %v2715
      %v2717 = vlaneseq
      %v2718 = vshrl.u32 %v2717, 7
      %v2719 = vsub.s32 %v2716, %v2718
      %v2720 = vrot.slane %v2457, %v2719
      %v2722 = vunpack.c.l.s4 1983009808
      %v2723 = vunpack.c.0.s8 %v2722
      %v2724 = vlaneseq
      %v2725 = vshrl.u32 %v2724, 7
      %v2726 = vsub.s32 %v2723, %v2725
      %v2727 = vrot.slane %v2713, %v2726
      %v2728 = vcombine.high %v2720, %v2720
      %v2729 = vcombine.high %v2727, %v2727
      %v2730 = vcombine.high %v2462, %v2462
      %v2732 = vunpack.c.l.s4 1983009808
      %v2733 = vunpack.c.0.s8 %v2732
      %v2734 = vlaneseq
      %v2735 = vshrl.u32 %v2734, 7
      %v2736 = vsub.s32 %v2733, %v2735
      %v2737 = vrot.slane %v2462, %v2736
      %v2739 = vunpack.c.l.s4 1983009808
      %v2740 = vunpack.c.0.s8 %v2739
      %v2741 = vlaneseq
      %v2742 = vshrl.u32 %v2741, 7
      %v2743 = vsub.s32 %v2740, %v2742
      %v2744 = vrot.slane %v2730, %v2743
      %v2745 = vcombine.high %v2737, %v2737
      %v2746 = vcombine.high %v2744, %v2744
      %v2747 = vcombine.high %v2467, %v2467
      %v2749 = vunpack.c.l.s4 1983009808
      %v2750 = vunpack.c.0.s8 %v2749
      %v2751 = vlaneseq
      %v2752 = vshrl.u32 %v2751, 7
      %v2753 = vsub.s32 %v2750, %v2752
      %v2754 = vrot.slane %v2467, %v2753
      %v2756 = vunpack.c.l.s4 1983009808
      %v2757 = vunpack.c.0.s8 %v2756
      %v2758 = vlaneseq
      %v2759 = vshrl.u32 %v2758, 7
      %v2760 = vsub.s32 %v2757, %v2759
      %v2761 = vrot.slane %v2747, %v2760
      %v2762 = vcombine.high %v2754, %v2754
      %v2763 = vcombine.high %v2761, %v2761
      %v2764 = vcombine.high %v2472, %v2472
      %v2766 = vunpack.c.l.s4 1983009808
      %v2767 = vunpack.c.0.s8 %v2766
      %v2768 = vlaneseq
      %v2769 = vshrl.u32 %v2768, 7
      %v2770 = vsub.s32 %v2767, %v2769
      %v2771 = vrot.slane %v2472, %v2770
      %v2773 = vunpack.c.l.s4 1983009808
      %v2774 = vunpack.c.0.s8 %v2773
      %v2775 = vlaneseq
      %v2776 = vshrl.u32 %v2775, 7
      %v2777 = vsub.s32 %v2774, %v2776
      %v2778 = vrot.slane %v2764, %v2777
      %v2779 = vcombine.high %v2771, %v2771
      %v2780 = vcombine.high %v2778, %v2778
      %v2781 = vcombine.high %v2477, %v2477
      %v2783 = vunpack.c.l.s4 1983009808
      %v2784 = vunpack.c.0.s8 %v2783
      %v2785 = vlaneseq
      %v2786 = vshrl.u32 %v2785, 7
      %v2787 = vsub.s32 %v2784, %v2786
      %v2788 = vrot.slane %v2477, %v2787
      %v2790 = vunpack.c.l.s4 1983009808
      %v2791 = vunpack.c.0.s8 %v2790
      %v2792 = vlaneseq
      %v2793 = vshrl.u32 %v2792, 7
      %v2794 = vsub.s32 %v2791, %v2793
      %v2795 = vrot.slane %v2781, %v2794
      %v2796 = vcombine.high %v2788, %v2788
      %v2797 = vcombine.high %v2795, %v2795
      %v2798 = vcombine.high %v2482, %v2482
      %v2800 = vunpack.c.l.s4 1983009808
      %v2801 = vunpack.c.0.s8 %v2800
      %v2802 = vlaneseq
      %v2803 = vshrl.u32 %v2802, 7
      %v2804 = vsub.s32 %v2801, %v2803
      %v2805 = vrot.slane %v2482, %v2804
      %v2807 = vunpack.c.l.s4 1983009808
      %v2808 = vunpack.c.0.s8 %v2807
      %v2809 = vlaneseq
      %v2810 = vshrl.u32 %v2809, 7
      %v2811 = vsub.s32 %v2808, %v2810
      %v2812 = vrot.slane %v2798, %v2811
      %v2813 = vcombine.high %v2805, %v2805
      %v2814 = vcombine.high %v2812, %v2812
      %v2815 = vcombine.high %v2487, %v2487
      %v2817 = vunpack.c.l.s4 1983009808
      %v2818 = vunpack.c.0.s8 %v2817
      %v2819 = vlaneseq
      %v2820 = vshrl.u32 %v2819, 7
      %v2821 = vsub.s32 %v2818, %v2820
      %v2822 = vrot.slane %v2487, %v2821
      %v2824 = vunpack.c.l.s4 1983009808
      %v2825 = vunpack.c.0.s8 %v2824
      %v2826 = vlaneseq
      %v2827 = vshrl.u32 %v2826, 7
      %v2828 = vsub.s32 %v2825, %v2827
      %v2829 = vrot.slane %v2815, %v2828
      %v2830 = vcombine.high %v2822, %v2822
      %v2831 = vcombine.high %v2829, %v2829
      %v2832 = vcombine.high %v2492, %v2492
      %v2834 = vunpack.c.l.s4 1983009808
      %v2835 = vunpack.c.0.s8 %v2834
      %v2836 = vlaneseq
      %v2837 = vshrl.u32 %v2836, 7
      %v2838 = vsub.s32 %v2835, %v2837
      %v2839 = vrot.slane %v2492, %v2838
      %v2841 = vunpack.c.l.s4 1983009808
      %v2842 = vunpack.c.0.s8 %v2841
      %v2843 = vlaneseq
      %v2844 = vshrl.u32 %v2843, 7
      %v2845 = vsub.s32 %v2842, %v2844
      %v2846 = vrot.slane %v2832, %v2845
      %v2847 = vcombine.high %v2839, %v2839
      %v2848 = vcombine.high %v2846, %v2846
      %v2849 = vcombine.high %v2497, %v2497
      %v2851 = vunpack.c.l.s4 1983009808
      %v2852 = vunpack.c.0.s8 %v2851
      %v2853 = vlaneseq
      %v2854 = vshrl.u32 %v2853, 7
      %v2855 = vsub.s32 %v2852, %v2854
      %v2856 = vrot.slane %v2497, %v2855
      %v2858 = vunpack.c.l.s4 1983009808
      %v2859 = vunpack.c.0.s8 %v2858
      %v2860 = vlaneseq
      %v2861 = vshrl.u32 %v2860, 7
      %v2862 = vsub.s32 %v2859, %v2861
      %v2863 = vrot.slane %v2849, %v2862
      %v2864 = vcombine.high %v2856, %v2856
      %v2865 = vcombine.high %v2863, %v2863
      %v2866 = vcombine.high %v2502, %v2502
      %v2868 = vunpack.c.l.s4 1983009808
      %v2869 = vunpack.c.0.s8 %v2868
      %v2870 = vlaneseq
      %v2871 = vshrl.u32 %v2870, 7
      %v2872 = vsub.s32 %v2869, %v2871
      %v2873 = vrot.slane %v2502, %v2872
      %v2875 = vunpack.c.l.s4 1983009808
      %v2876 = vunpack.c.0.s8 %v2875
      %v2877 = vlaneseq
      %v2878 = vshrl.u32 %v2877, 7
      %v2879 = vsub.s32 %v2876, %v2878
      %v2880 = vrot.slane %v2866, %v2879
      %v2881 = vcombine.high %v2873, %v2873
      %v2882 = vcombine.high %v2880, %v2880
      %v2883 = vcombine.high %v2507, %v2507
      %v2885 = vunpack.c.l.s4 1983009808
      %v2886 = vunpack.c.0.s8 %v2885
      %v2887 = vlaneseq
      %v2888 = vshrl.u32 %v2887, 7
      %v2889 = vsub.s32 %v2886, %v2888
      %v2890 = vrot.slane %v2507, %v2889
      %v2892 = vunpack.c.l.s4 1983009808
      %v2893 = vunpack.c.0.s8 %v2892
      %v2894 = vlaneseq
      %v2895 = vshrl.u32 %v2894, 7
      %v2896 = vsub.s32 %v2893, %v2895
      %v2897 = vrot.slane %v2883, %v2896
      %v2898 = vcombine.high %v2890, %v2890
      %v2899 = vcombine.high %v2897, %v2897
      %v2900 = vcombine.high %v2512, %v2512
      %v2902 = vunpack.c.l.s4 1983009808
      %v2903 = vunpack.c.0.s8 %v2902
      %v2904 = vlaneseq
      %v2905 = vshrl.u32 %v2904, 7
      %v2906 = vsub.s32 %v2903, %v2905
      %v2907 = vrot.slane %v2512, %v2906
      %v2909 = vunpack.c.l.s4 1983009808
      %v2910 = vunpack.c.0.s8 %v2909
      %v2911 = vlaneseq
      %v2912 = vshrl.u32 %v2911, 7
      %v2913 = vsub.s32 %v2910, %v2912
      %v2914 = vrot.slane %v2900, %v2913
      %v2915 = vcombine.high %v2907, %v2907
      %v2916 = vcombine.high %v2914, %v2914
      %v2917 = vcombine.high %v2517, %v2517
      %v2919 = vunpack.c.l.s4 1983009808
      %v2920 = vunpack.c.0.s8 %v2919
      %v2921 = vlaneseq
      %v2922 = vshrl.u32 %v2921, 7
      %v2923 = vsub.s32 %v2920, %v2922
      %v2924 = vrot.slane %v2517, %v2923
      %v2926 = vunpack.c.l.s4 1983009808
      %v2927 = vunpack.c.0.s8 %v2926
      %v2928 = vlaneseq
      %v2929 = vshrl.u32 %v2928, 7
      %v2930 = vsub.s32 %v2927, %v2929
      %v2931 = vrot.slane %v2917, %v2930
      %v2932 = vcombine.high %v2924, %v2924
      %v2933 = vcombine.high %v2931, %v2931
      %v2934 = vcombine.high %v2522, %v2522
      %v2936 = vunpack.c.l.s4 1983009808
      %v2937 = vunpack.c.0.s8 %v2936
      %v2938 = vlaneseq
      %v2939 = vshrl.u32 %v2938, 7
      %v2940 = vsub.s32 %v2937, %v2939
      %v2941 = vrot.slane %v2522, %v2940
      %v2943 = vunpack.c.l.s4 1983009808
      %v2944 = vunpack.c.0.s8 %v2943
      %v2945 = vlaneseq
      %v2946 = vshrl.u32 %v2945, 7
      %v2947 = vsub.s32 %v2944, %v2946
      %v2948 = vrot.slane %v2934, %v2947
      %v2949 = vcombine.high %v2941, %v2941
      %v2950 = vcombine.high %v2948, %v2948
      %v2951 = vcombine.high %v2527, %v2527
      %v2953 = vunpack.c.l.s4 1983009808
      %v2954 = vunpack.c.0.s8 %v2953
      %v2955 = vlaneseq
      %v2956 = vshrl.u32 %v2955, 7
      %v2957 = vsub.s32 %v2954, %v2956
      %v2958 = vrot.slane %v2527, %v2957
      %v2960 = vunpack.c.l.s4 1983009808
      %v2961 = vunpack.c.0.s8 %v2960
      %v2962 = vlaneseq
      %v2963 = vshrl.u32 %v2962, 7
      %v2964 = vsub.s32 %v2961, %v2963
      %v2965 = vrot.slane %v2951, %v2964
      %v2966 = vcombine.high %v2958, %v2958
      %v2967 = vcombine.high %v2965, %v2965
      %v2969 = vunpack.c.l.s4 1983009808
      %v2970 = vunpack.c.0.s8 %v2969
      %v2971 = vlaneseq
      %v2972 = vshrl.u32 %v2971, 7
      %v2973 = vsub.s32 %v2970, %v2972
      %v2974 = vrot.slane %v2532, %v2973
      %v2975 = vcombine.high %v2974, %v2974
      %v3074 = vmax.f32 %v2567, 0.0
      %v3075 = vmax.f32 %v2575, 0.0
      %v3076 = vmax.f32 %v2574, 0.0
      %v3077 = vmax.f32 %v2576, 0.0
      %v3078 = vmax.f32 %v2584, 0.0
      %v3079 = vmax.f32 %v2592, 0.0
      %v3080 = vmax.f32 %v2591, 0.0
      %v3081 = vmax.f32 %v2593, 0.0
      %v3082 = vmax.f32 %v2601, 0.0
      %v3083 = vmax.f32 %v2609, 0.0
      %v3084 = vmax.f32 %v2608, 0.0
      %v3085 = vmax.f32 %v2610, 0.0
      %v3086 = vmax.f32 %v2618, 0.0
      %v3087 = vmax.f32 %v2626, 0.0
      %v3088 = vmax.f32 %v2625, 0.0
      %v3089 = vmax.f32 %v2627, 0.0
      %v3090 = vmax.f32 %v2635, 0.0
      %v3091 = vmax.f32 %v2643, 0.0
      %v3092 = vmax.f32 %v2642, 0.0
      %v3093 = vmax.f32 %v2644, 0.0
      %v3094 = vmax.f32 %v2652, 0.0
      %v3095 = vmax.f32 %v2660, 0.0
      %v3096 = vmax.f32 %v2659, 0.0
      %v3097 = vmax.f32 %v2661, 0.0
      %v3098 = vmax.f32 %v2669, 0.0
      %v3099 = vmax.f32 %v2677, 0.0
      %v3100 = vmax.f32 %v2676, 0.0
      %v3101 = vmax.f32 %v2678, 0.0
      %v3102 = vmax.f32 %v2686, 0.0
      %v3103 = vmax.f32 %v2694, 0.0
      %v3104 = vmax.f32 %v2693, 0.0
      %v3105 = vmax.f32 %v2695, 0.0
      %v3106 = vmax.f32 %v2703, 0.0
      %v3107 = vmax.f32 %v2711, 0.0
      %v3108 = vmax.f32 %v2710, 0.0
      %v3109 = vmax.f32 %v2712, 0.0
      %v3110 = vmax.f32 %v2720, 0.0
      %v3111 = vmax.f32 %v2728, 0.0
      %v3112 = vmax.f32 %v2727, 0.0
      %v3113 = vmax.f32 %v2729, 0.0
      %v3114 = vmax.f32 %v2737, 0.0
      %v3115 = vmax.f32 %v2745, 0.0
      %v3116 = vmax.f32 %v2744, 0.0
      %v3117 = vmax.f32 %v2746, 0.0
      %v3118 = vmax.f32 %v2754, 0.0
      %v3119 = vmax.f32 %v2762, 0.0
      %v3120 = vmax.f32 %v2761, 0.0
      %v3121 = vmax.f32 %v2763, 0.0
      %v3122 = vmax.f32 %v2771, 0.0
      %v3123 = vmax.f32 %v2779, 0.0
      %v3124 = vmax.f32 %v2778, 0.0
      %v3125 = vmax.f32 %v2780, 0.0
      %v3126 = vmax.f32 %v2788, 0.0
      %v3127 = vmax.f32 %v2796, 0.0
      %v3128 = vmax.f32 %v2795, 0.0
      %v3129 = vmax.f32 %v2797, 0.0
      %v3130 = vmax.f32 %v2805, 0.0
      %v3131 = vmax.f32 %v2813, 0.0
      %v3132 = vmax.f32 %v2812, 0.0
      %v3133 = vmax.f32 %v2814, 0.0
      %v3134 = vmax.f32 %v2822, 0.0
      %v3135 = vmax.f32 %v2830, 0.0
      %v3136 = vmax.f32 %v2829, 0.0
      %v3137 = vmax.f32 %v2831, 0.0
      %v3138 = vmax.f32 %v2839, 0.0
      %v3139 = vmax.f32 %v2847, 0.0
      %v3140 = vmax.f32 %v2846, 0.0
      %v3141 = vmax.f32 %v2848, 0.0
      %v3142 = vmax.f32 %v2856, 0.0
      %v3143 = vmax.f32 %v2864, 0.0
      %v3144 = vmax.f32 %v2863, 0.0
      %v3145 = vmax.f32 %v2865, 0.0
      %v3146 = vmax.f32 %v2873, 0.0
      %v3147 = vmax.f32 %v2881, 0.0
      %v3148 = vmax.f32 %v2880, 0.0
      %v3149 = vmax.f32 %v2882, 0.0
      %v3150 = vmax.f32 %v2890, 0.0
      %v3151 = vmax.f32 %v2898, 0.0
      %v3152 = vmax.f32 %v2897, 0.0
      %v3153 = vmax.f32 %v2899, 0.0
      %v3154 = vmax.f32 %v2907, 0.0
      %v3155 = vmax.f32 %v2915, 0.0
      %v3156 = vmax.f32 %v2914, 0.0
      %v3157 = vmax.f32 %v2916, 0.0
      %v3158 = vmax.f32 %v2924, 0.0
      %v3159 = vmax.f32 %v2932, 0.0
      %v3160 = vmax.f32 %v2931, 0.0
      %v3161 = vmax.f32 %v2933, 0.0
      %v3162 = vmax.f32 %v2941, 0.0
      %v3163 = vmax.f32 %v2949, 0.0
      %v3164 = vmax.f32 %v2948, 0.0
      %v3165 = vmax.f32 %v2950, 0.0
      %v3166 = vmax.f32 %v2958, 0.0
      %v3167 = vmax.f32 %v2966, 0.0
      %v3168 = vmax.f32 %v2965, 0.0
      %v3169 = vmax.f32 %v2967, 0.0
      %v3170 = vmax.f32 %v2974, 0.0
      %v3171 = vmax.f32 %v2975, 0.0
      %v3244 = vcombine.low %v3074, %v3075
      %v3245 = vcombine.low %v3076, %v3077
      %v3247 = vunpack.c.l.s4 1983009808
      %v3248 = vunpack.c.0.s8 %v3247
      %v3249 = vlaneseq
      %v3250 = vshrl.u32 %v3249, 7
      %v3251 = vsub.s32 %v3248, %v3250
      %v3252 = vrot.slane %v3244, %v3251
      %v3254 = vunpack.c.l.s4 1983009808
      %v3255 = vunpack.c.0.s8 %v3254
      %v3256 = vlaneseq
      %v3257 = vshrl.u32 %v3256, 7
      %v3258 = vsub.s32 %v3255, %v3257
      %v3259 = vrot.slane %v3245, %v3258
      %v3260 = vcombine.low %v3252, %v3259
      %v3261 = vcombine.low %v3078, %v3079
      %v3263 = vunpack.c.l.s4 1983009808
      %v3264 = vunpack.c.0.s8 %v3263
      %v3265 = vlaneseq
      %v3266 = vshrl.u32 %v3265, 7
      %v3267 = vsub.s32 %v3264, %v3266
      %v3268 = vrot.slane %v3261, %v3267
      %v3269 = vcombine.low %v3081, %v3082
      %v3270 = vcombine.low %v3083, %v3084
      %v3272 = vunpack.c.l.s4 1983009808
      %v3273 = vunpack.c.0.s8 %v3272
      %v3274 = vlaneseq
      %v3275 = vshrl.u32 %v3274, 7
      %v3276 = vsub.s32 %v3273, %v3275
      %v3277 = vrot.slane %v3269, %v3276
      %v3279 = vunpack.c.l.s4 1983009808
      %v3280 = vunpack.c.0.s8 %v3279
      %v3281 = vlaneseq
      %v3282 = vshrl.u32 %v3281, 7
      %v3283 = vsub.s32 %v3280, %v3282
      %v3284 = vrot.slane %v3270, %v3283
      %v3285 = vcombine.low %v3277, %v3284
      %v3286 = vcombine.low %v3085, %v3086
      %v3288 = vunpack.c.l.s4 1983009808
      %v3289 = vunpack.c.0.s8 %v3288
      %v3290 = vlaneseq
      %v3291 = vshrl.u32 %v3290, 7
      %v3292 = vsub.s32 %v3289, %v3291
      %v3293 = vrot.slane %v3286, %v3292
      %v3294 = vcombine.low %v3088, %v3089
      %v3295 = vcombine.low %v3090, %v3091
      %v3297 = vunpack.c.l.s4 1983009808
      %v3298 = vunpack.c.0.s8 %v3297
      %v3299 = vlaneseq
      %v3300 = vshrl.u32 %v3299, 7
      %v3301 = vsub.s32 %v3298, %v3300
      %v3302 = vrot.slane %v3294, %v3301
      %v3304 = vunpack.c.l.s4 1983009808
      %v3305 = vunpack.c.0.s8 %v3304
      %v3306 = vlaneseq
      %v3307 = vshrl.u32 %v3306, 7
      %v3308 = vsub.s32 %v3305, %v3307
      %v3309 = vrot.slane %v3295, %v3308
      %v3310 = vcombine.low %v3302, %v3309
      %v3311 = vcombine.low %v3092, %v3093
      %v3313 = vunpack.c.l.s4 1983009808
      %v3314 = vunpack.c.0.s8 %v3313
      %v3315 = vlaneseq
      %v3316 = vshrl.u32 %v3315, 7
      %v3317 = vsub.s32 %v3314, %v3316
      %v3318 = vrot.slane %v3311, %v3317
      %v3319 = vcombine.low %v3095, %v3096
      %v3320 = vcombine.low %v3097, %v3098
      %v3322 = vunpack.c.l.s4 1983009808
      %v3323 = vunpack.c.0.s8 %v3322
      %v3324 = vlaneseq
      %v3325 = vshrl.u32 %v3324, 7
      %v3326 = vsub.s32 %v3323, %v3325
      %v3327 = vrot.slane %v3319, %v3326
      %v3329 = vunpack.c.l.s4 1983009808
      %v3330 = vunpack.c.0.s8 %v3329
      %v3331 = vlaneseq
      %v3332 = vshrl.u32 %v3331, 7
      %v3333 = vsub.s32 %v3330, %v3332
      %v3334 = vrot.slane %v3320, %v3333
      %v3335 = vcombine.low %v3327, %v3334
      %v3336 = vcombine.low %v3099, %v3100
      %v3338 = vunpack.c.l.s4 1983009808
      %v3339 = vunpack.c.0.s8 %v3338
      %v3340 = vlaneseq
      %v3341 = vshrl.u32 %v3340, 7
      %v3342 = vsub.s32 %v3339, %v3341
      %v3343 = vrot.slane %v3336, %v3342
      %v3344 = vcombine.low %v3102, %v3103
      %v3345 = vcombine.low %v3104, %v3105
      %v3347 = vunpack.c.l.s4 1983009808
      %v3348 = vunpack.c.0.s8 %v3347
      %v3349 = vlaneseq
      %v3350 = vshrl.u32 %v3349, 7
      %v3351 = vsub.s32 %v3348, %v3350
      %v3352 = vrot.slane %v3344, %v3351
      %v3354 = vunpack.c.l.s4 1983009808
      %v3355 = vunpack.c.0.s8 %v3354
      %v3356 = vlaneseq
      %v3357 = vshrl.u32 %v3356, 7
      %v3358 = vsub.s32 %v3355, %v3357
      %v3359 = vrot.slane %v3345, %v3358
      %v3360 = vcombine.low %v3352, %v3359
      %v3361 = vcombine.low %v3106, %v3107
      %v3363 = vunpack.c.l.s4 1983009808
      %v3364 = vunpack.c.0.s8 %v3363
      %v3365 = vlaneseq
      %v3366 = vshrl.u32 %v3365, 7
      %v3367 = vsub.s32 %v3364, %v3366
      %v3368 = vrot.slane %v3361, %v3367
      %v3369 = vcombine.low %v3109, %v3110
      %v3370 = vcombine.low %v3111, %v3112
      %v3372 = vunpack.c.l.s4 1983009808
      %v3373 = vunpack.c.0.s8 %v3372
      %v3374 = vlaneseq
      %v3375 = vshrl.u32 %v3374, 7
      %v3376 = vsub.s32 %v3373, %v3375
      %v3377 = vrot.slane %v3369, %v3376
      %v3379 = vunpack.c.l.s4 1983009808
      %v3380 = vunpack.c.0.s8 %v3379
      %v3381 = vlaneseq
      %v3382 = vshrl.u32 %v3381, 7
      %v3383 = vsub.s32 %v3380, %v3382
      %v3384 = vrot.slane %v3370, %v3383
      %v3385 = vcombine.low %v3377, %v3384
      %v3386 = vcombine.low %v3113, %v3114
      %v3388 = vunpack.c.l.s4 1983009808
      %v3389 = vunpack.c.0.s8 %v3388
      %v3390 = vlaneseq
      %v3391 = vshrl.u32 %v3390, 7
      %v3392 = vsub.s32 %v3389, %v3391
      %v3393 = vrot.slane %v3386, %v3392
      %v3394 = vcombine.low %v3116, %v3117
      %v3395 = vcombine.low %v3118, %v3119
      %v3397 = vunpack.c.l.s4 1983009808
      %v3398 = vunpack.c.0.s8 %v3397
      %v3399 = vlaneseq
      %v3400 = vshrl.u32 %v3399, 7
      %v3401 = vsub.s32 %v3398, %v3400
      %v3402 = vrot.slane %v3394, %v3401
      %v3404 = vunpack.c.l.s4 1983009808
      %v3405 = vunpack.c.0.s8 %v3404
      %v3406 = vlaneseq
      %v3407 = vshrl.u32 %v3406, 7
      %v3408 = vsub.s32 %v3405, %v3407
      %v3409 = vrot.slane %v3395, %v3408
      %v3410 = vcombine.low %v3402, %v3409
      %v3411 = vcombine.low %v3120, %v3121
      %v3413 = vunpack.c.l.s4 1983009808
      %v3414 = vunpack.c.0.s8 %v3413
      %v3415 = vlaneseq
      %v3416 = vshrl.u32 %v3415, 7
      %v3417 = vsub.s32 %v3414, %v3416
      %v3418 = vrot.slane %v3411, %v3417
      %v3419 = vcombine.low %v3123, %v3124
      %v3420 = vcombine.low %v3125, %v3126
      %v3422 = vunpack.c.l.s4 1983009808
      %v3423 = vunpack.c.0.s8 %v3422
      %v3424 = vlaneseq
      %v3425 = vshrl.u32 %v3424, 7
      %v3426 = vsub.s32 %v3423, %v3425
      %v3427 = vrot.slane %v3419, %v3426
      %v3429 = vunpack.c.l.s4 1983009808
      %v3430 = vunpack.c.0.s8 %v3429
      %v3431 = vlaneseq
      %v3432 = vshrl.u32 %v3431, 7
      %v3433 = vsub.s32 %v3430, %v3432
      %v3434 = vrot.slane %v3420, %v3433
      %v3435 = vcombine.low %v3427, %v3434
      %v3436 = vcombine.low %v3127, %v3128
      %v3438 = vunpack.c.l.s4 1983009808
      %v3439 = vunpack.c.0.s8 %v3438
      %v3440 = vlaneseq
      %v3441 = vshrl.u32 %v3440, 7
      %v3442 = vsub.s32 %v3439, %v3441
      %v3443 = vrot.slane %v3436, %v3442
      %v3444 = vcombine.low %v3130, %v3131
      %v3445 = vcombine.low %v3132, %v3133
      %v3447 = vunpack.c.l.s4 1983009808
      %v3448 = vunpack.c.0.s8 %v3447
      %v3449 = vlaneseq
      %v3450 = vshrl.u32 %v3449, 7
      %v3451 = vsub.s32 %v3448, %v3450
      %v3452 = vrot.slane %v3444, %v3451
      %v3454 = vunpack.c.l.s4 1983009808
      %v3455 = vunpack.c.0.s8 %v3454
      %v3456 = vlaneseq
      %v3457 = vshrl.u32 %v3456, 7
      %v3458 = vsub.s32 %v3455, %v3457
      %v3459 = vrot.slane %v3445, %v3458
      %v3460 = vcombine.low %v3452, %v3459
      %v3461 = vcombine.low %v3134, %v3135
      %v3463 = vunpack.c.l.s4 1983009808
      %v3464 = vunpack.c.0.s8 %v3463
      %v3465 = vlaneseq
      %v3466 = vshrl.u32 %v3465, 7
      %v3467 = vsub.s32 %v3464, %v3466
      %v3468 = vrot.slane %v3461, %v3467
      %v3469 = vcombine.low %v3137, %v3138
      %v3470 = vcombine.low %v3139, %v3140
      %v3472 = vunpack.c.l.s4 1983009808
      %v3473 = vunpack.c.0.s8 %v3472
      %v3474 = vlaneseq
      %v3475 = vshrl.u32 %v3474, 7
      %v3476 = vsub.s32 %v3473, %v3475
      %v3477 = vrot.slane %v3469, %v3476
      %v3479 = vunpack.c.l.s4 1983009808
      %v3480 = vunpack.c.0.s8 %v3479
      %v3481 = vlaneseq
      %v3482 = vshrl.u32 %v3481, 7
      %v3483 = vsub.s32 %v3480, %v3482
      %v3484 = vrot.slane %v3470, %v3483
      %v3485 = vcombine.low %v3477, %v3484
      %v3486 = vcombine.low %v3141, %v3142
      %v3488 = vunpack.c.l.s4 1983009808
      %v3489 = vunpack.c.0.s8 %v3488
      %v3490 = vlaneseq
      %v3491 = vshrl.u32 %v3490, 7
      %v3492 = vsub.s32 %v3489, %v3491
      %v3493 = vrot.slane %v3486, %v3492
      %v3494 = vcombine.low %v3144, %v3145
      %v3495 = vcombine.low %v3146, %v3147
      %v3497 = vunpack.c.l.s4 1983009808
      %v3498 = vunpack.c.0.s8 %v3497
      %v3499 = vlaneseq
      %v3500 = vshrl.u32 %v3499, 7
      %v3501 = vsub.s32 %v3498, %v3500
      %v3502 = vrot.slane %v3494, %v3501
      %v3504 = vunpack.c.l.s4 1983009808
      %v3505 = vunpack.c.0.s8 %v3504
      %v3506 = vlaneseq
      %v3507 = vshrl.u32 %v3506, 7
      %v3508 = vsub.s32 %v3505, %v3507
      %v3509 = vrot.slane %v3495, %v3508
      %v3510 = vcombine.low %v3502, %v3509
      %v3511 = vcombine.low %v3148, %v3149
      %v3513 = vunpack.c.l.s4 1983009808
      %v3514 = vunpack.c.0.s8 %v3513
      %v3515 = vlaneseq
      %v3516 = vshrl.u32 %v3515, 7
      %v3517 = vsub.s32 %v3514, %v3516
      %v3518 = vrot.slane %v3511, %v3517
      %v3519 = vcombine.low %v3151, %v3152
      %v3520 = vcombine.low %v3153, %v3154
      %v3522 = vunpack.c.l.s4 1983009808
      %v3523 = vunpack.c.0.s8 %v3522
      %v3524 = vlaneseq
      %v3525 = vshrl.u32 %v3524, 7
      %v3526 = vsub.s32 %v3523, %v3525
      %v3527 = vrot.slane %v3519, %v3526
      %v3529 = vunpack.c.l.s4 1983009808
      %v3530 = vunpack.c.0.s8 %v3529
      %v3531 = vlaneseq
      %v3532 = vshrl.u32 %v3531, 7
      %v3533 = vsub.s32 %v3530, %v3532
      %v3534 = vrot.slane %v3520, %v3533
      %v3535 = vcombine.low %v3527, %v3534
      %v3536 = vcombine.low %v3155, %v3156
      %v3538 = vunpack.c.l.s4 1983009808
      %v3539 = vunpack.c.0.s8 %v3538
      %v3540 = vlaneseq
      %v3541 = vshrl.u32 %v3540, 7
      %v3542 = vsub.s32 %v3539, %v3541
      %v3543 = vrot.slane %v3536, %v3542
      %v3581 = vunpack.c.l.s4 1983009808
      %v3582 = vunpack.c.0.s8 %v3581
      %v3583 = vlaneseq
      %v3584 = vshrl.u32 %v3583, 7
      %v3585 = vsub.s32 %v3582, %v3584
      %v3586 = vrot.slane %v3080, %v3585
      %v3587 = vcombine.low %v3268, %v3586
      %v3589 = vunpack.c.l.s4 1983009808
      %v3590 = vunpack.c.0.s8 %v3589
      %v3591 = vlaneseq
      %v3592 = vshrl.u32 %v3591, 7
      %v3593 = vsub.s32 %v3590, %v3592
      %v3594 = vrot.slane %v3087, %v3593
      %v3595 = vcombine.low %v3293, %v3594
      %v3597 = vunpack.c.l.s4 1983009808
      %v3598 = vunpack.c.0.s8 %v3597
      %v3599 = vlaneseq
      %v3600 = vshrl.u32 %v3599, 7
      %v3601 = vsub.s32 %v3598, %v3600
      %v3602 = vrot.slane %v3094, %v3601
      %v3603 = vcombine.low %v3318, %v3602
      %v3605 = vunpack.c.l.s4 1983009808
      %v3606 = vunpack.c.0.s8 %v3605
      %v3607 = vlaneseq
      %v3608 = vshrl.u32 %v3607, 7
      %v3609 = vsub.s32 %v3606, %v3608
      %v3610 = vrot.slane %v3101, %v3609
      %v3611 = vcombine.low %v3343, %v3610
      %v3613 = vunpack.c.l.s4 1983009808
      %v3614 = vunpack.c.0.s8 %v3613
      %v3615 = vlaneseq
      %v3616 = vshrl.u32 %v3615, 7
      %v3617 = vsub.s32 %v3614, %v3616
      %v3618 = vrot.slane %v3108, %v3617
      %v3619 = vcombine.low %v3368, %v3618
      %v3621 = vunpack.c.l.s4 1983009808
      %v3622 = vunpack.c.0.s8 %v3621
      %v3623 = vlaneseq
      %v3624 = vshrl.u32 %v3623, 7
      %v3625 = vsub.s32 %v3622, %v3624
      %v3626 = vrot.slane %v3115, %v3625
      %v3627 = vcombine.low %v3393, %v3626
      %v3629 = vunpack.c.l.s4 1983009808
      %v3630 = vunpack.c.0.s8 %v3629
      %v3631 = vlaneseq
      %v3632 = vshrl.u32 %v3631, 7
      %v3633 = vsub.s32 %v3630, %v3632
      %v3634 = vrot.slane %v3122, %v3633
      %v3635 = vcombine.low %v3418, %v3634
      %v3637 = vunpack.c.l.s4 1983009808
      %v3638 = vunpack.c.0.s8 %v3637
      %v3639 = vlaneseq
      %v3640 = vshrl.u32 %v3639, 7
      %v3641 = vsub.s32 %v3638, %v3640
      %v3642 = vrot.slane %v3129, %v3641
      %v3643 = vcombine.low %v3443, %v3642
      %v3645 = vunpack.c.l.s4 1983009808
      %v3646 = vunpack.c.0.s8 %v3645
      %v3647 = vlaneseq
      %v3648 = vshrl.u32 %v3647, 7
      %v3649 = vsub.s32 %v3646, %v3648
      %v3650 = vrot.slane %v3136, %v3649
      %v3651 = vcombine.low %v3468, %v3650
      %v3653 = vunpack.c.l.s4 1983009808
      %v3654 = vunpack.c.0.s8 %v3653
      %v3655 = vlaneseq
      %v3656 = vshrl.u32 %v3655, 7
      %v3657 = vsub.s32 %v3654, %v3656
      %v3658 = vrot.slane %v3143, %v3657
      %v3659 = vcombine.low %v3493, %v3658
      %v3661 = vunpack.c.l.s4 1983009808
      %v3662 = vunpack.c.0.s8 %v3661
      %v3663 = vlaneseq
      %v3664 = vshrl.u32 %v3663, 7
      %v3665 = vsub.s32 %v3662, %v3664
      %v3666 = vrot.slane %v3150, %v3665
      %v3667 = vcombine.low %v3518, %v3666
      %v3669 = vunpack.c.l.s4 1983009808
      %v3670 = vunpack.c.0.s8 %v3669
      %v3671 = vlaneseq
      %v3672 = vshrl.u32 %v3671, 7
      %v3673 = vsub.s32 %v3670, %v3672
      %v3674 = vrot.slane %v3157, %v3673
      %v3675 = vcombine.low %v3543, %v3674
      %v3676 = vrot.slane %v3260, 1
      %v3677 = vrot.slane %v3587, 1
      %v3678 = vsel %vm301, %v3676, %v3677
      %v3679 = vrot.slane %v3285, 1
      %v3680 = vrot.slane %v3595, 1
      %v3681 = vsel %vm301, %v3679, %v3680
      %v3682 = vrot.slane %v3310, 1
      %v3683 = vrot.slane %v3603, 1
      %v3684 = vsel %vm301, %v3682, %v3683
      %v3685 = vrot.slane %v3335, 1
      %v3686 = vrot.slane %v3611, 1
      %v3687 = vsel %vm301, %v3685, %v3686
      %v3688 = vrot.slane %v3360, 1
      %v3689 = vrot.slane %v3619, 1
      %v3690 = vsel %vm301, %v3688, %v3689
      %v3691 = vrot.slane %v3385, 1
      %v3692 = vrot.slane %v3627, 1
      %v3693 = vsel %vm301, %v3691, %v3692
      %v3694 = vrot.slane %v3410, 1
      %v3695 = vrot.slane %v3635, 1
      %v3696 = vsel %vm301, %v3694, %v3695
      %v3697 = vrot.slane %v3435, 1
      %v3698 = vrot.slane %v3643, 1
      %v3699 = vsel %vm301, %v3697, %v3698
      %v3700 = vrot.slane %v3460, 1
      %v3701 = vrot.slane %v3651, 1
      %v3702 = vsel %vm301, %v3700, %v3701
      %v3703 = vrot.slane %v3485, 1
      %v3704 = vrot.slane %v3659, 1
      %v3705 = vsel %vm301, %v3703, %v3704
      %v3706 = vrot.slane %v3510, 1
      %v3707 = vrot.slane %v3667, 1
      %v3708 = vsel %vm301, %v3706, %v3707
      %v3709 = vrot.slane %v3535, 1
      %v3710 = vrot.slane %v3675, 1
      %v3711 = vsel %vm301, %v3709, %v3710
      %3712 = vrot.lane.b32.xlu0 %v3678, 8
      %v3713 = vpop.permute.xlu0 %3712
      %3714 = vrot.lane.b32.xlu0 %v3677, 8
      %v3715 = vpop.permute.xlu0 %3714
      %3716 = vrot.lane.b32.xlu0 %v3681, 8
      %v3717 = vpop.permute.xlu0 %3716
      %3718 = vrot.lane.b32.xlu0 %v3680, 8
      %v3719 = vpop.permute.xlu0 %3718
      %3720 = vrot.lane.b32.xlu0 %v3684, 8
      %v3721 = vpop.permute.xlu0 %3720
      %3722 = vrot.lane.b32.xlu0 %v3683, 8
      %v3723 = vpop.permute.xlu0 %3722
      %3724 = vrot.lane.b32.xlu0 %v3687, 8
      %v3725 = vpop.permute.xlu0 %3724
      %3726 = vrot.lane.b32.xlu0 %v3686, 8
      %v3727 = vpop.permute.xlu0 %3726
      %3728 = vrot.lane.b32.xlu0 %v3690, 8
      %v3729 = vpop.permute.xlu0 %3728
      %3730 = vrot.lane.b32.xlu0 %v3689, 8
      %v3731 = vpop.permute.xlu0 %3730
      %3732 = vrot.lane.b32.xlu0 %v3693, 8
      %v3733 = vpop.permute.xlu0 %3732
      %3734 = vrot.lane.b32.xlu0 %v3692, 8
      %v3735 = vpop.permute.xlu0 %3734
      %3736 = vrot.lane.b32.xlu0 %v3696, 8
      %v3737 = vpop.permute.xlu0 %3736
      %3738 = vrot.lane.b32.xlu0 %v3695, 8
      %v3739 = vpop.permute.xlu0 %3738
      %3740 = vrot.lane.b32.xlu0 %v3699, 8
      %v3741 = vpop.permute.xlu0 %3740
      %3742 = vrot.lane.b32.xlu0 %v3698, 8
      %v3743 = vpop.permute.xlu0 %3742
      %3744 = vrot.lane.b32.xlu0 %v3702, 8
      %v3745 = vpop.permute.xlu0 %3744
      %3746 = vrot.lane.b32.xlu0 %v3701, 8
      %v3747 = vpop.permute.xlu0 %3746
      %3748 = vrot.lane.b32.xlu0 %v3705, 8
      %v3749 = vpop.permute.xlu0 %3748
      %3750 = vrot.lane.b32.xlu0 %v3704, 8
      %v3751 = vpop.permute.xlu0 %3750
      %3752 = vrot.lane.b32.xlu0 %v3708, 8
      %v3753 = vpop.permute.xlu0 %3752
      %3754 = vrot.lane.b32.xlu0 %v3707, 8
      %v3755 = vpop.permute.xlu0 %3754
      %3756 = vrot.lane.b32.xlu0 %v3711, 8
      %v3757 = vpop.permute.xlu0 %3756
      %3758 = vrot.lane.b32.xlu0 %v3710, 8
      %v3759 = vpop.permute.xlu0 %3758
      %v3784 = vcombine.low %v3075, %v3076
      %v3785 = vcombine.low %v3077, %v3078
      %v3787 = vunpack.c.l.s4 1983009808
      %v3788 = vunpack.c.0.s8 %v3787
      %v3789 = vlaneseq
      %v3790 = vshrl.u32 %v3789, 7
      %v3791 = vsub.s32 %v3788, %v3790
      %v3792 = vrot.slane %v3784, %v3791
      %v3794 = vunpack.c.l.s4 1983009808
      %v3795 = vunpack.c.0.s8 %v3794
      %v3796 = vlaneseq
      %v3797 = vshrl.u32 %v3796, 7
      %v3798 = vsub.s32 %v3795, %v3797
      %v3799 = vrot.slane %v3785, %v3798
      %v3800 = vcombine.low %v3792, %v3799
      %v3801 = vcombine.low %v3079, %v3080
      %v3803 = vunpack.c.l.s4 1983009808
      %v3804 = vunpack.c.0.s8 %v3803
      %v3805 = vlaneseq
      %v3806 = vshrl.u32 %v3805, 7
      %v3807 = vsub.s32 %v3804, %v3806
      %v3808 = vrot.slane %v3801, %v3807
      %v3809 = vcombine.low %v3082, %v3083
      %v3810 = vcombine.low %v3084, %v3085
      %v3812 = vunpack.c.l.s4 1983009808
      %v3813 = vunpack.c.0.s8 %v3812
      %v3814 = vlaneseq
      %v3815 = vshrl.u32 %v3814, 7
      %v3816 = vsub.s32 %v3813, %v3815
      %v3817 = vrot.slane %v3809, %v3816
      %v3819 = vunpack.c.l.s4 1983009808
      %v3820 = vunpack.c.0.s8 %v3819
      %v3821 = vlaneseq
      %v3822 = vshrl.u32 %v3821, 7
      %v3823 = vsub.s32 %v3820, %v3822
      %v3824 = vrot.slane %v3810, %v3823
      %v3825 = vcombine.low %v3817, %v3824
      %v3826 = vcombine.low %v3086, %v3087
      %v3828 = vunpack.c.l.s4 1983009808
      %v3829 = vunpack.c.0.s8 %v3828
      %v3830 = vlaneseq
      %v3831 = vshrl.u32 %v3830, 7
      %v3832 = vsub.s32 %v3829, %v3831
      %v3833 = vrot.slane %v3826, %v3832
      %v3834 = vcombine.low %v3089, %v3090
      %v3835 = vcombine.low %v3091, %v3092
      %v3837 = vunpack.c.l.s4 1983009808
      %v3838 = vunpack.c.0.s8 %v3837
      %v3839 = vlaneseq
      %v3840 = vshrl.u32 %v3839, 7
      %v3841 = vsub.s32 %v3838, %v3840
      %v3842 = vrot.slane %v3834, %v3841
      %v3844 = vunpack.c.l.s4 1983009808
      %v3845 = vunpack.c.0.s8 %v3844
      %v3846 = vlaneseq
      %v3847 = vshrl.u32 %v3846, 7
      %v3848 = vsub.s32 %v3845, %v3847
      %v3849 = vrot.slane %v3835, %v3848
      %v3850 = vcombine.low %v3842, %v3849
      %v3851 = vcombine.low %v3093, %v3094
      %v3853 = vunpack.c.l.s4 1983009808
      %v3854 = vunpack.c.0.s8 %v3853
      %v3855 = vlaneseq
      %v3856 = vshrl.u32 %v3855, 7
      %v3857 = vsub.s32 %v3854, %v3856
      %v3858 = vrot.slane %v3851, %v3857
      %v3859 = vcombine.low %v3096, %v3097
      %v3860 = vcombine.low %v3098, %v3099
      %v3862 = vunpack.c.l.s4 1983009808
      %v3863 = vunpack.c.0.s8 %v3862
      %v3864 = vlaneseq
      %v3865 = vshrl.u32 %v3864, 7
      %v3866 = vsub.s32 %v3863, %v3865
      %v3867 = vrot.slane %v3859, %v3866
      %v3869 = vunpack.c.l.s4 1983009808
      %v3870 = vunpack.c.0.s8 %v3869
      %v3871 = vlaneseq
      %v3872 = vshrl.u32 %v3871, 7
      %v3873 = vsub.s32 %v3870, %v3872
      %v3874 = vrot.slane %v3860, %v3873
      %v3875 = vcombine.low %v3867, %v3874
      %v3876 = vcombine.low %v3100, %v3101
      %v3878 = vunpack.c.l.s4 1983009808
      %v3879 = vunpack.c.0.s8 %v3878
      %v3880 = vlaneseq
      %v3881 = vshrl.u32 %v3880, 7
      %v3882 = vsub.s32 %v3879, %v3881
      %v3883 = vrot.slane %v3876, %v3882
      %v3884 = vcombine.low %v3103, %v3104
      %v3885 = vcombine.low %v3105, %v3106
      %v3887 = vunpack.c.l.s4 1983009808
      %v3888 = vunpack.c.0.s8 %v3887
      %v3889 = vlaneseq
      %v3890 = vshrl.u32 %v3889, 7
      %v3891 = vsub.s32 %v3888, %v3890
      %v3892 = vrot.slane %v3884, %v3891
      %v3894 = vunpack.c.l.s4 1983009808
      %v3895 = vunpack.c.0.s8 %v3894
      %v3896 = vlaneseq
      %v3897 = vshrl.u32 %v3896, 7
      %v3898 = vsub.s32 %v3895, %v3897
      %v3899 = vrot.slane %v3885, %v3898
      %v3900 = vcombine.low %v3892, %v3899
      %v3901 = vcombine.low %v3107, %v3108
      %v3903 = vunpack.c.l.s4 1983009808
      %v3904 = vunpack.c.0.s8 %v3903
      %v3905 = vlaneseq
      %v3906 = vshrl.u32 %v3905, 7
      %v3907 = vsub.s32 %v3904, %v3906
      %v3908 = vrot.slane %v3901, %v3907
      %v3909 = vcombine.low %v3110, %v3111
      %v3910 = vcombine.low %v3112, %v3113
      %v3912 = vunpack.c.l.s4 1983009808
      %v3913 = vunpack.c.0.s8 %v3912
      %v3914 = vlaneseq
      %v3915 = vshrl.u32 %v3914, 7
      %v3916 = vsub.s32 %v3913, %v3915
      %v3917 = vrot.slane %v3909, %v3916
      %v3919 = vunpack.c.l.s4 1983009808
      %v3920 = vunpack.c.0.s8 %v3919
      %v3921 = vlaneseq
      %v3922 = vshrl.u32 %v3921, 7
      %v3923 = vsub.s32 %v3920, %v3922
      %v3924 = vrot.slane %v3910, %v3923
      %v3925 = vcombine.low %v3917, %v3924
      %v3926 = vcombine.low %v3114, %v3115
      %v3928 = vunpack.c.l.s4 1983009808
      %v3929 = vunpack.c.0.s8 %v3928
      %v3930 = vlaneseq
      %v3931 = vshrl.u32 %v3930, 7
      %v3932 = vsub.s32 %v3929, %v3931
      %v3933 = vrot.slane %v3926, %v3932
      %v3934 = vcombine.low %v3117, %v3118
      %v3935 = vcombine.low %v3119, %v3120
      %v3937 = vunpack.c.l.s4 1983009808
      %v3938 = vunpack.c.0.s8 %v3937
      %v3939 = vlaneseq
      %v3940 = vshrl.u32 %v3939, 7
      %v3941 = vsub.s32 %v3938, %v3940
      %v3942 = vrot.slane %v3934, %v3941
      %v3944 = vunpack.c.l.s4 1983009808
      %v3945 = vunpack.c.0.s8 %v3944
      %v3946 = vlaneseq
      %v3947 = vshrl.u32 %v3946, 7
      %v3948 = vsub.s32 %v3945, %v3947
      %v3949 = vrot.slane %v3935, %v3948
      %v3950 = vcombine.low %v3942, %v3949
      %v3951 = vcombine.low %v3121, %v3122
      %v3953 = vunpack.c.l.s4 1983009808
      %v3954 = vunpack.c.0.s8 %v3953
      %v3955 = vlaneseq
      %v3956 = vshrl.u32 %v3955, 7
      %v3957 = vsub.s32 %v3954, %v3956
      %v3958 = vrot.slane %v3951, %v3957
      %v3959 = vcombine.low %v3124, %v3125
      %v3960 = vcombine.low %v3126, %v3127
      %v3962 = vunpack.c.l.s4 1983009808
      %v3963 = vunpack.c.0.s8 %v3962
      %v3964 = vlaneseq
      %v3965 = vshrl.u32 %v3964, 7
      %v3966 = vsub.s32 %v3963, %v3965
      %v3967 = vrot.slane %v3959, %v3966
      %v3969 = vunpack.c.l.s4 1983009808
      %v3970 = vunpack.c.0.s8 %v3969
      %v3971 = vlaneseq
      %v3972 = vshrl.u32 %v3971, 7
      %v3973 = vsub.s32 %v3970, %v3972
      %v3974 = vrot.slane %v3960, %v3973
      %v3975 = vcombine.low %v3967, %v3974
      %v3976 = vcombine.low %v3128, %v3129
      %v3978 = vunpack.c.l.s4 1983009808
      %v3979 = vunpack.c.0.s8 %v3978
      %v3980 = vlaneseq
      %v3981 = vshrl.u32 %v3980, 7
      %v3982 = vsub.s32 %v3979, %v3981
      %v3983 = vrot.slane %v3976, %v3982
      %v3984 = vcombine.low %v3131, %v3132
      %v3985 = vcombine.low %v3133, %v3134
      %v3987 = vunpack.c.l.s4 1983009808
      %v3988 = vunpack.c.0.s8 %v3987
      %v3989 = vlaneseq
      %v3990 = vshrl.u32 %v3989, 7
      %v3991 = vsub.s32 %v3988, %v3990
      %v3992 = vrot.slane %v3984, %v3991
      %v3994 = vunpack.c.l.s4 1983009808
      %v3995 = vunpack.c.0.s8 %v3994
      %v3996 = vlaneseq
      %v3997 = vshrl.u32 %v3996, 7
      %v3998 = vsub.s32 %v3995, %v3997
      %v3999 = vrot.slane %v3985, %v3998
      %v4000 = vcombine.low %v3992, %v3999
      %v4001 = vcombine.low %v3135, %v3136
      %v4003 = vunpack.c.l.s4 1983009808
      %v4004 = vunpack.c.0.s8 %v4003
      %v4005 = vlaneseq
      %v4006 = vshrl.u32 %v4005, 7
      %v4007 = vsub.s32 %v4004, %v4006
      %v4008 = vrot.slane %v4001, %v4007
      %v4009 = vcombine.low %v3138, %v3139
      %v4010 = vcombine.low %v3140, %v3141
      %v4012 = vunpack.c.l.s4 1983009808
      %v4013 = vunpack.c.0.s8 %v4012
      %v4014 = vlaneseq
      %v4015 = vshrl.u32 %v4014, 7
      %v4016 = vsub.s32 %v4013, %v4015
      %v4017 = vrot.slane %v4009, %v4016
      %v4019 = vunpack.c.l.s4 1983009808
      %v4020 = vunpack.c.0.s8 %v4019
      %v4021 = vlaneseq
      %v4022 = vshrl.u32 %v4021, 7
      %v4023 = vsub.s32 %v4020, %v4022
      %v4024 = vrot.slane %v4010, %v4023
      %v4025 = vcombine.low %v4017, %v4024
      %v4026 = vcombine.low %v3142, %v3143
      %v4028 = vunpack.c.l.s4 1983009808
      %v4029 = vunpack.c.0.s8 %v4028
      %v4030 = vlaneseq
      %v4031 = vshrl.u32 %v4030, 7
      %v4032 = vsub.s32 %v4029, %v4031
      %v4033 = vrot.slane %v4026, %v4032
      %v4034 = vcombine.low %v3145, %v3146
      %v4035 = vcombine.low %v3147, %v3148
      %v4037 = vunpack.c.l.s4 1983009808
      %v4038 = vunpack.c.0.s8 %v4037
      %v4039 = vlaneseq
      %v4040 = vshrl.u32 %v4039, 7
      %v4041 = vsub.s32 %v4038, %v4040
      %v4042 = vrot.slane %v4034, %v4041
      %v4044 = vunpack.c.l.s4 1983009808
      %v4045 = vunpack.c.0.s8 %v4044
      %v4046 = vlaneseq
      %v4047 = vshrl.u32 %v4046, 7
      %v4048 = vsub.s32 %v4045, %v4047
      %v4049 = vrot.slane %v4035, %v4048
      %v4050 = vcombine.low %v4042, %v4049
      %v4051 = vcombine.low %v3149, %v3150
      %v4053 = vunpack.c.l.s4 1983009808
      %v4054 = vunpack.c.0.s8 %v4053
      %v4055 = vlaneseq
      %v4056 = vshrl.u32 %v4055, 7
      %v4057 = vsub.s32 %v4054, %v4056
      %v4058 = vrot.slane %v4051, %v4057
      %v4059 = vcombine.low %v3152, %v3153
      %v4060 = vcombine.low %v3154, %v3155
      %v4062 = vunpack.c.l.s4 1983009808
      %v4063 = vunpack.c.0.s8 %v4062
      %v4064 = vlaneseq
      %v4065 = vshrl.u32 %v4064, 7
      %v4066 = vsub.s32 %v4063, %v4065
      %v4067 = vrot.slane %v4059, %v4066
      %v4069 = vunpack.c.l.s4 1983009808
      %v4070 = vunpack.c.0.s8 %v4069
      %v4071 = vlaneseq
      %v4072 = vshrl.u32 %v4071, 7
      %v4073 = vsub.s32 %v4070, %v4072
      %v4074 = vrot.slane %v4060, %v4073
      %v4075 = vcombine.low %v4067, %v4074
      %v4076 = vcombine.low %v3156, %v3157
      %v4078 = vunpack.c.l.s4 1983009808
      %v4079 = vunpack.c.0.s8 %v4078
      %v4080 = vlaneseq
      %v4081 = vshrl.u32 %v4080, 7
      %v4082 = vsub.s32 %v4079, %v4081
      %v4083 = vrot.slane %v4076, %v4082
      %4084 = vrot.lane.b32.xlu0 %v3800, 16
      %v4085 = vpop.permute.xlu0 %4084
      %4086 = vrot.lane.b32.xlu0 %v3808, 16
      %v4087 = vpop.permute.xlu0 %4086
      %4088 = vrot.lane.b32.xlu0 %v3825, 16
      %v4089 = vpop.permute.xlu0 %4088
      %4090 = vrot.lane.b32.xlu0 %v3833, 16
      %v4091 = vpop.permute.xlu0 %4090
      %4092 = vrot.lane.b32.xlu0 %v3850, 16
      %v4093 = vpop.permute.xlu0 %4092
      %4094 = vrot.lane.b32.xlu0 %v3858, 16
      %v4095 = vpop.permute.xlu0 %4094
      %4096 = vrot.lane.b32.xlu0 %v3875, 16
      %v4097 = vpop.permute.xlu0 %4096
      %4098 = vrot.lane.b32.xlu0 %v3883, 16
      %v4099 = vpop.permute.xlu0 %4098
      %4100 = vrot.lane.b32.xlu0 %v3900, 16
      %v4101 = vpop.permute.xlu0 %4100
      %4102 = vrot.lane.b32.xlu0 %v3908, 16
      %v4103 = vpop.permute.xlu0 %4102
      %4104 = vrot.lane.b32.xlu0 %v3925, 16
      %v4105 = vpop.permute.xlu0 %4104
      %4106 = vrot.lane.b32.xlu0 %v3933, 16
      %v4107 = vpop.permute.xlu0 %4106
      %4108 = vrot.lane.b32.xlu0 %v3950, 16
      %v4109 = vpop.permute.xlu0 %4108
      %4110 = vrot.lane.b32.xlu0 %v3958, 16
      %v4111 = vpop.permute.xlu0 %4110
      %4112 = vrot.lane.b32.xlu0 %v3975, 16
      %v4113 = vpop.permute.xlu0 %4112
      %4114 = vrot.lane.b32.xlu0 %v3983, 16
      %v4115 = vpop.permute.xlu0 %4114
      %4116 = vrot.lane.b32.xlu0 %v4000, 16
      %v4117 = vpop.permute.xlu0 %4116
      %4118 = vrot.lane.b32.xlu0 %v4008, 16
      %v4119 = vpop.permute.xlu0 %4118
      %4120 = vrot.lane.b32.xlu0 %v4025, 16
      %v4121 = vpop.permute.xlu0 %4120
      %4122 = vrot.lane.b32.xlu0 %v4033, 16
      %v4123 = vpop.permute.xlu0 %4122
      %4124 = vrot.lane.b32.xlu0 %v4050, 16
      %v4125 = vpop.permute.xlu0 %4124
      %4126 = vrot.lane.b32.xlu0 %v4058, 16
      %v4127 = vpop.permute.xlu0 %4126
      %4128 = vrot.lane.b32.xlu0 %v4075, 16
      %v4129 = vpop.permute.xlu0 %4128
      %4130 = vrot.lane.b32.xlu0 %v4083, 16
      %v4131 = vpop.permute.xlu0 %4130
      %v4162 = vcombine.low %v3158, %v3159
      %v4163 = vcombine.low %v3160, %v3161
      %v4165 = vunpack.c.l.s4 1983009808
      %v4166 = vunpack.c.0.s8 %v4165
      %v4167 = vlaneseq
      %v4168 = vshrl.u32 %v4167, 7
      %v4169 = vsub.s32 %v4166, %v4168
      %v4170 = vrot.slane %v4162, %v4169
      %v4172 = vunpack.c.l.s4 1983009808
      %v4173 = vunpack.c.0.s8 %v4172
      %v4174 = vlaneseq
      %v4175 = vshrl.u32 %v4174, 7
      %v4176 = vsub.s32 %v4173, %v4175
      %v4177 = vrot.slane %v4163, %v4176
      %v4178 = vcombine.low %v4170, %v4177
      %v4179 = vcombine.low %v3162, %v3163
      %v4181 = vunpack.c.l.s4 1983009808
      %v4182 = vunpack.c.0.s8 %v4181
      %v4183 = vlaneseq
      %v4184 = vshrl.u32 %v4183, 7
      %v4185 = vsub.s32 %v4182, %v4184
      %v4186 = vrot.slane %v4179, %v4185
      %4187 = vrot.lane.b32.xlu0 %v3285, 24
      %v4188 = vpop.permute.xlu0 %4187
      %4189 = vrot.lane.b32.xlu0 %v3293, 24
      %v4190 = vpop.permute.xlu0 %4189
      %4191 = vrot.lane.b32.xlu0 %v3310, 24
      %v4192 = vpop.permute.xlu0 %4191
      %4193 = vrot.lane.b32.xlu0 %v3318, 24
      %v4194 = vpop.permute.xlu0 %4193
      %4195 = vrot.lane.b32.xlu0 %v3335, 24
      %v4196 = vpop.permute.xlu0 %4195
      %4197 = vrot.lane.b32.xlu0 %v3343, 24
      %v4198 = vpop.permute.xlu0 %4197
      %4199 = vrot.lane.b32.xlu0 %v3360, 24
      %v4200 = vpop.permute.xlu0 %4199
      %4201 = vrot.lane.b32.xlu0 %v3368, 24
      %v4202 = vpop.permute.xlu0 %4201
      %4203 = vrot.lane.b32.xlu0 %v3385, 24
      %v4204 = vpop.permute.xlu0 %4203
      %4205 = vrot.lane.b32.xlu0 %v3393, 24
      %v4206 = vpop.permute.xlu0 %4205
      %4207 = vrot.lane.b32.xlu0 %v3410, 24
      %v4208 = vpop.permute.xlu0 %4207
      %4209 = vrot.lane.b32.xlu0 %v3418, 24
      %v4210 = vpop.permute.xlu0 %4209
      %4211 = vrot.lane.b32.xlu0 %v3435, 24
      %v4212 = vpop.permute.xlu0 %4211
      %4213 = vrot.lane.b32.xlu0 %v3443, 24
      %v4214 = vpop.permute.xlu0 %4213
      %4215 = vrot.lane.b32.xlu0 %v3460, 24
      %v4216 = vpop.permute.xlu0 %4215
      %4217 = vrot.lane.b32.xlu0 %v3468, 24
      %v4218 = vpop.permute.xlu0 %4217
      %4219 = vrot.lane.b32.xlu0 %v3485, 24
      %v4220 = vpop.permute.xlu0 %4219
      %4221 = vrot.lane.b32.xlu0 %v3493, 24
      %v4222 = vpop.permute.xlu0 %4221
      %4223 = vrot.lane.b32.xlu0 %v3510, 24
      %v4224 = vpop.permute.xlu0 %4223
      %4225 = vrot.lane.b32.xlu0 %v3518, 24
      %v4226 = vpop.permute.xlu0 %4225
      %4227 = vrot.lane.b32.xlu0 %v3535, 24
      %v4228 = vpop.permute.xlu0 %4227
      %4229 = vrot.lane.b32.xlu0 %v3543, 24
      %v4230 = vpop.permute.xlu0 %4229
      %4231 = vrot.lane.b32.xlu0 %v4178, 24
      %v4232 = vpop.permute.xlu0 %4231
      %4233 = vrot.lane.b32.xlu0 %v4186, 24
      %v4234 = vpop.permute.xlu0 %4233
      %v4261 = vunpack.c.l.s4 1983009808
      %v4262 = vunpack.c.0.s8 %v4261
      %v4263 = vlaneseq
      %v4264 = vshrl.u32 %v4263, 7
      %v4265 = vsub.s32 %v4262, %v4264
      %v4266 = vrot.slane %v3164, %v4265
      %v4267 = vcombine.low %v4186, %v4266
      %v4268 = vrot.slane %v4178, 1
      %v4269 = vrot.slane %v4267, 1
      %v4270 = vsel %vm301, %v4268, %v4269
      %4271 = vrot.lane.b32.xlu0 %v3681, 32
      %v4272 = vpop.permute.xlu0 %4271
      %4273 = vrot.lane.b32.xlu0 %v3680, 32
      %v4274 = vpop.permute.xlu0 %4273
      %4275 = vrot.lane.b32.xlu0 %v3684, 32
      %v4276 = vpop.permute.xlu0 %4275
      %4277 = vrot.lane.b32.xlu0 %v3683, 32
      %v4278 = vpop.permute.xlu0 %4277
      %4279 = vrot.lane.b32.xlu0 %v3687, 32
      %v4280 = vpop.permute.xlu0 %4279
      %4281 = vrot.lane.b32.xlu0 %v3686, 32
      %v4282 = vpop.permute.xlu0 %4281
      %4283 = vrot.lane.b32.xlu0 %v3690, 32
      %v4284 = vpop.permute.xlu0 %4283
      %4285 = vrot.lane.b32.xlu0 %v3689, 32
      %v4286 = vpop.permute.xlu0 %4285
      %4287 = vrot.lane.b32.xlu0 %v3693, 32
      %v4288 = vpop.permute.xlu0 %4287
      %4289 = vrot.lane.b32.xlu0 %v3692, 32
      %v4290 = vpop.permute.xlu0 %4289
      %4291 = vrot.lane.b32.xlu0 %v3696, 32
      %v4292 = vpop.permute.xlu0 %4291
      %4293 = vrot.lane.b32.xlu0 %v3695, 32
      %v4294 = vpop.permute.xlu0 %4293
      %4295 = vrot.lane.b32.xlu0 %v3699, 32
      %v4296 = vpop.permute.xlu0 %4295
      %4297 = vrot.lane.b32.xlu0 %v3698, 32
      %v4298 = vpop.permute.xlu0 %4297
      %4299 = vrot.lane.b32.xlu0 %v3702, 32
      %v4300 = vpop.permute.xlu0 %4299
      %4301 = vrot.lane.b32.xlu0 %v3701, 32
      %v4302 = vpop.permute.xlu0 %4301
      %4303 = vrot.lane.b32.xlu0 %v3705, 32
      %v4304 = vpop.permute.xlu0 %4303
      %4305 = vrot.lane.b32.xlu0 %v3704, 32
      %v4306 = vpop.permute.xlu0 %4305
      %4307 = vrot.lane.b32.xlu0 %v3708, 32
      %v4308 = vpop.permute.xlu0 %4307
      %4309 = vrot.lane.b32.xlu0 %v3707, 32
      %v4310 = vpop.permute.xlu0 %4309
      %4311 = vrot.lane.b32.xlu0 %v3711, 32
      %v4312 = vpop.permute.xlu0 %4311
      %4313 = vrot.lane.b32.xlu0 %v3710, 32
      %v4314 = vpop.permute.xlu0 %4313
      %4315 = vrot.lane.b32.xlu0 %v4270, 32
      %v4316 = vpop.permute.xlu0 %4315
      %4317 = vrot.lane.b32.xlu0 %v4269, 32
      %v4318 = vpop.permute.xlu0 %4317
      %v4343 = vcombine.low %v3159, %v3160
      %v4344 = vcombine.low %v3161, %v3162
      %v4346 = vunpack.c.l.s4 1983009808
      %v4347 = vunpack.c.0.s8 %v4346
      %v4348 = vlaneseq
      %v4349 = vshrl.u32 %v4348, 7
      %v4350 = vsub.s32 %v4347, %v4349
      %v4351 = vrot.slane %v4343, %v4350
      %v4353 = vunpack.c.l.s4 1983009808
      %v4354 = vunpack.c.0.s8 %v4353
      %v4355 = vlaneseq
      %v4356 = vshrl.u32 %v4355, 7
      %v4357 = vsub.s32 %v4354, %v4356
      %v4358 = vrot.slane %v4344, %v4357
      %v4359 = vcombine.low %v4351, %v4358
      %v4360 = vcombine.low %v3163, %v3164
      %v4362 = vunpack.c.l.s4 1983009808
      %v4363 = vunpack.c.0.s8 %v4362
      %v4364 = vlaneseq
      %v4365 = vshrl.u32 %v4364, 7
      %v4366 = vsub.s32 %v4363, %v4365
      %v4367 = vrot.slane %v4360, %v4366
      %4368 = vrot.lane.b32.xlu0 %v3825, 40
      %v4369 = vpop.permute.xlu0 %4368
      %4370 = vrot.lane.b32.xlu0 %v3833, 40
      %v4371 = vpop.permute.xlu0 %4370
      %4372 = vrot.lane.b32.xlu0 %v3850, 40
      %v4373 = vpop.permute.xlu0 %4372
      %4374 = vrot.lane.b32.xlu0 %v3858, 40
      %v4375 = vpop.permute.xlu0 %4374
      %4376 = vrot.lane.b32.xlu0 %v3875, 40
      %v4377 = vpop.permute.xlu0 %4376
      %4378 = vrot.lane.b32.xlu0 %v3883, 40
      %v4379 = vpop.permute.xlu0 %4378
      %4380 = vrot.lane.b32.xlu0 %v3900, 40
      %v4381 = vpop.permute.xlu0 %4380
      %4382 = vrot.lane.b32.xlu0 %v3908, 40
      %v4383 = vpop.permute.xlu0 %4382
      %4384 = vrot.lane.b32.xlu0 %v3925, 40
      %v4385 = vpop.permute.xlu0 %4384
      %4386 = vrot.lane.b32.xlu0 %v3933, 40
      %v4387 = vpop.permute.xlu0 %4386
      %4388 = vrot.lane.b32.xlu0 %v3950, 40
      %v4389 = vpop.permute.xlu0 %4388
      %4390 = vrot.lane.b32.xlu0 %v3958, 40
      %v4391 = vpop.permute.xlu0 %4390
      %4392 = vrot.lane.b32.xlu0 %v3975, 40
      %v4393 = vpop.permute.xlu0 %4392
      %4394 = vrot.lane.b32.xlu0 %v3983, 40
      %v4395 = vpop.permute.xlu0 %4394
      %4396 = vrot.lane.b32.xlu0 %v4000, 40
      %v4397 = vpop.permute.xlu0 %4396
      %4398 = vrot.lane.b32.xlu0 %v4008, 40
      %v4399 = vpop.permute.xlu0 %4398
      %4400 = vrot.lane.b32.xlu0 %v4025, 40
      %v4401 = vpop.permute.xlu0 %4400
      %4402 = vrot.lane.b32.xlu0 %v4033, 40
      %v4403 = vpop.permute.xlu0 %4402
      %4404 = vrot.lane.b32.xlu0 %v4050, 40
      %v4405 = vpop.permute.xlu0 %4404
      %4406 = vrot.lane.b32.xlu0 %v4058, 40
      %v4407 = vpop.permute.xlu0 %4406
      %4408 = vrot.lane.b32.xlu0 %v4075, 40
      %v4409 = vpop.permute.xlu0 %4408
      %4410 = vrot.lane.b32.xlu0 %v4083, 40
      %v4411 = vpop.permute.xlu0 %4410
      %4412 = vrot.lane.b32.xlu0 %v4359, 40
      %v4413 = vpop.permute.xlu0 %4412
      %4414 = vrot.lane.b32.xlu0 %v4367, 40
      %v4415 = vpop.permute.xlu0 %4414
      %v4446 = vcombine.low %v3165, %v3166
      %v4447 = vcombine.low %v3167, %v3168
      %v4449 = vunpack.c.l.s4 1983009808
      %v4450 = vunpack.c.0.s8 %v4449
      %v4451 = vlaneseq
      %v4452 = vshrl.u32 %v4451, 7
      %v4453 = vsub.s32 %v4450, %v4452
      %v4454 = vrot.slane %v4446, %v4453
      %v4456 = vunpack.c.l.s4 1983009808
      %v4457 = vunpack.c.0.s8 %v4456
      %v4458 = vlaneseq
      %v4459 = vshrl.u32 %v4458, 7
      %v4460 = vsub.s32 %v4457, %v4459
      %v4461 = vrot.slane %v4447, %v4460
      %v4462 = vcombine.low %v4454, %v4461
      %v4463 = vcombine.low %v3169, %v3170
      %v4465 = vunpack.c.l.s4 1983009808
      %v4466 = vunpack.c.0.s8 %v4465
      %v4467 = vlaneseq
      %v4468 = vshrl.u32 %v4467, 7
      %v4469 = vsub.s32 %v4466, %v4468
      %v4470 = vrot.slane %v4463, %v4469
      %4471 = vrot.lane.b32.xlu0 %v3310, 48
      %v4472 = vpop.permute.xlu0 %4471
      %4473 = vrot.lane.b32.xlu0 %v3318, 48
      %v4474 = vpop.permute.xlu0 %4473
      %4475 = vrot.lane.b32.xlu0 %v3335, 48
      %v4476 = vpop.permute.xlu0 %4475
      %4477 = vrot.lane.b32.xlu0 %v3343, 48
      %v4478 = vpop.permute.xlu0 %4477
      %4479 = vrot.lane.b32.xlu0 %v3360, 48
      %v4480 = vpop.permute.xlu0 %4479
      %4481 = vrot.lane.b32.xlu0 %v3368, 48
      %v4482 = vpop.permute.xlu0 %4481
      %4483 = vrot.lane.b32.xlu0 %v3385, 48
      %v4484 = vpop.permute.xlu0 %4483
      %4485 = vrot.lane.b32.xlu0 %v3393, 48
      %v4486 = vpop.permute.xlu0 %4485
      %4487 = vrot.lane.b32.xlu0 %v3410, 48
      %v4488 = vpop.permute.xlu0 %4487
      %4489 = vrot.lane.b32.xlu0 %v3418, 48
      %v4490 = vpop.permute.xlu0 %4489
      %4491 = vrot.lane.b32.xlu0 %v3435, 48
      %v4492 = vpop.permute.xlu0 %4491
      %4493 = vrot.lane.b32.xlu0 %v3443, 48
      %v4494 = vpop.permute.xlu0 %4493
      %4495 = vrot.lane.b32.xlu0 %v3460, 48
      %v4496 = vpop.permute.xlu0 %4495
      %4497 = vrot.lane.b32.xlu0 %v3468, 48
      %v4498 = vpop.permute.xlu0 %4497
      %4499 = vrot.lane.b32.xlu0 %v3485, 48
      %v4500 = vpop.permute.xlu0 %4499
      %4501 = vrot.lane.b32.xlu0 %v3493, 48
      %v4502 = vpop.permute.xlu0 %4501
      %4503 = vrot.lane.b32.xlu0 %v3510, 48
      %v4504 = vpop.permute.xlu0 %4503
      %4505 = vrot.lane.b32.xlu0 %v3518, 48
      %v4506 = vpop.permute.xlu0 %4505
      %4507 = vrot.lane.b32.xlu0 %v3535, 48
      %v4508 = vpop.permute.xlu0 %4507
      %4509 = vrot.lane.b32.xlu0 %v3543, 48
      %v4510 = vpop.permute.xlu0 %4509
      %4511 = vrot.lane.b32.xlu0 %v4178, 48
      %v4512 = vpop.permute.xlu0 %4511
      %4513 = vrot.lane.b32.xlu0 %v4186, 48
      %v4514 = vpop.permute.xlu0 %4513
      %4515 = vrot.lane.b32.xlu0 %v4462, 48
      %v4516 = vpop.permute.xlu0 %4515
      %4517 = vrot.lane.b32.xlu0 %v4470, 48
      %v4518 = vpop.permute.xlu0 %4517
      %v4545 = vunpack.c.l.s4 1983009808
      %v4546 = vunpack.c.0.s8 %v4545
      %v4547 = vlaneseq
      %v4548 = vshrl.u32 %v4547, 7
      %v4549 = vsub.s32 %v4546, %v4548
      %v4550 = vrot.slane %v3171, %v4549
      %v4551 = vcombine.low %v4470, %v4550
      %v4552 = vrot.slane %v4462, 1
      %v4553 = vrot.slane %v4551, 1
      %v4554 = vsel %vm301, %v4552, %v4553
      %4555 = vrot.lane.b32.xlu0 %v3684, 56
      %v4556 = vpop.permute.xlu0 %4555
      %4557 = vrot.lane.b32.xlu0 %v3683, 56
      %v4558 = vpop.permute.xlu0 %4557
      %4559 = vrot.lane.b32.xlu0 %v3687, 56
      %v4560 = vpop.permute.xlu0 %4559
      %4561 = vrot.lane.b32.xlu0 %v3686, 56
      %v4562 = vpop.permute.xlu0 %4561
      %4563 = vrot.lane.b32.xlu0 %v3690, 56
      %v4564 = vpop.permute.xlu0 %4563
      %4565 = vrot.lane.b32.xlu0 %v3689, 56
      %v4566 = vpop.permute.xlu0 %4565
      %4567 = vrot.lane.b32.xlu0 %v3693, 56
      %v4568 = vpop.permute.xlu0 %4567
      %4569 = vrot.lane.b32.xlu0 %v3692, 56
      %v4570 = vpop.permute.xlu0 %4569
      %4571 = vrot.lane.b32.xlu0 %v3696, 56
      %v4572 = vpop.permute.xlu0 %4571
      %4573 = vrot.lane.b32.xlu0 %v3695, 56
      %v4574 = vpop.permute.xlu0 %4573
      %4575 = vrot.lane.b32.xlu0 %v3699, 56
      %v4576 = vpop.permute.xlu0 %4575
      %4577 = vrot.lane.b32.xlu0 %v3698, 56
      %v4578 = vpop.permute.xlu0 %4577
      %4579 = vrot.lane.b32.xlu0 %v3702, 56
      %v4580 = vpop.permute.xlu0 %4579
      %4581 = vrot.lane.b32.xlu0 %v3701, 56
      %v4582 = vpop.permute.xlu0 %4581
      %4583 = vrot.lane.b32.xlu0 %v3705, 56
      %v4584 = vpop.permute.xlu0 %4583
      %4585 = vrot.lane.b32.xlu0 %v3704, 56
      %v4586 = vpop.permute.xlu0 %4585
      %4587 = vrot.lane.b32.xlu0 %v3708, 56
      %v4588 = vpop.permute.xlu0 %4587
      %4589 = vrot.lane.b32.xlu0 %v3707, 56
      %v4590 = vpop.permute.xlu0 %4589
      %4591 = vrot.lane.b32.xlu0 %v3711, 56
      %v4592 = vpop.permute.xlu0 %4591
      %4593 = vrot.lane.b32.xlu0 %v3710, 56
      %v4594 = vpop.permute.xlu0 %4593
      %4595 = vrot.lane.b32.xlu0 %v4270, 56
      %v4596 = vpop.permute.xlu0 %4595
      %4597 = vrot.lane.b32.xlu0 %v4269, 56
      %v4598 = vpop.permute.xlu0 %4597
      %4599 = vrot.lane.b32.xlu0 %v4554, 56
      %v4600 = vpop.permute.xlu0 %4599
      %4601 = vrot.lane.b32.xlu0 %v4553, 56
      %v4602 = vpop.permute.xlu0 %4601
      %v4627 = vcombine.low %v3166, %v3167
      %v4628 = vcombine.low %v3168, %v3169
      %v4630 = vunpack.c.l.s4 1983009808
      %v4631 = vunpack.c.0.s8 %v4630
      %v4632 = vlaneseq
      %v4633 = vshrl.u32 %v4632, 7
      %v4634 = vsub.s32 %v4631, %v4633
      %v4635 = vrot.slane %v4627, %v4634
      %v4637 = vunpack.c.l.s4 1983009808
      %v4638 = vunpack.c.0.s8 %v4637
      %v4639 = vlaneseq
      %v4640 = vshrl.u32 %v4639, 7
      %v4641 = vsub.s32 %v4638, %v4640
      %v4642 = vrot.slane %v4628, %v4641
      %v4643 = vcombine.low %v4635, %v4642
      %v4644 = vcombine.low %v3170, %v3171
      %v4646 = vunpack.c.l.s4 1983009808
      %v4647 = vunpack.c.0.s8 %v4646
      %v4648 = vlaneseq
      %v4649 = vshrl.u32 %v4648, 7
      %v4650 = vsub.s32 %v4647, %v4649
      %v4651 = vrot.slane %v4644, %v4650
      %4652 = vrot.lane.b32.xlu0 %v3850, 64
      %v4653 = vpop.permute.xlu0 %4652
      %4654 = vrot.lane.b32.xlu0 %v3858, 64
      %v4655 = vpop.permute.xlu0 %4654
      %4656 = vrot.lane.b32.xlu0 %v3875, 64
      %v4657 = vpop.permute.xlu0 %4656
      %4658 = vrot.lane.b32.xlu0 %v3883, 64
      %v4659 = vpop.permute.xlu0 %4658
      %4660 = vrot.lane.b32.xlu0 %v3900, 64
      %v4661 = vpop.permute.xlu0 %4660
      %4662 = vrot.lane.b32.xlu0 %v3908, 64
      %v4663 = vpop.permute.xlu0 %4662
      %4664 = vrot.lane.b32.xlu0 %v3925, 64
      %v4665 = vpop.permute.xlu0 %4664
      %4666 = vrot.lane.b32.xlu0 %v3933, 64
      %v4667 = vpop.permute.xlu0 %4666
      %4668 = vrot.lane.b32.xlu0 %v3950, 64
      %v4669 = vpop.permute.xlu0 %4668
      %4670 = vrot.lane.b32.xlu0 %v3958, 64
      %v4671 = vpop.permute.xlu0 %4670
      %4672 = vrot.lane.b32.xlu0 %v3975, 64
      %v4673 = vpop.permute.xlu0 %4672
      %4674 = vrot.lane.b32.xlu0 %v3983, 64
      %v4675 = vpop.permute.xlu0 %4674
      %4676 = vrot.lane.b32.xlu0 %v4000, 64
      %v4677 = vpop.permute.xlu0 %4676
      %4678 = vrot.lane.b32.xlu0 %v4008, 64
      %v4679 = vpop.permute.xlu0 %4678
      %4680 = vrot.lane.b32.xlu0 %v4025, 64
      %v4681 = vpop.permute.xlu0 %4680
      %4682 = vrot.lane.b32.xlu0 %v4033, 64
      %v4683 = vpop.permute.xlu0 %4682
      %4684 = vrot.lane.b32.xlu0 %v4050, 64
      %v4685 = vpop.permute.xlu0 %4684
      %4686 = vrot.lane.b32.xlu0 %v4058, 64
      %v4687 = vpop.permute.xlu0 %4686
      %4688 = vrot.lane.b32.xlu0 %v4075, 64
      %v4689 = vpop.permute.xlu0 %4688
      %4690 = vrot.lane.b32.xlu0 %v4083, 64
      %v4691 = vpop.permute.xlu0 %4690
      %4692 = vrot.lane.b32.xlu0 %v4359, 64
      %v4693 = vpop.permute.xlu0 %4692
      %4694 = vrot.lane.b32.xlu0 %v4367, 64
      %v4695 = vpop.permute.xlu0 %4694
      %4696 = vrot.lane.b32.xlu0 %v4643, 64
      %v4697 = vpop.permute.xlu0 %4696
      %4698 = vrot.lane.b32.xlu0 %v4651, 64
      %v4699 = vpop.permute.xlu0 %4698
      %v4724 = vsel %vm1104, %v3260, %v3713
      %v4725 = vsel %vm1104, %v3268, %v3715
      %v4726 = vsel %vm1104, %v3285, %v3717
      %v4727 = vsel %vm1104, %v3293, %v3719
      %v4728 = vsel %vm1104, %v3310, %v3721
      %v4729 = vsel %vm1104, %v3318, %v3723
      %v4730 = vsel %vm1104, %v3335, %v3725
      %v4731 = vsel %vm1104, %v3343, %v3727
      %v4732 = vsel %vm1104, %v3360, %v3729
      %v4733 = vsel %vm1104, %v3368, %v3731
      %v4734 = vsel %vm1104, %v3385, %v3733
      %v4735 = vsel %vm1104, %v3393, %v3735
      %v4736 = vsel %vm1104, %v3410, %v3737
      %v4737 = vsel %vm1104, %v3418, %v3739
      %v4738 = vsel %vm1104, %v3435, %v3741
      %v4739 = vsel %vm1104, %v3443, %v3743
      %v4740 = vsel %vm1104, %v3460, %v3745
      %v4741 = vsel %vm1104, %v3468, %v3747
      %v4742 = vsel %vm1104, %v3485, %v3749
      %v4743 = vsel %vm1104, %v3493, %v3751
      %v4744 = vsel %vm1104, %v3510, %v3753
      %v4745 = vsel %vm1104, %v3518, %v3755
      %v4746 = vsel %vm1104, %v3535, %v3757
      %v4747 = vsel %vm1104, %v3543, %v3759
      %v4748 = vsel %vm1162, %v4724, %v4085
      %v4749 = vsel %vm1162, %v4725, %v4087
      %v4750 = vsel %vm1162, %v4726, %v4089
      %v4751 = vsel %vm1162, %v4727, %v4091
      %v4752 = vsel %vm1162, %v4728, %v4093
      %v4753 = vsel %vm1162, %v4729, %v4095
      %v4754 = vsel %vm1162, %v4730, %v4097
      %v4755 = vsel %vm1162, %v4731, %v4099
      %v4756 = vsel %vm1162, %v4732, %v4101
      %v4757 = vsel %vm1162, %v4733, %v4103
      %v4758 = vsel %vm1162, %v4734, %v4105
      %v4759 = vsel %vm1162, %v4735, %v4107
      %v4760 = vsel %vm1162, %v4736, %v4109
      %v4761 = vsel %vm1162, %v4737, %v4111
      %v4762 = vsel %vm1162, %v4738, %v4113
      %v4763 = vsel %vm1162, %v4739, %v4115
      %v4764 = vsel %vm1162, %v4740, %v4117
      %v4765 = vsel %vm1162, %v4741, %v4119
      %v4766 = vsel %vm1162, %v4742, %v4121
      %v4767 = vsel %vm1162, %v4743, %v4123
      %v4768 = vsel %vm1162, %v4744, %v4125
      %v4769 = vsel %vm1162, %v4745, %v4127
      %v4770 = vsel %vm1162, %v4746, %v4129
      %v4771 = vsel %vm1162, %v4747, %v4131
      %v4772 = vsel %vm1220, %v4748, %v4188
      %v4773 = vsel %vm1220, %v4749, %v4190
      %v4774 = vsel %vm1220, %v4750, %v4192
      %v4775 = vsel %vm1220, %v4751, %v4194
      %v4776 = vsel %vm1220, %v4752, %v4196
      %v4777 = vsel %vm1220, %v4753, %v4198
      %v4778 = vsel %vm1220, %v4754, %v4200
      %v4779 = vsel %vm1220, %v4755, %v4202
      %v4780 = vsel %vm1220, %v4756, %v4204
      %v4781 = vsel %vm1220, %v4757, %v4206
      %v4782 = vsel %vm1220, %v4758, %v4208
      %v4783 = vsel %vm1220, %v4759, %v4210
      %v4784 = vsel %vm1220, %v4760, %v4212
      %v4785 = vsel %vm1220, %v4761, %v4214
      %v4786 = vsel %vm1220, %v4762, %v4216
      %v4787 = vsel %vm1220, %v4763, %v4218
      %v4788 = vsel %vm1220, %v4764, %v4220
      %v4789 = vsel %vm1220, %v4765, %v4222
      %v4790 = vsel %vm1220, %v4766, %v4224
      %v4791 = vsel %vm1220, %v4767, %v4226
      %v4792 = vsel %vm1220, %v4768, %v4228
      %v4793 = vsel %vm1220, %v4769, %v4230
      %v4794 = vsel %vm1220, %v4770, %v4232
      %v4795 = vsel %vm1220, %v4771, %v4234
      %v4796 = vsel %vm1278, %v4772, %v4272
      %v4797 = vsel %vm1278, %v4773, %v4274
      %v4798 = vsel %vm1278, %v4774, %v4276
      %v4799 = vsel %vm1278, %v4775, %v4278
      %v4800 = vsel %vm1278, %v4776, %v4280
      %v4801 = vsel %vm1278, %v4777, %v4282
      %v4802 = vsel %vm1278, %v4778, %v4284
      %v4803 = vsel %vm1278, %v4779, %v4286
      %v4804 = vsel %vm1278, %v4780, %v4288
      %v4805 = vsel %vm1278, %v4781, %v4290
      %v4806 = vsel %vm1278, %v4782, %v4292
      %v4807 = vsel %vm1278, %v4783, %v4294
      %v4808 = vsel %vm1278, %v4784, %v4296
      %v4809 = vsel %vm1278, %v4785, %v4298
      %v4810 = vsel %vm1278, %v4786, %v4300
      %v4811 = vsel %vm1278, %v4787, %v4302
      %v4812 = vsel %vm1278, %v4788, %v4304
      %v4813 = vsel %vm1278, %v4789, %v4306
      %v4814 = vsel %vm1278, %v4790, %v4308
      %v4815 = vsel %vm1278, %v4791, %v4310
      %v4816 = vsel %vm1278, %v4792, %v4312
      %v4817 = vsel %vm1278, %v4793, %v4314
      %v4818 = vsel %vm1278, %v4794, %v4316
      %v4819 = vsel %vm1278, %v4795, %v4318
      %vm4820 = vcmask 326656
      %v4821 = vsel %vm4820, %v4796, %v4369
      %v4822 = vsel %vm4820, %v4797, %v4371
      %v4823 = vsel %vm4820, %v4798, %v4373
      %v4824 = vsel %vm4820, %v4799, %v4375
      %v4825 = vsel %vm4820, %v4800, %v4377
      %v4826 = vsel %vm4820, %v4801, %v4379
      %v4827 = vsel %vm4820, %v4802, %v4381
      %v4828 = vsel %vm4820, %v4803, %v4383
      %v4829 = vsel %vm4820, %v4804, %v4385
      %v4830 = vsel %vm4820, %v4805, %v4387
      %v4831 = vsel %vm4820, %v4806, %v4389
      %v4832 = vsel %vm4820, %v4807, %v4391
      %v4833 = vsel %vm4820, %v4808, %v4393
      %v4834 = vsel %vm4820, %v4809, %v4395
      %v4835 = vsel %vm4820, %v4810, %v4397
      %v4836 = vsel %vm4820, %v4811, %v4399
      %v4837 = vsel %vm4820, %v4812, %v4401
      %v4838 = vsel %vm4820, %v4813, %v4403
      %v4839 = vsel %vm4820, %v4814, %v4405
      %v4840 = vsel %vm4820, %v4815, %v4407
      %v4841 = vsel %vm4820, %v4816, %v4409
      %v4842 = vsel %vm4820, %v4817, %v4411
      %v4843 = vsel %vm4820, %v4818, %v4413
      %v4844 = vsel %vm4820, %v4819, %v4415
      %vm4845 = vcmask 392192
      %v4846 = vsel %vm4845, %v4821, %v4472
      %v4847 = vsel %vm4845, %v4822, %v4474
      %v4848 = vsel %vm4845, %v4823, %v4476
      %v4849 = vsel %vm4845, %v4824, %v4478
      %v4850 = vsel %vm4845, %v4825, %v4480
      %v4851 = vsel %vm4845, %v4826, %v4482
      %v4852 = vsel %vm4845, %v4827, %v4484
      %v4853 = vsel %vm4845, %v4828, %v4486
      %v4854 = vsel %vm4845, %v4829, %v4488
      %v4855 = vsel %vm4845, %v4830, %v4490
      %v4856 = vsel %vm4845, %v4831, %v4492
      %v4857 = vsel %vm4845, %v4832, %v4494
      %v4858 = vsel %vm4845, %v4833, %v4496
      %v4859 = vsel %vm4845, %v4834, %v4498
      %v4860 = vsel %vm4845, %v4835, %v4500
      %v4861 = vsel %vm4845, %v4836, %v4502
      %v4862 = vsel %vm4845, %v4837, %v4504
      %v4863 = vsel %vm4845, %v4838, %v4506
      %v4864 = vsel %vm4845, %v4839, %v4508
      %v4865 = vsel %vm4845, %v4840, %v4510
      %v4866 = vsel %vm4845, %v4841, %v4512
      %v4867 = vsel %vm4845, %v4842, %v4514
      %v4868 = vsel %vm4845, %v4843, %v4516
      %v4869 = vsel %vm4845, %v4844, %v4518
      %vm4870 = vcmask 457728
      %v4871 = vsel %vm4870, %v4846, %v4556
      %v4872 = vsel %vm4870, %v4847, %v4558
      %v4873 = vsel %vm4870, %v4848, %v4560
      %v4874 = vsel %vm4870, %v4849, %v4562
      %v4875 = vsel %vm4870, %v4850, %v4564
      %v4876 = vsel %vm4870, %v4851, %v4566
      %v4877 = vsel %vm4870, %v4852, %v4568
      %v4878 = vsel %vm4870, %v4853, %v4570
      %v4879 = vsel %vm4870, %v4854, %v4572
      %v4880 = vsel %vm4870, %v4855, %v4574
      %v4881 = vsel %vm4870, %v4856, %v4576
      %v4882 = vsel %vm4870, %v4857, %v4578
      %v4883 = vsel %vm4870, %v4858, %v4580
      %v4884 = vsel %vm4870, %v4859, %v4582
      %v4885 = vsel %vm4870, %v4860, %v4584
      %v4886 = vsel %vm4870, %v4861, %v4586
      %v4887 = vsel %vm4870, %v4862, %v4588
      %v4888 = vsel %vm4870, %v4863, %v4590
      %v4889 = vsel %vm4870, %v4864, %v4592
      %v4890 = vsel %vm4870, %v4865, %v4594
      %v4891 = vsel %vm4870, %v4866, %v4596
      %v4892 = vsel %vm4870, %v4867, %v4598
      %v4893 = vsel %vm4870, %v4868, %v4600
      %v4894 = vsel %vm4870, %v4869, %v4602
      %vm4895 = vcmask 523264
      %v4896 = vsel %vm4895, %v4871, %v4653
      %v4897 = vsel %vm4895, %v4872, %v4655
      %v4898 = vsel %vm4895, %v4873, %v4657
      %v4899 = vsel %vm4895, %v4874, %v4659
      %v4900 = vsel %vm4895, %v4875, %v4661
      %v4901 = vsel %vm4895, %v4876, %v4663
      %v4902 = vsel %vm4895, %v4877, %v4665
      %v4903 = vsel %vm4895, %v4878, %v4667
      %v4904 = vsel %vm4895, %v4879, %v4669
      %v4905 = vsel %vm4895, %v4880, %v4671
      %v4906 = vsel %vm4895, %v4881, %v4673
      %v4907 = vsel %vm4895, %v4882, %v4675
      %v4908 = vsel %vm4895, %v4883, %v4677
      %v4909 = vsel %vm4895, %v4884, %v4679
      %v4910 = vsel %vm4895, %v4885, %v4681
      %v4911 = vsel %vm4895, %v4886, %v4683
      %v4912 = vsel %vm4895, %v4887, %v4685
      %v4913 = vsel %vm4895, %v4888, %v4687
      %v4914 = vsel %vm4895, %v4889, %v4689
      %v4915 = vsel %vm4895, %v4890, %v4691
      %v4916 = vsel %vm4895, %v4891, %v4693
      %v4917 = vsel %vm4895, %v4892, %v4695
      %v4918 = vsel %vm4895, %v4893, %v4697
      %v4919 = vsel %vm4895, %v4894, %v4699
      %v4921 = vlaneseq
      %v4922 = vshrl.u32 %v4921, 7
      %v4923 = vsub.s32 0, %v4922
      %v4924 = vrot.slane %v240, %v4923
      %v4949 = vcombine.high %v4896, %v4896
      %v4950 = vcombine.high %v4898, %v4898
      %v4951 = vcombine.high %v4900, %v4900
      %v4952 = vcombine.high %v4902, %v4902
      %v4953 = vcombine.high %v4904, %v4904
      %v4954 = vcombine.high %v4906, %v4906
      %v4955 = vcombine.high %v4908, %v4908
      %v4956 = vcombine.high %v4910, %v4910
      %v4957 = vcombine.high %v4912, %v4912
      %v4958 = vcombine.high %v4914, %v4914
      %v4959 = vcombine.high %v4916, %v4916
      %v4960 = vcombine.high %v4918, %v4918
      %v4961 = vcombine.high %v4924, %v4924
      %v4962 = vcombine.low %v4896, %v4949
      %v4963 = vcombine.low %v4897, %v4898
      %v4964 = vcombine.low %v4950, %v4899
      %v4965 = vcombine.low %v4900, %v4951
      %v4966 = vcombine.low %v4901, %v4902
      %v4967 = vcombine.low %v4952, %v4903
      %v4968 = vcombine.low %v4904, %v4953
      %v4969 = vcombine.low %v4905, %v4906
      %v4970 = vcombine.low %v4954, %v4907
      %v4971 = vcombine.low %v4908, %v4955
      %v4972 = vcombine.low %v4909, %v4910
      %v4973 = vcombine.low %v4956, %v4911
      %v4974 = vcombine.low %v4912, %v4957
      %v4975 = vcombine.low %v4913, %v4914
      %v4976 = vcombine.low %v4958, %v4915
      %v4977 = vcombine.low %v4916, %v4959
      %v4978 = vcombine.low %v4917, %v4918
      %v4979 = vcombine.low %v4960, %v4919
      %v4980 = vcombine.low %v4924, %v4961
      %v4981 = vcombine.low %v4924, %v4924
      %v4982 = vcombine.low %v4961, %v4924
      %vm4986 = vcmask 588800
      %v4987 = vsel %vm4986, %v4962, 0
      %v4989 = vsel %vm4986, %v4963, 0
      %v4991 = vsel %vm4986, %v4964, 0
      %v4993 = vsel %vm4986, %v4965, 0
      %v4995 = vsel %vm4986, %v4966, 0
      %v4997 = vsel %vm4986, %v4967, 0
      %v4999 = vsel %vm4986, %v4968, 0
      %v5001 = vsel %vm4986, %v4969, 0
      %v5003 = vsel %vm4986, %v4970, 0
      %v5005 = vsel %vm4986, %v4971, 0
      %v5007 = vsel %vm4986, %v4972, 0
      %v5009 = vsel %vm4986, %v4973, 0
      %v5011 = vsel %vm4986, %v4974, 0
      %v5013 = vsel %vm4986, %v4975, 0
      %v5015 = vsel %vm4986, %v4976, 0
      %v5017 = vsel %vm4986, %v4977, 0
      %v5019 = vsel %vm4986, %v4978, 0
      %v5021 = vsel %vm4986, %v4979, 0
      %5023 = vmatprep.subr.mxu0 0.0
      %5024 = vmatpush1.msra.mxu0 0.0
      %5025 = vmatprep.subr.mxu0 0.0
      %5026 = vmatpush1.msra.mxu0 0.0
      %5027 = vmatprep.subr.mxu0 0.0
      %5028 = vmatpush1.msra.mxu0 0.0
      %5029 = vmatprep.subr.mxu0 0.0
      %5030 = vmatpush1.msra.mxu0 0.0
      %5031 = vmatprep.subr.mxu0 0.0
      %5032 = vmatpush1.msra.mxu0 0.0
      %5033 = vmatprep.subr.mxu0 0.0
      %5034 = vmatpush1.msra.mxu0 0.0
      %5035 = vmatprep.subr.mxu0 0.0
      %5036 = vmatpush1.msra.mxu0 0.0
      %5037 = vmatprep.subr.mxu0 0.0
      %5038 = vmatpush1.msra.mxu0 %v238
      %5039 = vmatprep.subr.mxu0 0.0
      %5040 = vmatpush1.msra.mxu0 %v237
      %5041 = vmatprep.subr.mxu0 0.0
      %5042 = vmatpush1.msra.mxu0 %v236
      %5043 = vmatprep.subr.mxu0 0.0
      %5044 = vmatpush1.msra.mxu0 %v235
      %5045 = vmatprep.subr.mxu0 0.0
      %5046 = vmatpush1.msra.mxu0 %v234
      %5047 = vmatprep.subr.mxu0 0.0
      %5048 = vmatpush1.msra.mxu0 %v233
      %5049 = vmatprep.subr.mxu0 0.0
      %5050 = vmatpush1.msra.mxu0 %v232
      %5051 = vmatprep.subr.mxu0 0.0
      %5052 = vmatpush1.msra.mxu0 %v231
      %5053 = vmatprep.subr.mxu0 0.0
      %5054 = vmatpush1.msra.mxu0 %v230
      %5055 = vmatprep.subr.mxu0 0.0
      %5056 = vmatpush2.msra.mxu0 0.0
      %5057 = vmatprep.subr.mxu0 0.0
      %5058 = vmatpush2.msra.mxu0 0.0
      %5059 = vmatprep.subr.mxu0 0.0
      %5060 = vmatpush2.msra.mxu0 0.0
      %5061 = vmatprep.subr.mxu0 0.0
      %5062 = vmatpush2.msra.mxu0 0.0
      %5063 = vmatprep.subr.mxu0 0.0
      %5064 = vmatpush2.msra.mxu0 0.0
      %5065 = vmatprep.subr.mxu0 0.0
      %5066 = vmatpush2.msra.mxu0 0.0
      %5067 = vmatprep.subr.mxu0 0.0
      %5068 = vmatpush2.msra.mxu0 0.0
      %5069 = vmatprep.subr.mxu0 0.0
      %5070 = vmatpush2.msra.mxu0 0.0
      %5071 = vmatprep.subr.mxu0 0.0
      %5072 = vmatpush2.msra.mxu0 0.0
      %5073 = vmatprep.subr.mxu0 0.0
      %5074 = vmatpush2.msra.mxu0 0.0
      %5075 = vmatprep.subr.mxu0 0.0
      %5076 = vmatpush2.msra.mxu0 0.0
      %5077 = vmatprep.subr.mxu0 0.0
      %5078 = vmatpush2.msra.mxu0 0.0
      %5079 = vmatprep.subr.mxu0 0.0
      %5080 = vmatpush2.msra.mxu0 0.0
      %5081 = vmatprep.subr.mxu0 0.0
      %5082 = vmatpush2.msra.mxu0 0.0
      %5083 = vmatprep.subr.mxu0 0.0
      %5084 = vmatpush2.msra.mxu0 0.0
      %5085 = vmatprep.subr.mxu0 0.0
      %5086 = vmatpush2.msra.mxu0 0.0
      %5087 = vmatprep.mubr.f32.mxu0 0.0
      %5088 = vmatmul.mubr.f32.gmra.mxu0 %v4987
      %v5089 = vpop.f32.mrf.mxu0
      %v5090 = vadd.f32 %v4980, %v5089
      %v5091 = vpop.f32.mrf.mxu0
      %5092 = vmatprep.mubr.f32.mxu0 0.0
      %5093 = vmatmul.mubr.f32.gmra.mxu0 %v4989
      %v5094 = vpop.f32.mrf.mxu0
      %v5095 = vadd.f32 %v4981, %v5094
      %v5096 = vpop.f32.mrf.mxu0
      %5097 = vmatprep.mubr.f32.mxu0 0.0
      %5098 = vmatmul.mubr.f32.gmra.mxu0 %v4991
      %v5099 = vpop.f32.mrf.mxu0
      %v5100 = vadd.f32 %v4982, %v5099
      %v5101 = vpop.f32.mrf.mxu0
      %5102 = vmatprep.mubr.f32.mxu0 0.0
      %5103 = vmatmul.mubr.f32.gmra.mxu0 %v4993
      %v5104 = vpop.f32.mrf.mxu0
      %v5105 = vadd.f32 %v4980, %v5104
      %v5106 = vpop.f32.mrf.mxu0
      %5107 = vmatprep.mubr.f32.mxu0 0.0
      %5108 = vmatmul.mubr.f32.gmra.mxu0 %v4995
      %v5109 = vpop.f32.mrf.mxu0
      %v5110 = vadd.f32 %v4981, %v5109
      %v5111 = vpop.f32.mrf.mxu0
      %5112 = vmatprep.mubr.f32.mxu0 0.0
      %5113 = vmatmul.mubr.f32.gmra.mxu0 %v4997
      %v5114 = vpop.f32.mrf.mxu0
      %v5115 = vadd.f32 %v4982, %v5114
      %v5116 = vpop.f32.mrf.mxu0
      %5117 = vmatprep.mubr.f32.mxu0 0.0
      %5118 = vmatmul.mubr.f32.gmra.mxu0 %v4999
      %v5119 = vpop.f32.mrf.mxu0
      %v5120 = vadd.f32 %v4980, %v5119
      %v5121 = vpop.f32.mrf.mxu0
      %5122 = vmatprep.mubr.f32.mxu0 0.0
      %5123 = vmatmul.mubr.f32.gmra.mxu0 %v5001
      %v5124 = vpop.f32.mrf.mxu0
      %v5125 = vadd.f32 %v4981, %v5124
      %v5126 = vpop.f32.mrf.mxu0
      %5127 = vmatprep.mubr.f32.mxu0 0.0
      %5128 = vmatmul.mubr.f32.gmra.mxu0 %v5003
      %v5129 = vpop.f32.mrf.mxu0
      %v5130 = vadd.f32 %v4982, %v5129
      %v5131 = vpop.f32.mrf.mxu0
      %5132 = vmatprep.mubr.f32.mxu0 0.0
      %5133 = vmatmul.mubr.f32.gmra.mxu0 %v5005
      %v5134 = vpop.f32.mrf.mxu0
      %v5135 = vadd.f32 %v4980, %v5134
      %v5136 = vpop.f32.mrf.mxu0
      %5137 = vmatprep.mubr.f32.mxu0 0.0
      %5138 = vmatmul.mubr.f32.gmra.mxu0 %v5007
      %v5139 = vpop.f32.mrf.mxu0
      %v5140 = vadd.f32 %v4981, %v5139
      %v5141 = vpop.f32.mrf.mxu0
      %5142 = vmatprep.mubr.f32.mxu0 0.0
      %5143 = vmatmul.mubr.f32.gmra.mxu0 %v5009
      %v5144 = vpop.f32.mrf.mxu0
      %v5145 = vadd.f32 %v4982, %v5144
      %v5146 = vpop.f32.mrf.mxu0
      %5147 = vmatprep.mubr.f32.mxu0 0.0
      %5148 = vmatmul.mubr.f32.gmra.mxu0 %v5011
      %v5149 = vpop.f32.mrf.mxu0
      %v5150 = vadd.f32 %v4980, %v5149
      %v5151 = vpop.f32.mrf.mxu0
      %5152 = vmatprep.mubr.f32.mxu0 0.0
      %5153 = vmatmul.mubr.f32.gmra.mxu0 %v5013
      %v5154 = vpop.f32.mrf.mxu0
      %v5155 = vadd.f32 %v4981, %v5154
      %v5156 = vpop.f32.mrf.mxu0
      %5157 = vmatprep.mubr.f32.mxu0 0.0
      %5158 = vmatmul.mubr.f32.gmra.mxu0 %v5015
      %v5159 = vpop.f32.mrf.mxu0
      %v5160 = vadd.f32 %v4982, %v5159
      %v5161 = vpop.f32.mrf.mxu0
      %5162 = vmatprep.mubr.f32.mxu0 0.0
      %5163 = vmatmul.mubr.f32.gmra.mxu0 %v5017
      %v5164 = vpop.f32.mrf.mxu0
      %v5165 = vadd.f32 %v4980, %v5164
      %v5166 = vpop.f32.mrf.mxu0
      %5167 = vmatprep.mubr.f32.mxu0 0.0
      %5168 = vmatmul.mubr.f32.gmra.mxu0 %v5019
      %v5169 = vpop.f32.mrf.mxu0
      %v5170 = vadd.f32 %v4981, %v5169
      %v5171 = vpop.f32.mrf.mxu0
      %5172 = vmatprep.mubr.f32.mxu0 0.0
      %5173 = vmatmul.mubr.f32.gmra.mxu0 %v5021
      %v5174 = vpop.f32.mrf.mxu0
      %v5175 = vadd.f32 %v4982, %v5174
      %v5176 = vpop.f32.mrf.mxu0
      %5177 = vdwg.mxu0
      %v5196 = vcombine.high %v5090, %v5090
      %v5197 = vcombine.high %v5095, %v5095
      %v5198 = vcombine.high %v5100, %v5100
      %v5199 = vcombine.high %v5105, %v5105
      %v5200 = vcombine.high %v5110, %v5110
      %v5201 = vcombine.high %v5115, %v5115
      %v5202 = vcombine.high %v5120, %v5120
      %v5203 = vcombine.high %v5125, %v5125
      %v5204 = vcombine.high %v5130, %v5130
      %v5205 = vcombine.high %v5135, %v5135
      %v5206 = vcombine.high %v5140, %v5140
      %v5207 = vcombine.high %v5145, %v5145
      %v5208 = vcombine.high %v5150, %v5150
      %v5209 = vcombine.high %v5155, %v5155
      %v5210 = vcombine.high %v5160, %v5160
      %v5211 = vcombine.high %v5165, %v5165
      %v5212 = vcombine.high %v5170, %v5170
      %v5213 = vcombine.high %v5175, %v5175
      %v5232 = vmax.f32 %v5090, 0.0
      %v5233 = vmax.f32 %v5196, 0.0
      %v5234 = vmax.f32 %v5095, 0.0
      %v5235 = vmax.f32 %v5197, 0.0
      %v5236 = vmax.f32 %v5100, 0.0
      %v5237 = vmax.f32 %v5198, 0.0
      %v5238 = vmax.f32 %v5105, 0.0
      %v5239 = vmax.f32 %v5199, 0.0
      %v5240 = vmax.f32 %v5110, 0.0
      %v5241 = vmax.f32 %v5200, 0.0
      %v5242 = vmax.f32 %v5115, 0.0
      %v5243 = vmax.f32 %v5201, 0.0
      %v5244 = vmax.f32 %v5120, 0.0
      %v5245 = vmax.f32 %v5202, 0.0
      %v5246 = vmax.f32 %v5125, 0.0
      %v5247 = vmax.f32 %v5203, 0.0
      %v5248 = vmax.f32 %v5130, 0.0
      %v5249 = vmax.f32 %v5204, 0.0
      %v5250 = vmax.f32 %v5135, 0.0
      %v5251 = vmax.f32 %v5205, 0.0
      %v5252 = vmax.f32 %v5140, 0.0
      %v5253 = vmax.f32 %v5206, 0.0
      %v5254 = vmax.f32 %v5145, 0.0
      %v5255 = vmax.f32 %v5207, 0.0
      %v5256 = vmax.f32 %v5150, 0.0
      %v5257 = vmax.f32 %v5208, 0.0
      %v5258 = vmax.f32 %v5155, 0.0
      %v5259 = vmax.f32 %v5209, 0.0
      %v5260 = vmax.f32 %v5160, 0.0
      %v5261 = vmax.f32 %v5210, 0.0
      %v5262 = vmax.f32 %v5165, 0.0
      %v5263 = vmax.f32 %v5211, 0.0
      %v5264 = vmax.f32 %v5170, 0.0
      %v5265 = vmax.f32 %v5212, 0.0
      %v5266 = vmax.f32 %v5175, 0.0
      %v5267 = vmax.f32 %v5213, 0.0
      %v5292 = vcombine.low %v5232, %v5233
      %v5293 = vcombine.low %v5235, %v5236
      %v5294 = vcombine.low %v5238, %v5239
      %v5295 = vcombine.low %v5241, %v5242
      %v5296 = vcombine.low %v5244, %v5245
      %v5297 = vcombine.low %v5247, %v5248
      %v5298 = vcombine.low %v5250, %v5251
      %v5299 = vcombine.low %v5253, %v5254
      %v5300 = vcombine.low %v5256, %v5257
      %v5301 = vcombine.low %v5259, %v5260
      %v5302 = vcombine.low %v5262, %v5263
      %v5303 = vcombine.low %v5265, %v5266
      %5316 = vst.msk [vmem:[%s224] sm:$0xff] %vm1104, %v5292
      %vm5317 = vcmask 60416
      %5318 = vst.msk [vmem:[%s224 + $0x8] sm:$0xf] %vm5317, %v5234
      %5319 = vst.msk [vmem:[%s224 + $0x10] sm:$0xff] %vm1104, %v5293
      %5320 = vst.msk [vmem:[%s224 + $0x18] sm:$0xf] %vm5317, %v5237
      %5321 = vst.msk [vmem:[%s224 + $0x20] sm:$0xff] %vm1104, %v5294
      %5322 = vst.msk [vmem:[%s224 + $0x28] sm:$0xf] %vm5317, %v5240
      %5323 = vst.msk [vmem:[%s224 + $0x30] sm:$0xff] %vm1104, %v5295
      %5324 = vst.msk [vmem:[%s224 + $0x38] sm:$0xf] %vm5317, %v5243
      %5325 = vst.msk [vmem:[%s224 + $0x40] sm:$0xff] %vm1104, %v5296
      %5326 = vst.msk [vmem:[%s224 + $0x48] sm:$0xf] %vm5317, %v5246
      %5327 = vst.msk [vmem:[%s224 + $0x50] sm:$0xff] %vm1104, %v5297
      %5328 = vst.msk [vmem:[%s224 + $0x58] sm:$0xf] %vm5317, %v5249
      %5329 = vst.msk [vmem:[%s224 + $0x60] sm:$0xff] %vm1104, %v5298
      %5330 = vst.msk [vmem:[%s224 + $0x68] sm:$0xf] %vm5317, %v5252
      %5331 = vst.msk [vmem:[%s224 + $0x70] sm:$0xff] %vm1104, %v5299
      %5332 = vst.msk [vmem:[%s224 + $0x78] sm:$0xf] %vm5317, %v5255
      %5333 = vst.msk [vmem:[%s224 + $0x80] sm:$0xff] %vm1104, %v5300
      %5334 = vst.msk [vmem:[%s224 + $0x88] sm:$0xf] %vm5317, %v5258
      %5335 = vst.msk [vmem:[%s224 + $0x90] sm:$0xff] %vm1104, %v5301
      %5336 = vst.msk [vmem:[%s224 + $0x98] sm:$0xf] %vm5317, %v5261
      %5337 = vst.msk [vmem:[%s224 + $0xa0] sm:$0xff] %vm1104, %v5302
      %5338 = vst.msk [vmem:[%s224 + $0xa8] sm:$0xf] %vm5317, %v5264
      %5339 = vst.msk [vmem:[%s224 + $0xb0] sm:$0xff] %vm1104, %v5303
      %5340 = vst.msk [vmem:[%s224 + $0xb8] sm:$0xf] %vm5317, %v5267
      %p5341 = scmp.lt.s32.totalorder %s16, 1
      %s5342 = scalar_select %p5341, %s16, 1
      %s5343 = smul.addr %s5342, 24
      %s5344 = smul.addr %s5343, 8
      %s5345 = scalar_lea.vmem %s5, %s5344
      // Predicated region
      $region41: #{_final_convolve_forward.1} parent=39 // pred_check
        %p5346 = pneg %p144
      $region42: #{_final_convolve_forward.1} parent=39 // pred_check_branch
        %5348 = sbr.rel (%p5346) target = $region44
      $region43: #{_final_convolve_forward.1} parent=39 // pred_region
        _
      $region44: #{_final_convolve_forward.1} parent=39 // pred_fallthru
        _
    $region40: #{_final_convolve_forward.1} parent=5 // pred_fallthru
      _
    %p5349 = scmp.le.s32.totalorder 2, %s11
    // Predicated region
    $region45: #{_final_convolve_forward.1} parent=5 // pred_check
      %p5350 = pneg %p5349
    $region46: #{_final_convolve_forward.1} parent=5 // pred_check_branch
      %5352 = sbr.rel (%p5350) target = $region48
    $region47: #{_final_convolve_forward.1} parent=5 // pred_region
      %s5353 = ssub.s32 %s11, 2
      // Predicated region
      $region49: #{_final_convolve_forward.1} parent=47 // pred_check
        %p5354 = pneg %p150
      $region50: #{_final_convolve_forward.1} parent=47 // pred_check_branch
        %5356 = sbr.rel (%p5354) target = $region52
      $region51: #{_final_convolve_forward.1} parent=47 // pred_region
        %p5357 = scmp.lt.s32.totalorder %s17, 1
        %s5358 = scalar_select %p5357, %s17, 1
        %s5359 = smul.addr %s5358, 24
        %s5360 = smul.addr %s5359, 8
        %s5361 = scalar_lea.vmem %s5, %s5360
      $region52: #{_final_convolve_forward.1} parent=47 // pred_fallthru
        _
    $region48: #{_final_convolve_forward.1} parent=5 // pred_fallthru
      _
  $region6: #{_final_convolve_forward.1} parent=0 // loop_footer
    %s15 = sadd.s32 1, %s11
  $region7: #{_final_convolve_forward.1} parent=0 // loop_footer_branch
    %10 = sbr.rel target = $region3
  $region8: #{_final_convolve_forward.1} parent=0 // loop_exit
    _

</llo_original>
